<compile_context>
chip_gen: v6e
topology: v6e:2x2x1
jax: 0.10.0
libtpu: 0.0.40
codegen_flags: <defaults>
</compile_context>

<pallas_src>
import jax
import jax.numpy as jnp
from jax import lax
from jax.experimental import pallas as pl
from jax.experimental.pallas import tpu as pltpu


def _dtls_tile_kernel(label_ref, wf_ref, b_ref, wt_ref, bt_ref,
                      tiles_ref, tgt_ref, pred_ref, loss_ref, sumsq_ref):
    """Grid = (row_tile m [parallel], level i [arbitrary, innermost]).

    tiles_ref : (c, TR+2, W+2)  halo'd padded input rows of level i   (bf16)
    tgt_ref   : (c, TR,   W)    matching rows of level i+1            (bf16)
    pred_ref  : (c, TR,   W)    denoised rows for level i             (x dtype)
    loss_ref  : (1, 1)          per-row-tile sum of squared diffs     (f32)
    sumsq_ref : (TR, W)         f32 scratch, accumulates over levels/channels
    """
    i = pl.program_id(1)
    n_lvl = pl.num_programs(1)

    @pl.when(i == 0)
    def _():
        sumsq_ref[...] = jnp.zeros_like(sumsq_ref)
        loss_ref[...] = jnp.zeros_like(loss_ref)

    step = label_ref[i]                                    # f32 scalar (SMEM)

    xin = tiles_ref[...].astype(jnp.float32)               # (c, TR+2, W+2)
    tgt = tgt_ref[...].astype(jnp.float32)                 # (c, TR, W)
    c, tr, w = tgt.shape

    # 3x3 taps from the halo'd tile: static sublane/lane slices, no HBM im2col.
    taps = []
    for dy in range(3):
        rows = xin[:, dy:dy + tr, :]                       # (c, TR, W+2)
        for dx in range(3):
            taps.append(rows[:, :, dx:dx + w])             # (c, TR, W)

    sq = sumsq_ref[...]
    for co in range(c):
        # conv bias + time embedding -> one scalar per output channel (SMEM)
        temb = b_ref[co] + wt_ref[co] * step + bt_ref[co]
        acc = jnp.full((tr, w), temb, dtype=jnp.float32)
        # tiny channel mix per tap: scalar-broadcast FMAs on the VPU
        for k in range(9):
            tap_k = taps[k]
            for ci in range(c):
                acc = acc + wf_ref[(k * c + ci) * c + co] * tap_k[ci]
        y = jnp.tanh(acc)                                  # EUP
        pred_ref[co, :, :] = y.astype(pred_ref.dtype)
        d = y - tgt[co]
        sq = sq + d * d                                    # nn.MSELoss numerator
    sumsq_ref[...] = sq

    @pl.when(i == n_lvl - 1)
    def _():
        loss_ref[...] = jnp.sum(sumsq_ref[...], keepdims=True)


def _pad2d_bytes(rows, lanes, itemsize):
    """Rough (8,128)-padded VMEM footprint of a 2-D tile."""
    return ((rows + 7) // 8 * 8) * ((lanes + 127) // 128 * 128) * itemsize


def _pick_row_tile(h, w, c, itemsize):
    """Largest row tile dividing h whose double-buffered set stays ~<24 MiB."""
    budget = 24 * 2 ** 20       # safe even on v7x (64 MiB physical VMEM)
    divisors = [d for d in (128, 64, 32, 16, 8, 4, 2, 1) if d <= h and h % d == 0]

    def blk_bytes(tr):
        return (c * _pad2d_bytes(tr + 2, w + 2, 2)      # bf16 input tile
                + c * _pad2d_bytes(tr, w, 2)            # bf16 target tile
                + c * _pad2d_bytes(tr, w, itemsize))    # pred tile

    for cand in divisors:
        if 2 * blk_bytes(cand) <= budget:
            return cand, blk_bytes(cand)
    cand = divisors[-1]
    return cand, blk_bytes(cand)


def dtls_forward(x, label_vals, params, *, image_size, key=None):
    """Mirrors DTLS.forward: x is (b, n, c, h, w) NCHW per level (PyTorch)."""
    b, n, c, h, w = x.shape
    assert h == image_size and w == image_size, \
        f"height and width of image must be {image_size}"
    assert label_vals.shape[0] == n

    # t = random.choices(range(0, len(label)-1), k=b) is sampled in forward()
    # but never consumed by p_losses; kept for fidelity, unused.
    if key is not None:
        _t_unused = jax.random.randint(key, (b,), 0, n - 1)

    Wconv, bias, wt, bt = params                 # (3,3,c,c), (c,), (c,), (c,)

    TR, blk_bytes = _pick_row_tile(h, w, c, x.dtype.itemsize)
    n_rt = h // TR                               # row tiles per image
    n_mt = b * n_rt                              # total row tiles (grid axis 0)
    n_steps = n - 1

    # ---- glue (plain JAX): level/channel-major layout + halo'd row tiles ----
    # TODO(synk): storing x channel/tile-major upstream would remove this one
    # remaining HBM round trip of x (review item on wrapper transpose/pad).
    x_l = jnp.transpose(x, (1, 0, 2, 3, 4))                          # (n,b,c,h,w)
    xpad = jnp.pad(x_l, ((0, 0), (0, 0), (0, 0), (1, 1), (1, 1)))    # (n,b,c,h+2,w+2)
    row_idx = (jnp.arange(n_rt) * TR)[:, None] + jnp.arange(TR + 2)[None, :]
    tiles = xpad[:, :, :, row_idx, :]                    # (n,b,c,n_rt,TR+2,w+2)
    tiles = jnp.transpose(tiles, (0, 1, 3, 2, 4, 5))     # (n,b,n_rt,c,TR+2,w+2)
    tiles = tiles.reshape(n, n_mt, c, TR + 2, w + 2).astype(jnp.bfloat16)

    tgt = x_l.reshape(n, b, c, n_rt, TR, w)
    tgt = jnp.transpose(tgt, (0, 1, 3, 2, 4, 5)).reshape(n, n_mt, c, TR, w)
    tgt = tgt.astype(jnp.bfloat16)

    wflat = Wconv.reshape(-1).astype(jnp.float32)        # HWIO order, 9*c*c

    vmem_limit = int(min(32 * 2 ** 20, max(16 * 2 ** 20, 4 * blk_bytes)))

    pred_t, loss_parts = pl.pallas_call(
        _dtls_tile_kernel,
        grid=(n_mt, n_steps),
        in_specs=[
            pl.BlockSpec(memory_space=pltpu.MemorySpace.SMEM),    # label values
            pl.BlockSpec(memory_space=pltpu.MemorySpace.SMEM),    # conv weights
            pl.BlockSpec(memory_space=pltpu.MemorySpace.SMEM),    # conv bias
            pl.BlockSpec(memory_space=pltpu.MemorySpace.SMEM),    # temb scale
            pl.BlockSpec(memory_space=pltpu.MemorySpace.SMEM),    # temb shift
            pl.BlockSpec((None, None, c, TR + 2, w + 2),
                         lambda m, i: (i, m, 0, 0, 0)),           # halo rows, lvl i
            pl.BlockSpec((None, None, c, TR, w),
                         lambda m, i: (i + 1, m, 0, 0, 0)),       # target, lvl i+1
        ],
        out_specs=[
            pl.BlockSpec((None, None, c, TR, w),
                         lambda m, i: (i, m, 0, 0, 0)),           # x_recon rows
            pl.BlockSpec((None, 1, 1), lambda m, i: (m, 0, 0)),   # per-tile sq err
        ],
        out_shape=[
            jax.ShapeDtypeStruct((n_steps, n_mt, c, TR, w), x.dtype),
            jax.ShapeDtypeStruct((n_mt, 1, 1), jnp.float32),
        ],
        scratch_shapes=[pltpu.VMEM((TR, w), jnp.float32)],
        compiler_params=pltpu.CompilerParams(
            dimension_semantics=("parallel", "arbitrary"),
            vmem_limit_bytes=vmem_limit),
    )(label_vals.astype(jnp.float32), wflat,
      bias.astype(jnp.float32), wt.astype(jnp.float32), bt.astype(jnp.float32),
      tiles, tgt)

    # nn.MSELoss mean: a single global scale after summing per-tile partials.
    loss = jnp.sum(loss_parts) * (1.0 / float(b * c * h * w))

    # back to the PyTorch NCHW convention per reconstructed level
    x_recon = pred_t.reshape(n_steps, b, n_rt, c, TR, w)
    x_recon = jnp.transpose(x_recon, (0, 1, 3, 2, 4, 5)).reshape(
        n_steps, b, c, h, w)
    return loss, [x_recon[i] for i in range(n_steps)]


def dtls_forward_ref(x, label_vals, params):
    """Pure-JAX reference of the same semantics (for correctness check)."""
    b, n, c, h, w = x.shape
    Wconv, bias, wt, bt = params                 # (3,3,c,c) HWIO
    loss = jnp.float32(0.0)
    recons = []
    for i in range(n - 1):
        xi = jnp.transpose(x[:, i], (0, 2, 3, 1))                   # (b,h,w,c)
        y = lax.conv_general_dilated(
            xi, Wconv, (1, 1), "SAME",
            dimension_numbers=("NHWC", "HWIO", "NHWC"))
        y = jnp.tanh(y + bias + (wt * label_vals[i] + bt))
        tgt = jnp.transpose(x[:, i + 1], (0, 2, 3, 1))
        loss = loss + jnp.mean((y - tgt) ** 2)
        recons.append(jnp.transpose(y, (0, 3, 1, 2)))
    return loss, recons


if __name__ == "__main__":
    b, n, c, h, w = 2, 4, 4, 16, 16
    image_size = 16

    key = jax.random.PRNGKey(0)
    kx, kt, kw, kb, kwt, kbt = jax.random.split(key, 6)

    # x: (batch, levels, C, H, W), values in [-1, 1] like the diffusion images
    x = jax.random.uniform(kx, (b, n, c, h, w), jnp.float32, -1.0, 1.0)

    # label rows; forward() uses [float(row[0]) for row in label] as step values
    label = [[3.0], [2.0], [1.0], [0.0]]
    label_vals = jnp.asarray([row[0] for row in label], dtype=jnp.float32)

    # deterministic synthetic denoise_fn parameters
    Wconv = jax.random.normal(kw, (3, 3, c, c), jnp.float32) * 0.1
    bias = jax.random.normal(kb, (c,), jnp.float32) * 0.01
    wt = jax.random.normal(kwt, (c,), jnp.float32) * 0.05
    bt = jax.random.normal(kbt, (c,), jnp.float32) * 0.01
    params = (Wconv, bias, wt, bt)

    loss, x_recon = dtls_forward(x, label_vals, params,
                                 image_size=image_size, key=kt)
    loss = jax.block_until_ready(loss)
    x_recon = [jax.block_until_ready(r) for r in x_recon]

    loss_ref, recon_ref = dtls_forward_ref(x, label_vals, params)
    assert jnp.allclose(loss, loss_ref, rtol=1e-2, atol=1e-2), (loss, loss_ref)
    for got, ref in zip(x_recon, recon_ref):
        assert got.shape == ref.shape
        assert jnp.allclose(got, ref, rtol=1e-2, atol=2e-2), \
            float(jnp.max(jnp.abs(got - ref)))

    print("KERNEL_OK")
</pallas_src>

<mosaic_0001>
module attributes {stable_mosaic.version = 11 : i64} {
  func.func @_dtls_tile_kernel(%arg0: i32, %arg1: i32, %arg2: memref<4xf32, #tpu.memory_space<smem>>, %arg3: memref<144xf32, #tpu.memory_space<smem>>, %arg4: memref<4xf32, #tpu.memory_space<smem>>, %arg5: memref<4xf32, #tpu.memory_space<smem>>, %arg6: memref<4xf32, #tpu.memory_space<smem>>, %arg7: memref<1x1x4x18x18xbf16, #tpu.memory_space<vmem>>, %arg8: memref<1x1x4x16x16xbf16, #tpu.memory_space<vmem>>, %arg9: memref<1x1x4x16x16xf32, #tpu.memory_space<vmem>>, %arg10: memref<1x1x1xf32, #tpu.memory_space<vmem>>, %arg11: memref<16x16xf32, #tpu.memory_space<vmem>>) attributes {dimension_semantics = [#tpu.dimension_semantics<parallel>, #tpu.dimension_semantics<arbitrary>], iteration_bounds = array<i64: 2, 3>, scalar_prefetch = 0 : i64, scratch_operands = 1 : i64, tpu.core_type = #tpu.core_type<tc>, window_params = [{transform_indices = @transform_0, window_bounds = array<i64: 4>}, {transform_indices = @transform_1, window_bounds = array<i64: 144>}, {transform_indices = @transform_2, window_bounds = array<i64: 4>}, {transform_indices = @transform_3, window_bounds = array<i64: 4>}, {transform_indices = @transform_4, window_bounds = array<i64: 4>}, {transform_indices = @transform_5, window_bounds = array<i64: 1, 1, 4, 18, 18>}, {transform_indices = @transform_6, window_bounds = array<i64: 1, 1, 4, 16, 16>}, {transform_indices = @transform_7, window_bounds = array<i64: 1, 1, 4, 16, 16>}, {transform_indices = @transform_8, window_bounds = array<i64: 1, 1, 1>}]} {
    %c0_i32 = arith.constant 0 : i32
    %0 = arith.cmpi eq, %arg1, %c0_i32 : i32
    %1 = arith.extui %0 : i1 to i32
    %c0_i32_0 = arith.constant 0 : i32
    %2 = arith.cmpi ne, %1, %c0_i32_0 : i32
    scf.if %2 {
      %cst = arith.constant 0.000000e+00 : f32
      %956 = vector.broadcast %cst : f32 to vector<16x16xf32>
      %c0_48 = arith.constant 0 : index
      %c0_49 = arith.constant 0 : index
      %957 = vector.load %arg11[%c0_48, %c0_49] : memref<16x16xf32, #tpu.memory_space<vmem>>, vector<16x16xf32>
      tpu.vector_store %arg11[%c0_48, %c0_49], %956 {strides = array<i32>} : memref<16x16xf32, #tpu.memory_space<vmem>>, vector<16x16xf32>,
      %cst_50 = arith.constant 0.000000e+00 : f32
      %958 = vector.broadcast %cst_50 : f32 to vector<1x1xf32>
      %c0_51 = arith.constant 0 : index
      %c0_52 = arith.constant 0 : index
      %c0_53 = arith.constant 0 : index
      %959 = vector.load %arg10[%c0_51, %c0_52, %c0_53] : memref<1x1x1xf32, #tpu.memory_space<vmem>>, vector<1x1x1xf32>
      %960 = vector.shape_cast %959 : vector<1x1x1xf32> to vector<1x1xf32>
      %961 = vector.shape_cast %958 : vector<1x1xf32> to vector<1x1x1xf32>
      tpu.vector_store %arg10[%c0_51, %c0_52, %c0_53], %961 {strides = array<i32>} : memref<1x1x1xf32, #tpu.memory_space<vmem>>, vector<1x1x1xf32>,
    } else {
    }
    %3 = arith.index_cast %arg1 : i32 to index
    %4 = memref.load %arg2[%3] : memref<4xf32, #tpu.memory_space<smem>>
    %c0 = arith.constant 0 : index
    %c0_1 = arith.constant 0 : index
    %c0_2 = arith.constant 0 : index
    %c0_3 = arith.constant 0 : index
    %c0_4 = arith.constant 0 : index
    %5 = vector.load %arg7[%c0, %c0_1, %c0_2, %c0_3, %c0_4] : memref<1x1x4x18x18xbf16, #tpu.memory_space<vmem>>, vector<1x1x4x18x18xbf16>
    %6 = vector.shape_cast %5 : vector<1x1x4x18x18xbf16> to vector<4x18x18xbf16>
    %7 = arith.extf %6 : vector<4x18x18xbf16> to vector<4x18x18xf32>
    %c0_5 = arith.constant 0 : index
    %c0_6 = arith.constant 0 : index
    %c0_7 = arith.constant 0 : index
    %c0_8 = arith.constant 0 : index
    %c0_9 = arith.constant 0 : index
    %8 = vector.load %arg8[%c0_5, %c0_6, %c0_7, %c0_8, %c0_9] : memref<1x1x4x16x16xbf16, #tpu.memory_space<vmem>>, vector<1x1x4x16x16xbf16>
    %9 = vector.shape_cast %8 : vector<1x1x4x16x16xbf16> to vector<4x16x16xbf16>
    %10 = arith.extf %9 : vector<4x16x16xbf16> to vector<4x16x16xf32>
    %11 = vector.extract_strided_slice %7 {offsets = [0, 0, 0], sizes = [4, 16, 18], strides = [1, 1, 1]} : vector<4x18x18xf32> to vector<4x16x18xf32>
    %12 = vector.extract_strided_slice %11 {offsets = [0, 0, 0], sizes = [4, 16, 16], strides = [1, 1, 1]} : vector<4x16x18xf32> to vector<4x16x16xf32>
    %13 = vector.extract_strided_slice %11 {offsets = [0, 0, 1], sizes = [4, 16, 16], strides = [1, 1, 1]} : vector<4x16x18xf32> to vector<4x16x16xf32>
    %14 = vector.extract_strided_slice %11 {offsets = [0, 0, 2], sizes = [4, 16, 16], strides = [1, 1, 1]} : vector<4x16x18xf32> to vector<4x16x16xf32>
    %15 = vector.extract_strided_slice %7 {offsets = [0, 1, 0], sizes = [4, 16, 18], strides = [1, 1, 1]} : vector<4x18x18xf32> to vector<4x16x18xf32>
    %16 = vector.extract_strided_slice %15 {offsets = [0, 0, 0], sizes = [4, 16, 16], strides = [1, 1, 1]} : vector<4x16x18xf32> to vector<4x16x16xf32>
    %17 = vector.extract_strided_slice %15 {offsets = [0, 0, 1], sizes = [4, 16, 16], strides = [1, 1, 1]} : vector<4x16x18xf32> to vector<4x16x16xf32>
    %18 = vector.extract_strided_slice %15 {offsets = [0, 0, 2], sizes = [4, 16, 16], strides = [1, 1, 1]} : vector<4x16x18xf32> to vector<4x16x16xf32>
    %19 = vector.extract_strided_slice %7 {offsets = [0, 2, 0], sizes = [4, 16, 18], strides = [1, 1, 1]} : vector<4x18x18xf32> to vector<4x16x18xf32>
    %20 = vector.extract_strided_slice %19 {offsets = [0, 0, 0], sizes = [4, 16, 16], strides = [1, 1, 1]} : vector<4x16x18xf32> to vector<4x16x16xf32>
    %21 = vector.extract_strided_slice %19 {offsets = [0, 0, 1], sizes = [4, 16, 16], strides = [1, 1, 1]} : vector<4x16x18xf32> to vector<4x16x16xf32>
    %22 = vector.extract_strided_slice %19 {offsets = [0, 0, 2], sizes = [4, 16, 16], strides = [1, 1, 1]} : vector<4x16x18xf32> to vector<4x16x16xf32>
    %c0_10 = arith.constant 0 : index
    %c0_11 = arith.constant 0 : index
    %23 = vector.load %arg11[%c0_10, %c0_11] : memref<16x16xf32, #tpu.memory_space<vmem>>, vector<16x16xf32>
    %c0_12 = arith.constant 0 : index
    %24 = memref.load %arg4[%c0_12] : memref<4xf32, #tpu.memory_space<smem>>
    %c0_13 = arith.constant 0 : index
    %25 = memref.load %arg5[%c0_13] : memref<4xf32, #tpu.memory_space<smem>>
    %26 = arith.mulf %25, %4 : f32
    %27 = arith.addf %24, %26 : f32
    %c0_14 = arith.constant 0 : index
    %28 = memref.load %arg6[%c0_14] : memref<4xf32, #tpu.memory_space<smem>>
    %29 = arith.addf %27, %28 : f32
    %30 = vector.broadcast %29 : f32 to vector<16x16xf32>
    %c0_15 = arith.constant 0 : index
    %31 = memref.load %arg3[%c0_15] : memref<144xf32, #tpu.memory_space<smem>>
    %32 = vector.extract_strided_slice %12 {offsets = [0, 0, 0], sizes = [1, 16, 16], strides = [1, 1, 1]} : vector<4x16x16xf32> to vector<1x16x16xf32>
    %33 = vector.shape_cast %32 : vector<1x16x16xf32> to vector<16x16xf32>
    %34 = vector.broadcast %31 : f32 to vector<16x16xf32>
    %35 = arith.mulf %34, %33 : vector<16x16xf32>
    %36 = arith.addf %30, %35 : vector<16x16xf32>
    %c4 = arith.constant 4 : index
    %37 = memref.load %arg3[%c4] : memref<144xf32, #tpu.memory_space<smem>>
    %38 = vector.extract_strided_slice %12 {offsets = [1, 0, 0], sizes = [1, 16, 16], strides = [1, 1, 1]} : vector<4x16x16xf32> to vector<1x16x16xf32>
    %39 = vector.shape_cast %38 : vector<1x16x16xf32> to vector<16x16xf32>
    %40 = vector.broadcast %37 : f32 to vector<16x16xf32>
    %41 = arith.mulf %40, %39 : vector<16x16xf32>
    %42 = arith.addf %36, %41 : vector<16x16xf32>
    %c8 = arith.constant 8 : index
    %43 = memref.load %arg3[%c8] : memref<144xf32, #tpu.memory_space<smem>>
    %44 = vector.extract_strided_slice %12 {offsets = [2, 0, 0], sizes = [1, 16, 16], strides = [1, 1, 1]} : vector<4x16x16xf32> to vector<1x16x16xf32>
    %45 = vector.shape_cast %44 : vector<1x16x16xf32> to vector<16x16xf32>
    %46 = vector.broadcast %43 : f32 to vector<16x16xf32>
    %47 = arith.mulf %46, %45 : vector<16x16xf32>
    %48 = arith.addf %42, %47 : vector<16x16xf32>
    %c12 = arith.constant 12 : index
    %49 = memref.load %arg3[%c12] : memref<144xf32, #tpu.memory_space<smem>>
    %50 = vector.extract_strided_slice %12 {offsets = [3, 0, 0], sizes = [1, 16, 16], strides = [1, 1, 1]} : vector<4x16x16xf32> to vector<1x16x16xf32>
    %51 = vector.shape_cast %50 : vector<1x16x16xf32> to vector<16x16xf32>
    %52 = vector.broadcast %49 : f32 to vector<16x16xf32>
    %53 = arith.mulf %52, %51 : vector<16x16xf32>
    %54 = arith.addf %48, %53 : vector<16x16xf32>
    %c16 = arith.constant 16 : index
    %55 = memref.load %arg3[%c16] : memref<144xf32, #tpu.memory_space<smem>>
    %56 = vector.extract_strided_slice %13 {offsets = [0, 0, 0], sizes = [1, 16, 16], strides = [1, 1, 1]} : vector<4x16x16xf32> to vector<1x16x16xf32>
    %57 = vector.shape_cast %56 : vector<1x16x16xf32> to vector<16x16xf32>
    %58 = vector.broadcast %55 : f32 to vector<16x16xf32>
    %59 = arith.mulf %58, %57 : vector<16x16xf32>
    %60 = arith.addf %54, %59 : vector<16x16xf32>
    %c20 = arith.constant 20 : index
    %61 = memref.load %arg3[%c20] : memref<144xf32, #tpu.memory_space<smem>>
    %62 = vector.extract_strided_slice %13 {offsets = [1, 0, 0], sizes = [1, 16, 16], strides = [1, 1, 1]} : vector<4x16x16xf32> to vector<1x16x16xf32>
    %63 = vector.shape_cast %62 : vector<1x16x16xf32> to vector<16x16xf32>
    %64 = vector.broadcast %61 : f32 to vector<16x16xf32>
    %65 = arith.mulf %64, %63 : vector<16x16xf32>
    %66 = arith.addf %60, %65 : vector<16x16xf32>
    %c24 = arith.constant 24 : index
    %67 = memref.load %arg3[%c24] : memref<144xf32, #tpu.memory_space<smem>>
    %68 = vector.extract_strided_slice %13 {offsets = [2, 0, 0], sizes = [1, 16, 16], strides = [1, 1, 1]} : vector<4x16x16xf32> to vector<1x16x16xf32>
    %69 = vector.shape_cast %68 : vector<1x16x16xf32> to vector<16x16xf32>
    %70 = vector.broadcast %67 : f32 to vector<16x16xf32>
    %71 = arith.mulf %70, %69 : vector<16x16xf32>
    %72 = arith.addf %66, %71 : vector<16x16xf32>
    %c28 = arith.constant 28 : index
    %73 = memref.load %arg3[%c28] : memref<144xf32, #tpu.memory_space<smem>>
    %74 = vector.extract_strided_slice %13 {offsets = [3, 0, 0], sizes = [1, 16, 16], strides = [1, 1, 1]} : vector<4x16x16xf32> to vector<1x16x16xf32>
    %75 = vector.shape_cast %74 : vector<1x16x16xf32> to vector<16x16xf32>
    %76 = vector.broadcast %73 : f32 to vector<16x16xf32>
    %77 = arith.mulf %76, %75 : vector<16x16xf32>
    %78 = arith.addf %72, %77 : vector<16x16xf32>
    %c32 = arith.constant 32 : index
    %79 = memref.load %arg3[%c32] : memref<144xf32, #tpu.memory_space<smem>>
    %80 = vector.extract_strided_slice %14 {offsets = [0, 0, 0], sizes = [1, 16, 16], strides = [1, 1, 1]} : vector<4x16x16xf32> to vector<1x16x16xf32>
    %81 = vector.shape_cast %80 : vector<1x16x16xf32> to vector<16x16xf32>
    %82 = vector.broadcast %79 : f32 to vector<16x16xf32>
    %83 = arith.mulf %82, %81 : vector<16x16xf32>
    %84 = arith.addf %78, %83 : vector<16x16xf32>
    %c36 = arith.constant 36 : index
    %85 = memref.load %arg3[%c36] : memref<144xf32, #tpu.memory_space<smem>>
    %86 = vector.extract_strided_slice %14 {offsets = [1, 0, 0], sizes = [1, 16, 16], strides = [1, 1, 1]} : vector<4x16x16xf32> to vector<1x16x16xf32>
    %87 = vector.shape_cast %86 : vector<1x16x16xf32> to vector<16x16xf32>
    %88 = vector.broadcast %85 : f32 to vector<16x16xf32>
    %89 = arith.mulf %88, %87 : vector<16x16xf32>
    %90 = arith.addf %84, %89 : vector<16x16xf32>
    %c40 = arith.constant 40 : index
    %91 = memref.load %arg3[%c40] : memref<144xf32, #tpu.memory_space<smem>>
    %92 = vector.extract_strided_slice %14 {offsets = [2, 0, 0], sizes = [1, 16, 16], strides = [1, 1, 1]} : vector<4x16x16xf32> to vector<1x16x16xf32>
    %93 = vector.shape_cast %92 : vector<1x16x16xf32> to vector<16x16xf32>
    %94 = vector.broadcast %91 : f32 to vector<16x16xf32>
    %95 = arith.mulf %94, %93 : vector<16x16xf32>
    %96 = arith.addf %90, %95 : vector<16x16xf32>
    %c44 = arith.constant 44 : index
    %97 = memref.load %arg3[%c44] : memref<144xf32, #tpu.memory_space<smem>>
    %98 = vector.extract_strided_slice %14 {offsets = [3, 0, 0], sizes = [1, 16, 16], strides = [1, 1, 1]} : vector<4x16x16xf32> to vector<1x16x16xf32>
    %99 = vector.shape_cast %98 : vector<1x16x16xf32> to vector<16x16xf32>
    %100 = vector.broadcast %97 : f32 to vector<16x16xf32>
    %101 = arith.mulf %100, %99 : vector<16x16xf32>
    %102 = arith.addf %96, %101 : vector<16x16xf32>
    %c48 = arith.constant 48 : index
    %103 = memref.load %arg3[%c48] : memref<144xf32, #tpu.memory_space<smem>>
    %104 = vector.extract_strided_slice %16 {offsets = [0, 0, 0], sizes = [1, 16, 16], strides = [1, 1, 1]} : vector<4x16x16xf32> to vector<1x16x16xf32>
    %105 = vector.shape_cast %104 : vector<1x16x16xf32> to vector<16x16xf32>
    %106 = vector.broadcast %103 : f32 to vector<16x16xf32>
    %107 = arith.mulf %106, %105 : vector<16x16xf32>
    %108 = arith.addf %102, %107 : vector<16x16xf32>
    %c52 = arith.constant 52 : index
    %109 = memref.load %arg3[%c52] : memref<144xf32, #tpu.memory_space<smem>>
    %110 = vector.extract_strided_slice %16 {offsets = [1, 0, 0], sizes = [1, 16, 16], strides = [1, 1, 1]} : vector<4x16x16xf32> to vector<1x16x16xf32>
    %111 = vector.shape_cast %110 : vector<1x16x16xf32> to vector<16x16xf32>
    %112 = vector.broadcast %109 : f32 to vector<16x16xf32>
    %113 = arith.mulf %112, %111 : vector<16x16xf32>
    %114 = arith.addf %108, %113 : vector<16x16xf32>
    %c56 = arith.constant 56 : index
    %115 = memref.load %arg3[%c56] : memref<144xf32, #tpu.memory_space<smem>>
    %116 = vector.extract_strided_slice %16 {offsets = [2, 0, 0], sizes = [1, 16, 16], strides = [1, 1, 1]} : vector<4x16x16xf32> to vector<1x16x16xf32>
    %117 = vector.shape_cast %116 : vector<1x16x16xf32> to vector<16x16xf32>
    %118 = vector.broadcast %115 : f32 to vector<16x16xf32>
    %119 = arith.mulf %118, %117 : vector<16x16xf32>
    %120 = arith.addf %114, %119 : vector<16x16xf32>
    %c60 = arith.constant 60 : index
    %121 = memref.load %arg3[%c60] : memref<144xf32, #tpu.memory_space<smem>>
    %122 = vector.extract_strided_slice %16 {offsets = [3, 0, 0], sizes = [1, 16, 16], strides = [1, 1, 1]} : vector<4x16x16xf32> to vector<1x16x16xf32>
    %123 = vector.shape_cast %122 : vector<1x16x16xf32> to vector<16x16xf32>
    %124 = vector.broadcast %121 : f32 to vector<16x16xf32>
    %125 = arith.mulf %124, %123 : vector<16x16xf32>
    %126 = arith.addf %120, %125 : vector<16x16xf32>
    %c64 = arith.constant 64 : index
    %127 = memref.load %arg3[%c64] : memref<144xf32, #tpu.memory_space<smem>>
    %128 = vector.extract_strided_slice %17 {offsets = [0, 0, 0], sizes = [1, 16, 16], strides = [1, 1, 1]} : vector<4x16x16xf32> to vector<1x16x16xf32>
    %129 = vector.shape_cast %128 : vector<1x16x16xf32> to vector<16x16xf32>
    %130 = vector.broadcast %127 : f32 to vector<16x16xf32>
    %131 = arith.mulf %130, %129 : vector<16x16xf32>
    %132 = arith.addf %126, %131 : vector<16x16xf32>
    %c68 = arith.constant 68 : index
    %133 = memref.load %arg3[%c68] : memref<144xf32, #tpu.memory_space<smem>>
    %134 = vector.extract_strided_slice %17 {offsets = [1, 0, 0], sizes = [1, 16, 16], strides = [1, 1, 1]} : vector<4x16x16xf32> to vector<1x16x16xf32>
    %135 = vector.shape_cast %134 : vector<1x16x16xf32> to vector<16x16xf32>
    %136 = vector.broadcast %133 : f32 to vector<16x16xf32>
    %137 = arith.mulf %136, %135 : vector<16x16xf32>
    %138 = arith.addf %132, %137 : vector<16x16xf32>
    %c72 = arith.constant 72 : index
    %139 = memref.load %arg3[%c72] : memref<144xf32, #tpu.memory_space<smem>>
    %140 = vector.extract_strided_slice %17 {offsets = [2, 0, 0], sizes = [1, 16, 16], strides = [1, 1, 1]} : vector<4x16x16xf32> to vector<1x16x16xf32>
    %141 = vector.shape_cast %140 : vector<1x16x16xf32> to vector<16x16xf32>
    %142 = vector.broadcast %139 : f32 to vector<16x16xf32>
    %143 = arith.mulf %142, %141 : vector<16x16xf32>
    %144 = arith.addf %138, %143 : vector<16x16xf32>
    %c76 = arith.constant 76 : index
    %145 = memref.load %arg3[%c76] : memref<144xf32, #tpu.memory_space<smem>>
    %146 = vector.extract_strided_slice %17 {offsets = [3, 0, 0], sizes = [1, 16, 16], strides = [1, 1, 1]} : vector<4x16x16xf32> to vector<1x16x16xf32>
    %147 = vector.shape_cast %146 : vector<1x16x16xf32> to vector<16x16xf32>
    %148 = vector.broadcast %145 : f32 to vector<16x16xf32>
    %149 = arith.mulf %148, %147 : vector<16x16xf32>
    %150 = arith.addf %144, %149 : vector<16x16xf32>
    %c80 = arith.constant 80 : index
    %151 = memref.load %arg3[%c80] : memref<144xf32, #tpu.memory_space<smem>>
    %152 = vector.extract_strided_slice %18 {offsets = [0, 0, 0], sizes = [1, 16, 16], strides = [1, 1, 1]} : vector<4x16x16xf32> to vector<1x16x16xf32>
    %153 = vector.shape_cast %152 : vector<1x16x16xf32> to vector<16x16xf32>
    %154 = vector.broadcast %151 : f32 to vector<16x16xf32>
    %155 = arith.mulf %154, %153 : vector<16x16xf32>
    %156 = arith.addf %150, %155 : vector<16x16xf32>
    %c84 = arith.constant 84 : index
    %157 = memref.load %arg3[%c84] : memref<144xf32, #tpu.memory_space<smem>>
    %158 = vector.extract_strided_slice %18 {offsets = [1, 0, 0], sizes = [1, 16, 16], strides = [1, 1, 1]} : vector<4x16x16xf32> to vector<1x16x16xf32>
    %159 = vector.shape_cast %158 : vector<1x16x16xf32> to vector<16x16xf32>
    %160 = vector.broadcast %157 : f32 to vector<16x16xf32>
    %161 = arith.mulf %160, %159 : vector<16x16xf32>
    %162 = arith.addf %156, %161 : vector<16x16xf32>
    %c88 = arith.constant 88 : index
    %163 = memref.load %arg3[%c88] : memref<144xf32, #tpu.memory_space<smem>>
    %164 = vector.extract_strided_slice %18 {offsets = [2, 0, 0], sizes = [1, 16, 16], strides = [1, 1, 1]} : vector<4x16x16xf32> to vector<1x16x16xf32>
    %165 = vector.shape_cast %164 : vector<1x16x16xf32> to vector<16x16xf32>
    %166 = vector.broadcast %163 : f32 to vector<16x16xf32>
    %167 = arith.mulf %166, %165 : vector<16x16xf32>
    %168 = arith.addf %162, %167 : vector<16x16xf32>
    %c92 = arith.constant 92 : index
    %169 = memref.load %arg3[%c92] : memref<144xf32, #tpu.memory_space<smem>>
    %170 = vector.extract_strided_slice %18 {offsets = [3, 0, 0], sizes = [1, 16, 16], strides = [1, 1, 1]} : vector<4x16x16xf32> to vector<1x16x16xf32>
    %171 = vector.shape_cast %170 : vector<1x16x16xf32> to vector<16x16xf32>
    %172 = vector.broadcast %169 : f32 to vector<16x16xf32>
    %173 = arith.mulf %172, %171 : vector<16x16xf32>
    %174 = arith.addf %168, %173 : vector<16x16xf32>
    %c96 = arith.constant 96 : index
    %175 = memref.load %arg3[%c96] : memref<144xf32, #tpu.memory_space<smem>>
    %176 = vector.extract_strided_slice %20 {offsets = [0, 0, 0], sizes = [1, 16, 16], strides = [1, 1, 1]} : vector<4x16x16xf32> to vector<1x16x16xf32>
    %177 = vector.shape_cast %176 : vector<1x16x16xf32> to vector<16x16xf32>
    %178 = vector.broadcast %175 : f32 to vector<16x16xf32>
    %179 = arith.mulf %178, %177 : vector<16x16xf32>
    %180 = arith.addf %174, %179 : vector<16x16xf32>
    %c100 = arith.constant 100 : index
    %181 = memref.load %arg3[%c100] : memref<144xf32, #tpu.memory_space<smem>>
    %182 = vector.extract_strided_slice %20 {offsets = [1, 0, 0], sizes = [1, 16, 16], strides = [1, 1, 1]} : vector<4x16x16xf32> to vector<1x16x16xf32>
    %183 = vector.shape_cast %182 : vector<1x16x16xf32> to vector<16x16xf32>
    %184 = vector.broadcast %181 : f32 to vector<16x16xf32>
    %185 = arith.mulf %184, %183 : vector<16x16xf32>
    %186 = arith.addf %180, %185 : vector<16x16xf32>
    %c104 = arith.constant 104 : index
    %187 = memref.load %arg3[%c104] : memref<144xf32, #tpu.memory_space<smem>>
    %188 = vector.extract_strided_slice %20 {offsets = [2, 0, 0], sizes = [1, 16, 16], strides = [1, 1, 1]} : vector<4x16x16xf32> to vector<1x16x16xf32>
    %189 = vector.shape_cast %188 : vector<1x16x16xf32> to vector<16x16xf32>
    %190 = vector.broadcast %187 : f32 to vector<16x16xf32>
    %191 = arith.mulf %190, %189 : vector<16x16xf32>
    %192 = arith.addf %186, %191 : vector<16x16xf32>
    %c108 = arith.constant 108 : index
    %193 = memref.load %arg3[%c108] : memref<144xf32, #tpu.memory_space<smem>>
    %194 = vector.extract_strided_slice %20 {offsets = [3, 0, 0], sizes = [1, 16, 16], strides = [1, 1, 1]} : vector<4x16x16xf32> to vector<1x16x16xf32>
    %195 = vector.shape_cast %194 : vector<1x16x16xf32> to vector<16x16xf32>
    %196 = vector.broadcast %193 : f32 to vector<16x16xf32>
    %197 = arith.mulf %196, %195 : vector<16x16xf32>
    %198 = arith.addf %192, %197 : vector<16x16xf32>
    %c112 = arith.constant 112 : index
    %199 = memref.load %arg3[%c112] : memref<144xf32, #tpu.memory_space<smem>>
    %200 = vector.extract_strided_slice %21 {offsets = [0, 0, 0], sizes = [1, 16, 16], strides = [1, 1, 1]} : vector<4x16x16xf32> to vector<1x16x16xf32>
    %201 = vector.shape_cast %200 : vector<1x16x16xf32> to vector<16x16xf32>
    %202 = vector.broadcast %199 : f32 to vector<16x16xf32>
    %203 = arith.mulf %202, %201 : vector<16x16xf32>
    %204 = arith.addf %198, %203 : vector<16x16xf32>
    %c116 = arith.constant 116 : index
    %205 = memref.load %arg3[%c116] : memref<144xf32, #tpu.memory_space<smem>>
    %206 = vector.extract_strided_slice %21 {offsets = [1, 0, 0], sizes = [1, 16, 16], strides = [1, 1, 1]} : vector<4x16x16xf32> to vector<1x16x16xf32>
    %207 = vector.shape_cast %206 : vector<1x16x16xf32> to vector<16x16xf32>
    %208 = vector.broadcast %205 : f32 to vector<16x16xf32>
    %209 = arith.mulf %208, %207 : vector<16x16xf32>
    %210 = arith.addf %204, %209 : vector<16x16xf32>
    %c120 = arith.constant 120 : index
    %211 = memref.load %arg3[%c120] : memref<144xf32, #tpu.memory_space<smem>>
    %212 = vector.extract_strided_slice %21 {offsets = [2, 0, 0], sizes = [1, 16, 16], strides = [1, 1, 1]} : vector<4x16x16xf32> to vector<1x16x16xf32>
    %213 = vector.shape_cast %212 : vector<1x16x16xf32> to vector<16x16xf32>
    %214 = vector.broadcast %211 : f32 to vector<16x16xf32>
    %215 = arith.mulf %214, %213 : vector<16x16xf32>
    %216 = arith.addf %210, %215 : vector<16x16xf32>
    %c124 = arith.constant 124 : index
    %217 = memref.load %arg3[%c124] : memref<144xf32, #tpu.memory_space<smem>>
    %218 = vector.extract_strided_slice %21 {offsets = [3, 0, 0], sizes = [1, 16, 16], strides = [1, 1, 1]} : vector<4x16x16xf32> to vector<1x16x16xf32>
    %219 = vector.shape_cast %218 : vector<1x16x16xf32> to vector<16x16xf32>
    %220 = vector.broadcast %217 : f32 to vector<16x16xf32>
    %221 = arith.mulf %220, %219 : vector<16x16xf32>
    %222 = arith.addf %216, %221 : vector<16x16xf32>
    %c128 = arith.constant 128 : index
    %223 = memref.load %arg3[%c128] : memref<144xf32, #tpu.memory_space<smem>>
    %224 = vector.extract_strided_slice %22 {offsets = [0, 0, 0], sizes = [1, 16, 16], strides = [1, 1, 1]} : vector<4x16x16xf32> to vector<1x16x16xf32>
    %225 = vector.shape_cast %224 : vector<1x16x16xf32> to vector<16x16xf32>
    %226 = vector.broadcast %223 : f32 to vector<16x16xf32>
    %227 = arith.mulf %226, %225 : vector<16x16xf32>
    %228 = arith.addf %222, %227 : vector<16x16xf32>
    %c132 = arith.constant 132 : index
    %229 = memref.load %arg3[%c132] : memref<144xf32, #tpu.memory_space<smem>>
    %230 = vector.extract_strided_slice %22 {offsets = [1, 0, 0], sizes = [1, 16, 16], strides = [1, 1, 1]} : vector<4x16x16xf32> to vector<1x16x16xf32>
    %231 = vector.shape_cast %230 : vector<1x16x16xf32> to vector<16x16xf32>
    %232 = vector.broadcast %229 : f32 to vector<16x16xf32>
    %233 = arith.mulf %232, %231 : vector<16x16xf32>
    %234 = arith.addf %228, %233 : vector<16x16xf32>
    %c136 = arith.constant 136 : index
    %235 = memref.load %arg3[%c136] : memref<144xf32, #tpu.memory_space<smem>>
    %236 = vector.extract_strided_slice %22 {offsets = [2, 0, 0], sizes = [1, 16, 16], strides = [1, 1, 1]} : vector<4x16x16xf32> to vector<1x16x16xf32>
    %237 = vector.shape_cast %236 : vector<1x16x16xf32> to vector<16x16xf32>
    %238 = vector.broadcast %235 : f32 to vector<16x16xf32>
    %239 = arith.mulf %238, %237 : vector<16x16xf32>
    %240 = arith.addf %234, %239 : vector<16x16xf32>
    %c140 = arith.constant 140 : index
    %241 = memref.load %arg3[%c140] : memref<144xf32, #tpu.memory_space<smem>>
    %242 = vector.extract_strided_slice %22 {offsets = [3, 0, 0], sizes = [1, 16, 16], strides = [1, 1, 1]} : vector<4x16x16xf32> to vector<1x16x16xf32>
    %243 = vector.shape_cast %242 : vector<1x16x16xf32> to vector<16x16xf32>
    %244 = vector.broadcast %241 : f32 to vector<16x16xf32>
    %245 = arith.mulf %244, %243 : vector<16x16xf32>
    %246 = arith.addf %240, %245 : vector<16x16xf32>
    %247 = math.tanh %246 : vector<16x16xf32>
    %c0_16 = arith.constant 0 : index
    %c0_17 = arith.constant 0 : index
    %c0_18 = arith.constant 0 : index
    %c0_19 = arith.constant 0 : index
    %c0_20 = arith.constant 0 : index
    %248 = vector.load %arg9[%c0_16, %c0_17, %c0_18, %c0_19, %c0_20] : memref<1x1x4x16x16xf32, #tpu.memory_space<vmem>>, vector<1x1x1x16x16xf32>
    %249 = vector.shape_cast %248 : vector<1x1x1x16x16xf32> to vector<16x16xf32>
    %250 = vector.shape_cast %247 : vector<16x16xf32> to vector<1x1x1x16x16xf32>
    tpu.vector_store %arg9[%c0_16, %c0_17, %c0_18, %c0_19, %c0_20], %250 {strides = array<i32>} : memref<1x1x4x16x16xf32, #tpu.memory_space<vmem>>, vector<1x1x1x16x16xf32>,
    %251 = vector.extract_strided_slice %10 {offsets = [0, 0, 0], sizes = [1, 16, 16], strides = [1, 1, 1]} : vector<4x16x16xf32> to vector<1x16x16xf32>
    %252 = vector.shape_cast %251 : vector<1x16x16xf32> to vector<16x16xf32>
    %253 = arith.subf %247, %252 : vector<16x16xf32>
    %254 = arith.mulf %253, %253 : vector<16x16xf32>
    %255 = arith.addf %23, %254 : vector<16x16xf32>
    %c1 = arith.constant 1 : index
    %256 = memref.load %arg4[%c1] : memref<4xf32, #tpu.memory_space<smem>>
    %c1_21 = arith.constant 1 : index
    %257 = memref.load %arg5[%c1_21] : memref<4xf32, #tpu.memory_space<smem>>
    %258 = arith.mulf %257, %4 : f32
    %259 = arith.addf %256, %258 : f32
    %c1_22 = arith.constant 1 : index
    %260 = memref.load %arg6[%c1_22] : memref<4xf32, #tpu.memory_space<smem>>
    %261 = arith.addf %259, %260 : f32
    %262 = vector.broadcast %261 : f32 to vector<16x16xf32>
    %c1_23 = arith.constant 1 : index
    %263 = memref.load %arg3[%c1_23] : memref<144xf32, #tpu.memory_space<smem>>
    %264 = vector.extract_strided_slice %12 {offsets = [0, 0, 0], sizes = [1, 16, 16], strides = [1, 1, 1]} : vector<4x16x16xf32> to vector<1x16x16xf32>
    %265 = vector.shape_cast %264 : vector<1x16x16xf32> to vector<16x16xf32>
    %266 = vector.broadcast %263 : f32 to vector<16x16xf32>
    %267 = arith.mulf %266, %265 : vector<16x16xf32>
    %268 = arith.addf %262, %267 : vector<16x16xf32>
    %c5 = arith.constant 5 : index
    %269 = memref.load %arg3[%c5] : memref<144xf32, #tpu.memory_space<smem>>
    %270 = vector.extract_strided_slice %12 {offsets = [1, 0, 0], sizes = [1, 16, 16], strides = [1, 1, 1]} : vector<4x16x16xf32> to vector<1x16x16xf32>
    %271 = vector.shape_cast %270 : vector<1x16x16xf32> to vector<16x16xf32>
    %272 = vector.broadcast %269 : f32 to vector<16x16xf32>
    %273 = arith.mulf %272, %271 : vector<16x16xf32>
    %274 = arith.addf %268, %273 : vector<16x16xf32>
    %c9 = arith.constant 9 : index
    %275 = memref.load %arg3[%c9] : memref<144xf32, #tpu.memory_space<smem>>
    %276 = vector.extract_strided_slice %12 {offsets = [2, 0, 0], sizes = [1, 16, 16], strides = [1, 1, 1]} : vector<4x16x16xf32> to vector<1x16x16xf32>
    %277 = vector.shape_cast %276 : vector<1x16x16xf32> to vector<16x16xf32>
    %278 = vector.broadcast %275 : f32 to vector<16x16xf32>
    %279 = arith.mulf %278, %277 : vector<16x16xf32>
    %280 = arith.addf %274, %279 : vector<16x16xf32>
    %c13 = arith.constant 13 : index
    %281 = memref.load %arg3[%c13] : memref<144xf32, #tpu.memory_space<smem>>
    %282 = vector.extract_strided_slice %12 {offsets = [3, 0, 0], sizes = [1, 16, 16], strides = [1, 1, 1]} : vector<4x16x16xf32> to vector<1x16x16xf32>
    %283 = vector.shape_cast %282 : vector<1x16x16xf32> to vector<16x16xf32>
    %284 = vector.broadcast %281 : f32 to vector<16x16xf32>
    %285 = arith.mulf %284, %283 : vector<16x16xf32>
    %286 = arith.addf %280, %285 : vector<16x16xf32>
    %c17 = arith.constant 17 : index
    %287 = memref.load %arg3[%c17] : memref<144xf32, #tpu.memory_space<smem>>
    %288 = vector.extract_strided_slice %13 {offsets = [0, 0, 0], sizes = [1, 16, 16], strides = [1, 1, 1]} : vector<4x16x16xf32> to vector<1x16x16xf32>
    %289 = vector.shape_cast %288 : vector<1x16x16xf32> to vector<16x16xf32>
    %290 = vector.broadcast %287 : f32 to vector<16x16xf32>
    %291 = arith.mulf %290, %289 : vector<16x16xf32>
    %292 = arith.addf %286, %291 : vector<16x16xf32>
    %c21 = arith.constant 21 : index
    %293 = memref.load %arg3[%c21] : memref<144xf32, #tpu.memory_space<smem>>
    %294 = vector.extract_strided_slice %13 {offsets = [1, 0, 0], sizes = [1, 16, 16], strides = [1, 1, 1]} : vector<4x16x16xf32> to vector<1x16x16xf32>
    %295 = vector.shape_cast %294 : vector<1x16x16xf32> to vector<16x16xf32>
    %296 = vector.broadcast %293 : f32 to vector<16x16xf32>
    %297 = arith.mulf %296, %295 : vector<16x16xf32>
    %298 = arith.addf %292, %297 : vector<16x16xf32>
    %c25 = arith.constant 25 : index
    %299 = memref.load %arg3[%c25] : memref<144xf32, #tpu.memory_space<smem>>
    %300 = vector.extract_strided_slice %13 {offsets = [2, 0, 0], sizes = [1, 16, 16], strides = [1, 1, 1]} : vector<4x16x16xf32> to vector<1x16x16xf32>
    %301 = vector.shape_cast %300 : vector<1x16x16xf32> to vector<16x16xf32>
    %302 = vector.broadcast %299 : f32 to vector<16x16xf32>
    %303 = arith.mulf %302, %301 : vector<16x16xf32>
    %304 = arith.addf %298, %303 : vector<16x16xf32>
    %c29 = arith.constant 29 : index
    %305 = memref.load %arg3[%c29] : memref<144xf32, #tpu.memory_space<smem>>
    %306 = vector.extract_strided_slice %13 {offsets = [3, 0, 0], sizes = [1, 16, 16], strides = [1, 1, 1]} : vector<4x16x16xf32> to vector<1x16x16xf32>
    %307 = vector.shape_cast %306 : vector<1x16x16xf32> to vector<16x16xf32>
    %308 = vector.broadcast %305 : f32 to vector<16x16xf32>
    %309 = arith.mulf %308, %307 : vector<16x16xf32>
    %310 = arith.addf %304, %309 : vector<16x16xf32>
    %c33 = arith.constant 33 : index
    %311 = memref.load %arg3[%c33] : memref<144xf32, #tpu.memory_space<smem>>
    %312 = vector.extract_strided_slice %14 {offsets = [0, 0, 0], sizes = [1, 16, 16], strides = [1, 1, 1]} : vector<4x16x16xf32> to vector<1x16x16xf32>
    %313 = vector.shape_cast %312 : vector<1x16x16xf32> to vector<16x16xf32>
    %314 = vector.broadcast %311 : f32 to vector<16x16xf32>
    %315 = arith.mulf %314, %313 : vector<16x16xf32>
    %316 = arith.addf %310, %315 : vector<16x16xf32>
    %c37 = arith.constant 37 : index
    %317 = memref.load %arg3[%c37] : memref<144xf32, #tpu.memory_space<smem>>
    %318 = vector.extract_strided_slice %14 {offsets = [1, 0, 0], sizes = [1, 16, 16], strides = [1, 1, 1]} : vector<4x16x16xf32> to vector<1x16x16xf32>
    %319 = vector.shape_cast %318 : vector<1x16x16xf32> to vector<16x16xf32>
    %320 = vector.broadcast %317 : f32 to vector<16x16xf32>
    %321 = arith.mulf %320, %319 : vector<16x16xf32>
    %322 = arith.addf %316, %321 : vector<16x16xf32>
    %c41 = arith.constant 41 : index
    %323 = memref.load %arg3[%c41] : memref<144xf32, #tpu.memory_space<smem>>
    %324 = vector.extract_strided_slice %14 {offsets = [2, 0, 0], sizes = [1, 16, 16], strides = [1, 1, 1]} : vector<4x16x16xf32> to vector<1x16x16xf32>
    %325 = vector.shape_cast %324 : vector<1x16x16xf32> to vector<16x16xf32>
    %326 = vector.broadcast %323 : f32 to vector<16x16xf32>
    %327 = arith.mulf %326, %325 : vector<16x16xf32>
    %328 = arith.addf %322, %327 : vector<16x16xf32>
    %c45 = arith.constant 45 : index
    %329 = memref.load %arg3[%c45] : memref<144xf32, #tpu.memory_space<smem>>
    %330 = vector.extract_strided_slice %14 {offsets = [3, 0, 0], sizes = [1, 16, 16], strides = [1, 1, 1]} : vector<4x16x16xf32> to vector<1x16x16xf32>
    %331 = vector.shape_cast %330 : vector<1x16x16xf32> to vector<16x16xf32>
    %332 = vector.broadcast %329 : f32 to vector<16x16xf32>
    %333 = arith.mulf %332, %331 : vector<16x16xf32>
    %334 = arith.addf %328, %333 : vector<16x16xf32>
    %c49 = arith.constant 49 : index
    %335 = memref.load %arg3[%c49] : memref<144xf32, #tpu.memory_space<smem>>
    %336 = vector.extract_strided_slice %16 {offsets = [0, 0, 0], sizes = [1, 16, 16], strides = [1, 1, 1]} : vector<4x16x16xf32> to vector<1x16x16xf32>
    %337 = vector.shape_cast %336 : vector<1x16x16xf32> to vector<16x16xf32>
    %338 = vector.broadcast %335 : f32 to vector<16x16xf32>
    %339 = arith.mulf %338, %337 : vector<16x16xf32>
    %340 = arith.addf %334, %339 : vector<16x16xf32>
    %c53 = arith.constant 53 : index
    %341 = memref.load %arg3[%c53] : memref<144xf32, #tpu.memory_space<smem>>
    %342 = vector.extract_strided_slice %16 {offsets = [1, 0, 0], sizes = [1, 16, 16], strides = [1, 1, 1]} : vector<4x16x16xf32> to vector<1x16x16xf32>
    %343 = vector.shape_cast %342 : vector<1x16x16xf32> to vector<16x16xf32>
    %344 = vector.broadcast %341 : f32 to vector<16x16xf32>
    %345 = arith.mulf %344, %343 : vector<16x16xf32>
    %346 = arith.addf %340, %345 : vector<16x16xf32>
    %c57 = arith.constant 57 : index
    %347 = memref.load %arg3[%c57] : memref<144xf32, #tpu.memory_space<smem>>
    %348 = vector.extract_strided_slice %16 {offsets = [2, 0, 0], sizes = [1, 16, 16], strides = [1, 1, 1]} : vector<4x16x16xf32> to vector<1x16x16xf32>
    %349 = vector.shape_cast %348 : vector<1x16x16xf32> to vector<16x16xf32>
    %350 = vector.broadcast %347 : f32 to vector<16x16xf32>
    %351 = arith.mulf %350, %349 : vector<16x16xf32>
    %352 = arith.addf %346, %351 : vector<16x16xf32>
    %c61 = arith.constant 61 : index
    %353 = memref.load %arg3[%c61] : memref<144xf32, #tpu.memory_space<smem>>
    %354 = vector.extract_strided_slice %16 {offsets = [3, 0, 0], sizes = [1, 16, 16], strides = [1, 1, 1]} : vector<4x16x16xf32> to vector<1x16x16xf32>
    %355 = vector.shape_cast %354 : vector<1x16x16xf32> to vector<16x16xf32>
    %356 = vector.broadcast %353 : f32 to vector<16x16xf32>
    %357 = arith.mulf %356, %355 : vector<16x16xf32>
    %358 = arith.addf %352, %357 : vector<16x16xf32>
    %c65 = arith.constant 65 : index
    %359 = memref.load %arg3[%c65] : memref<144xf32, #tpu.memory_space<smem>>
    %360 = vector.extract_strided_slice %17 {offsets = [0, 0, 0], sizes = [1, 16, 16], strides = [1, 1, 1]} : vector<4x16x16xf32> to vector<1x16x16xf32>
    %361 = vector.shape_cast %360 : vector<1x16x16xf32> to vector<16x16xf32>
    %362 = vector.broadcast %359 : f32 to vector<16x16xf32>
    %363 = arith.mulf %362, %361 : vector<16x16xf32>
    %364 = arith.addf %358, %363 : vector<16x16xf32>
    %c69 = arith.constant 69 : index
    %365 = memref.load %arg3[%c69] : memref<144xf32, #tpu.memory_space<smem>>
    %366 = vector.extract_strided_slice %17 {offsets = [1, 0, 0], sizes = [1, 16, 16], strides = [1, 1, 1]} : vector<4x16x16xf32> to vector<1x16x16xf32>
    %367 = vector.shape_cast %366 : vector<1x16x16xf32> to vector<16x16xf32>
    %368 = vector.broadcast %365 : f32 to vector<16x16xf32>
    %369 = arith.mulf %368, %367 : vector<16x16xf32>
    %370 = arith.addf %364, %369 : vector<16x16xf32>
    %c73 = arith.constant 73 : index
    %371 = memref.load %arg3[%c73] : memref<144xf32, #tpu.memory_space<smem>>
    %372 = vector.extract_strided_slice %17 {offsets = [2, 0, 0], sizes = [1, 16, 16], strides = [1, 1, 1]} : vector<4x16x16xf32> to vector<1x16x16xf32>
    %373 = vector.shape_cast %372 : vector<1x16x16xf32> to vector<16x16xf32>
    %374 = vector.broadcast %371 : f32 to vector<16x16xf32>
    %375 = arith.mulf %374, %373 : vector<16x16xf32>
    %376 = arith.addf %370, %375 : vector<16x16xf32>
    %c77 = arith.constant 77 : index
    %377 = memref.load %arg3[%c77] : memref<144xf32, #tpu.memory_space<smem>>
    %378 = vector.extract_strided_slice %17 {offsets = [3, 0, 0], sizes = [1, 16, 16], strides = [1, 1, 1]} : vector<4x16x16xf32> to vector<1x16x16xf32>
    %379 = vector.shape_cast %378 : vector<1x16x16xf32> to vector<16x16xf32>
    %380 = vector.broadcast %377 : f32 to vector<16x16xf32>
    %381 = arith.mulf %380, %379 : vector<16x16xf32>
    %382 = arith.addf %376, %381 : vector<16x16xf32>
    %c81 = arith.constant 81 : index
    %383 = memref.load %arg3[%c81] : memref<144xf32, #tpu.memory_space<smem>>
    %384 = vector.extract_strided_slice %18 {offsets = [0, 0, 0], sizes = [1, 16, 16], strides = [1, 1, 1]} : vector<4x16x16xf32> to vector<1x16x16xf32>
    %385 = vector.shape_cast %384 : vector<1x16x16xf32> to vector<16x16xf32>
    %386 = vector.broadcast %383 : f32 to vector<16x16xf32>
    %387 = arith.mulf %386, %385 : vector<16x16xf32>
    %388 = arith.addf %382, %387 : vector<16x16xf32>
    %c85 = arith.constant 85 : index
    %389 = memref.load %arg3[%c85] : memref<144xf32, #tpu.memory_space<smem>>
    %390 = vector.extract_strided_slice %18 {offsets = [1, 0, 0], sizes = [1, 16, 16], strides = [1, 1, 1]} : vector<4x16x16xf32> to vector<1x16x16xf32>
    %391 = vector.shape_cast %390 : vector<1x16x16xf32> to vector<16x16xf32>
    %392 = vector.broadcast %389 : f32 to vector<16x16xf32>
    %393 = arith.mulf %392, %391 : vector<16x16xf32>
    %394 = arith.addf %388, %393 : vector<16x16xf32>
    %c89 = arith.constant 89 : index
    %395 = memref.load %arg3[%c89] : memref<144xf32, #tpu.memory_space<smem>>
    %396 = vector.extract_strided_slice %18 {offsets = [2, 0, 0], sizes = [1, 16, 16], strides = [1, 1, 1]} : vector<4x16x16xf32> to vector<1x16x16xf32>
    %397 = vector.shape_cast %396 : vector<1x16x16xf32> to vector<16x16xf32>
    %398 = vector.broadcast %395 : f32 to vector<16x16xf32>
    %399 = arith.mulf %398, %397 : vector<16x16xf32>
    %400 = arith.addf %394, %399 : vector<16x16xf32>
    %c93 = arith.constant 93 : index
    %401 = memref.load %arg3[%c93] : memref<144xf32, #tpu.memory_space<smem>>
    %402 = vector.extract_strided_slice %18 {offsets = [3, 0, 0], sizes = [1, 16, 16], strides = [1, 1, 1]} : vector<4x16x16xf32> to vector<1x16x16xf32>
    %403 = vector.shape_cast %402 : vector<1x16x16xf32> to vector<16x16xf32>
    %404 = vector.broadcast %401 : f32 to vector<16x16xf32>
    %405 = arith.mulf %404, %403 : vector<16x16xf32>
    %406 = arith.addf %400, %405 : vector<16x16xf32>
    %c97 = arith.constant 97 : index
    %407 = memref.load %arg3[%c97] : memref<144xf32, #tpu.memory_space<smem>>
    %408 = vector.extract_strided_slice %20 {offsets = [0, 0, 0], sizes = [1, 16, 16], strides = [1, 1, 1]} : vector<4x16x16xf32> to vector<1x16x16xf32>
    %409 = vector.shape_cast %408 : vector<1x16x16xf32> to vector<16x16xf32>
    %410 = vector.broadcast %407 : f32 to vector<16x16xf32>
    %411 = arith.mulf %410, %409 : vector<16x16xf32>
    %412 = arith.addf %406, %411 : vector<16x16xf32>
    %c101 = arith.constant 101 : index
    %413 = memref.load %arg3[%c101] : memref<144xf32, #tpu.memory_space<smem>>
    %414 = vector.extract_strided_slice %20 {offsets = [1, 0, 0], sizes = [1, 16, 16], strides = [1, 1, 1]} : vector<4x16x16xf32> to vector<1x16x16xf32>
    %415 = vector.shape_cast %414 : vector<1x16x16xf32> to vector<16x16xf32>
    %416 = vector.broadcast %413 : f32 to vector<16x16xf32>
    %417 = arith.mulf %416, %415 : vector<16x16xf32>
    %418 = arith.addf %412, %417 : vector<16x16xf32>
    %c105 = arith.constant 105 : index
    %419 = memref.load %arg3[%c105] : memref<144xf32, #tpu.memory_space<smem>>
    %420 = vector.extract_strided_slice %20 {offsets = [2, 0, 0], sizes = [1, 16, 16], strides = [1, 1, 1]} : vector<4x16x16xf32> to vector<1x16x16xf32>
    %421 = vector.shape_cast %420 : vector<1x16x16xf32> to vector<16x16xf32>
    %422 = vector.broadcast %419 : f32 to vector<16x16xf32>
    %423 = arith.mulf %422, %421 : vector<16x16xf32>
    %424 = arith.addf %418, %423 : vector<16x16xf32>
    %c109 = arith.constant 109 : index
    %425 = memref.load %arg3[%c109] : memref<144xf32, #tpu.memory_space<smem>>
    %426 = vector.extract_strided_slice %20 {offsets = [3, 0, 0], sizes = [1, 16, 16], strides = [1, 1, 1]} : vector<4x16x16xf32> to vector<1x16x16xf32>
    %427 = vector.shape_cast %426 : vector<1x16x16xf32> to vector<16x16xf32>
    %428 = vector.broadcast %425 : f32 to vector<16x16xf32>
    %429 = arith.mulf %428, %427 : vector<16x16xf32>
    %430 = arith.addf %424, %429 : vector<16x16xf32>
    %c113 = arith.constant 113 : index
    %431 = memref.load %arg3[%c113] : memref<144xf32, #tpu.memory_space<smem>>
    %432 = vector.extract_strided_slice %21 {offsets = [0, 0, 0], sizes = [1, 16, 16], strides = [1, 1, 1]} : vector<4x16x16xf32> to vector<1x16x16xf32>
    %433 = vector.shape_cast %432 : vector<1x16x16xf32> to vector<16x16xf32>
    %434 = vector.broadcast %431 : f32 to vector<16x16xf32>
    %435 = arith.mulf %434, %433 : vector<16x16xf32>
    %436 = arith.addf %430, %435 : vector<16x16xf32>
    %c117 = arith.constant 117 : index
    %437 = memref.load %arg3[%c117] : memref<144xf32, #tpu.memory_space<smem>>
    %438 = vector.extract_strided_slice %21 {offsets = [1, 0, 0], sizes = [1, 16, 16], strides = [1, 1, 1]} : vector<4x16x16xf32> to vector<1x16x16xf32>
    %439 = vector.shape_cast %438 : vector<1x16x16xf32> to vector<16x16xf32>
    %440 = vector.broadcast %437 : f32 to vector<16x16xf32>
    %441 = arith.mulf %440, %439 : vector<16x16xf32>
    %442 = arith.addf %436, %441 : vector<16x16xf32>
    %c121 = arith.constant 121 : index
    %443 = memref.load %arg3[%c121] : memref<144xf32, #tpu.memory_space<smem>>
    %444 = vector.extract_strided_slice %21 {offsets = [2, 0, 0], sizes = [1, 16, 16], strides = [1, 1, 1]} : vector<4x16x16xf32> to vector<1x16x16xf32>
    %445 = vector.shape_cast %444 : vector<1x16x16xf32> to vector<16x16xf32>
    %446 = vector.broadcast %443 : f32 to vector<16x16xf32>
    %447 = arith.mulf %446, %445 : vector<16x16xf32>
    %448 = arith.addf %442, %447 : vector<16x16xf32>
    %c125 = arith.constant 125 : index
    %449 = memref.load %arg3[%c125] : memref<144xf32, #tpu.memory_space<smem>>
    %450 = vector.extract_strided_slice %21 {offsets = [3, 0, 0], sizes = [1, 16, 16], strides = [1, 1, 1]} : vector<4x16x16xf32> to vector<1x16x16xf32>
    %451 = vector.shape_cast %450 : vector<1x16x16xf32> to vector<16x16xf32>
    %452 = vector.broadcast %449 : f32 to vector<16x16xf32>
    %453 = arith.mulf %452, %451 : vector<16x16xf32>
    %454 = arith.addf %448, %453 : vector<16x16xf32>
    %c129 = arith.constant 129 : index
    %455 = memref.load %arg3[%c129] : memref<144xf32, #tpu.memory_space<smem>>
    %456 = vector.extract_strided_slice %22 {offsets = [0, 0, 0], sizes = [1, 16, 16], strides = [1, 1, 1]} : vector<4x16x16xf32> to vector<1x16x16xf32>
    %457 = vector.shape_cast %456 : vector<1x16x16xf32> to vector<16x16xf32>
    %458 = vector.broadcast %455 : f32 to vector<16x16xf32>
    %459 = arith.mulf %458, %457 : vector<16x16xf32>
    %460 = arith.addf %454, %459 : vector<16x16xf32>
    %c133 = arith.constant 133 : index
    %461 = memref.load %arg3[%c133] : memref<144xf32, #tpu.memory_space<smem>>
    %462 = vector.extract_strided_slice %22 {offsets = [1, 0, 0], sizes = [1, 16, 16], strides = [1, 1, 1]} : vector<4x16x16xf32> to vector<1x16x16xf32>
    %463 = vector.shape_cast %462 : vector<1x16x16xf32> to vector<16x16xf32>
    %464 = vector.broadcast %461 : f32 to vector<16x16xf32>
    %465 = arith.mulf %464, %463 : vector<16x16xf32>
    %466 = arith.addf %460, %465 : vector<16x16xf32>
    %c137 = arith.constant 137 : index
    %467 = memref.load %arg3[%c137] : memref<144xf32, #tpu.memory_space<smem>>
    %468 = vector.extract_strided_slice %22 {offsets = [2, 0, 0], sizes = [1, 16, 16], strides = [1, 1, 1]} : vector<4x16x16xf32> to vector<1x16x16xf32>
    %469 = vector.shape_cast %468 : vector<1x16x16xf32> to vector<16x16xf32>
    %470 = vector.broadcast %467 : f32 to vector<16x16xf32>
    %471 = arith.mulf %470, %469 : vector<16x16xf32>
    %472 = arith.addf %466, %471 : vector<16x16xf32>
    %c141 = arith.constant 141 : index
    %473 = memref.load %arg3[%c141] : memref<144xf32, #tpu.memory_space<smem>>
    %474 = vector.extract_strided_slice %22 {offsets = [3, 0, 0], sizes = [1, 16, 16], strides = [1, 1, 1]} : vector<4x16x16xf32> to vector<1x16x16xf32>
    %475 = vector.shape_cast %474 : vector<1x16x16xf32> to vector<16x16xf32>
    %476 = vector.broadcast %473 : f32 to vector<16x16xf32>
    %477 = arith.mulf %476, %475 : vector<16x16xf32>
    %478 = arith.addf %472, %477 : vector<16x16xf32>
    %479 = math.tanh %478 : vector<16x16xf32>
    %c0_24 = arith.constant 0 : index
    %c0_25 = arith.constant 0 : index
    %c1_26 = arith.constant 1 : index
    %c0_27 = arith.constant 0 : index
    %c0_28 = arith.constant 0 : index
    %480 = vector.load %arg9[%c0_24, %c0_25, %c1_26, %c0_27, %c0_28] : memref<1x1x4x16x16xf32, #tpu.memory_space<vmem>>, vector<1x1x1x16x16xf32>
    %481 = vector.shape_cast %480 : vector<1x1x1x16x16xf32> to vector<16x16xf32>
    %482 = vector.shape_cast %479 : vector<16x16xf32> to vector<1x1x1x16x16xf32>
    tpu.vector_store %arg9[%c0_24, %c0_25, %c1_26, %c0_27, %c0_28], %482 {strides = array<i32>} : memref<1x1x4x16x16xf32, #tpu.memory_space<vmem>>, vector<1x1x1x16x16xf32>,
    %483 = vector.extract_strided_slice %10 {offsets = [1, 0, 0], sizes = [1, 16, 16], strides = [1, 1, 1]} : vector<4x16x16xf32> to vector<1x16x16xf32>
    %484 = vector.shape_cast %483 : vector<1x16x16xf32> to vector<16x16xf32>
    %485 = arith.subf %479, %484 : vector<16x16xf32>
    %486 = arith.mulf %485, %485 : vector<16x16xf32>
    %487 = arith.addf %255, %486 : vector<16x16xf32>
    %c2 = arith.constant 2 : index
    %488 = memref.load %arg4[%c2] : memref<4xf32, #tpu.memory_space<smem>>
    %c2_29 = arith.constant 2 : index
    %489 = memref.load %arg5[%c2_29] : memref<4xf32, #tpu.memory_space<smem>>
    %490 = arith.mulf %489, %4 : f32
    %491 = arith.addf %488, %490 : f32
    %c2_30 = arith.constant 2 : index
    %492 = memref.load %arg6[%c2_30] : memref<4xf32, #tpu.memory_space<smem>>
    %493 = arith.addf %491, %492 : f32
    %494 = vector.broadcast %493 : f32 to vector<16x16xf32>
    %c2_31 = arith.constant 2 : index
    %495 = memref.load %arg3[%c2_31] : memref<144xf32, #tpu.memory_space<smem>>
    %496 = vector.extract_strided_slice %12 {offsets = [0, 0, 0], sizes = [1, 16, 16], strides = [1, 1, 1]} : vector<4x16x16xf32> to vector<1x16x16xf32>
    %497 = vector.shape_cast %496 : vector<1x16x16xf32> to vector<16x16xf32>
    %498 = vector.broadcast %495 : f32 to vector<16x16xf32>
    %499 = arith.mulf %498, %497 : vector<16x16xf32>
    %500 = arith.addf %494, %499 : vector<16x16xf32>
    %c6 = arith.constant 6 : index
    %501 = memref.load %arg3[%c6] : memref<144xf32, #tpu.memory_space<smem>>
    %502 = vector.extract_strided_slice %12 {offsets = [1, 0, 0], sizes = [1, 16, 16], strides = [1, 1, 1]} : vector<4x16x16xf32> to vector<1x16x16xf32>
    %503 = vector.shape_cast %502 : vector<1x16x16xf32> to vector<16x16xf32>
    %504 = vector.broadcast %501 : f32 to vector<16x16xf32>
    %505 = arith.mulf %504, %503 : vector<16x16xf32>
    %506 = arith.addf %500, %505 : vector<16x16xf32>
    %c10 = arith.constant 10 : index
    %507 = memref.load %arg3[%c10] : memref<144xf32, #tpu.memory_space<smem>>
    %508 = vector.extract_strided_slice %12 {offsets = [2, 0, 0], sizes = [1, 16, 16], strides = [1, 1, 1]} : vector<4x16x16xf32> to vector<1x16x16xf32>
    %509 = vector.shape_cast %508 : vector<1x16x16xf32> to vector<16x16xf32>
    %510 = vector.broadcast %507 : f32 to vector<16x16xf32>
    %511 = arith.mulf %510, %509 : vector<16x16xf32>
    %512 = arith.addf %506, %511 : vector<16x16xf32>
    %c14 = arith.constant 14 : index
    %513 = memref.load %arg3[%c14] : memref<144xf32, #tpu.memory_space<smem>>
    %514 = vector.extract_strided_slice %12 {offsets = [3, 0, 0], sizes = [1, 16, 16], strides = [1, 1, 1]} : vector<4x16x16xf32> to vector<1x16x16xf32>
    %515 = vector.shape_cast %514 : vector<1x16x16xf32> to vector<16x16xf32>
    %516 = vector.broadcast %513 : f32 to vector<16x16xf32>
    %517 = arith.mulf %516, %515 : vector<16x16xf32>
    %518 = arith.addf %512, %517 : vector<16x16xf32>
    %c18 = arith.constant 18 : index
    %519 = memref.load %arg3[%c18] : memref<144xf32, #tpu.memory_space<smem>>
    %520 = vector.extract_strided_slice %13 {offsets = [0, 0, 0], sizes = [1, 16, 16], strides = [1, 1, 1]} : vector<4x16x16xf32> to vector<1x16x16xf32>
    %521 = vector.shape_cast %520 : vector<1x16x16xf32> to vector<16x16xf32>
    %522 = vector.broadcast %519 : f32 to vector<16x16xf32>
    %523 = arith.mulf %522, %521 : vector<16x16xf32>
    %524 = arith.addf %518, %523 : vector<16x16xf32>
    %c22 = arith.constant 22 : index
    %525 = memref.load %arg3[%c22] : memref<144xf32, #tpu.memory_space<smem>>
    %526 = vector.extract_strided_slice %13 {offsets = [1, 0, 0], sizes = [1, 16, 16], strides = [1, 1, 1]} : vector<4x16x16xf32> to vector<1x16x16xf32>
    %527 = vector.shape_cast %526 : vector<1x16x16xf32> to vector<16x16xf32>
    %528 = vector.broadcast %525 : f32 to vector<16x16xf32>
    %529 = arith.mulf %528, %527 : vector<16x16xf32>
    %530 = arith.addf %524, %529 : vector<16x16xf32>
    %c26 = arith.constant 26 : index
    %531 = memref.load %arg3[%c26] : memref<144xf32, #tpu.memory_space<smem>>
    %532 = vector.extract_strided_slice %13 {offsets = [2, 0, 0], sizes = [1, 16, 16], strides = [1, 1, 1]} : vector<4x16x16xf32> to vector<1x16x16xf32>
    %533 = vector.shape_cast %532 : vector<1x16x16xf32> to vector<16x16xf32>
    %534 = vector.broadcast %531 : f32 to vector<16x16xf32>
    %535 = arith.mulf %534, %533 : vector<16x16xf32>
    %536 = arith.addf %530, %535 : vector<16x16xf32>
    %c30 = arith.constant 30 : index
    %537 = memref.load %arg3[%c30] : memref<144xf32, #tpu.memory_space<smem>>
    %538 = vector.extract_strided_slice %13 {offsets = [3, 0, 0], sizes = [1, 16, 16], strides = [1, 1, 1]} : vector<4x16x16xf32> to vector<1x16x16xf32>
    %539 = vector.shape_cast %538 : vector<1x16x16xf32> to vector<16x16xf32>
    %540 = vector.broadcast %537 : f32 to vector<16x16xf32>
    %541 = arith.mulf %540, %539 : vector<16x16xf32>
    %542 = arith.addf %536, %541 : vector<16x16xf32>
    %c34 = arith.constant 34 : index
    %543 = memref.load %arg3[%c34] : memref<144xf32, #tpu.memory_space<smem>>
    %544 = vector.extract_strided_slice %14 {offsets = [0, 0, 0], sizes = [1, 16, 16], strides = [1, 1, 1]} : vector<4x16x16xf32> to vector<1x16x16xf32>
    %545 = vector.shape_cast %544 : vector<1x16x16xf32> to vector<16x16xf32>
    %546 = vector.broadcast %543 : f32 to vector<16x16xf32>
    %547 = arith.mulf %546, %545 : vector<16x16xf32>
    %548 = arith.addf %542, %547 : vector<16x16xf32>
    %c38 = arith.constant 38 : index
    %549 = memref.load %arg3[%c38] : memref<144xf32, #tpu.memory_space<smem>>
    %550 = vector.extract_strided_slice %14 {offsets = [1, 0, 0], sizes = [1, 16, 16], strides = [1, 1, 1]} : vector<4x16x16xf32> to vector<1x16x16xf32>
    %551 = vector.shape_cast %550 : vector<1x16x16xf32> to vector<16x16xf32>
    %552 = vector.broadcast %549 : f32 to vector<16x16xf32>
    %553 = arith.mulf %552, %551 : vector<16x16xf32>
    %554 = arith.addf %548, %553 : vector<16x16xf32>
    %c42 = arith.constant 42 : index
    %555 = memref.load %arg3[%c42] : memref<144xf32, #tpu.memory_space<smem>>
    %556 = vector.extract_strided_slice %14 {offsets = [2, 0, 0], sizes = [1, 16, 16], strides = [1, 1, 1]} : vector<4x16x16xf32> to vector<1x16x16xf32>
    %557 = vector.shape_cast %556 : vector<1x16x16xf32> to vector<16x16xf32>
    %558 = vector.broadcast %555 : f32 to vector<16x16xf32>
    %559 = arith.mulf %558, %557 : vector<16x16xf32>
    %560 = arith.addf %554, %559 : vector<16x16xf32>
    %c46 = arith.constant 46 : index
    %561 = memref.load %arg3[%c46] : memref<144xf32, #tpu.memory_space<smem>>
    %562 = vector.extract_strided_slice %14 {offsets = [3, 0, 0], sizes = [1, 16, 16], strides = [1, 1, 1]} : vector<4x16x16xf32> to vector<1x16x16xf32>
    %563 = vector.shape_cast %562 : vector<1x16x16xf32> to vector<16x16xf32>
    %564 = vector.broadcast %561 : f32 to vector<16x16xf32>
    %565 = arith.mulf %564, %563 : vector<16x16xf32>
    %566 = arith.addf %560, %565 : vector<16x16xf32>
    %c50 = arith.constant 50 : index
    %567 = memref.load %arg3[%c50] : memref<144xf32, #tpu.memory_space<smem>>
    %568 = vector.extract_strided_slice %16 {offsets = [0, 0, 0], sizes = [1, 16, 16], strides = [1, 1, 1]} : vector<4x16x16xf32> to vector<1x16x16xf32>
    %569 = vector.shape_cast %568 : vector<1x16x16xf32> to vector<16x16xf32>
    %570 = vector.broadcast %567 : f32 to vector<16x16xf32>
    %571 = arith.mulf %570, %569 : vector<16x16xf32>
    %572 = arith.addf %566, %571 : vector<16x16xf32>
    %c54 = arith.constant 54 : index
    %573 = memref.load %arg3[%c54] : memref<144xf32, #tpu.memory_space<smem>>
    %574 = vector.extract_strided_slice %16 {offsets = [1, 0, 0], sizes = [1, 16, 16], strides = [1, 1, 1]} : vector<4x16x16xf32> to vector<1x16x16xf32>
    %575 = vector.shape_cast %574 : vector<1x16x16xf32> to vector<16x16xf32>
    %576 = vector.broadcast %573 : f32 to vector<16x16xf32>
    %577 = arith.mulf %576, %575 : vector<16x16xf32>
    %578 = arith.addf %572, %577 : vector<16x16xf32>
    %c58 = arith.constant 58 : index
    %579 = memref.load %arg3[%c58] : memref<144xf32, #tpu.memory_space<smem>>
    %580 = vector.extract_strided_slice %16 {offsets = [2, 0, 0], sizes = [1, 16, 16], strides = [1, 1, 1]} : vector<4x16x16xf32> to vector<1x16x16xf32>
    %581 = vector.shape_cast %580 : vector<1x16x16xf32> to vector<16x16xf32>
    %582 = vector.broadcast %579 : f32 to vector<16x16xf32>
    %583 = arith.mulf %582, %581 : vector<16x16xf32>
    %584 = arith.addf %578, %583 : vector<16x16xf32>
    %c62 = arith.constant 62 : index
    %585 = memref.load %arg3[%c62] : memref<144xf32, #tpu.memory_space<smem>>
    %586 = vector.extract_strided_slice %16 {offsets = [3, 0, 0], sizes = [1, 16, 16], strides = [1, 1, 1]} : vector<4x16x16xf32> to vector<1x16x16xf32>
    %587 = vector.shape_cast %586 : vector<1x16x16xf32> to vector<16x16xf32>
    %588 = vector.broadcast %585 : f32 to vector<16x16xf32>
    %589 = arith.mulf %588, %587 : vector<16x16xf32>
    %590 = arith.addf %584, %589 : vector<16x16xf32>
    %c66 = arith.constant 66 : index
    %591 = memref.load %arg3[%c66] : memref<144xf32, #tpu.memory_space<smem>>
    %592 = vector.extract_strided_slice %17 {offsets = [0, 0, 0], sizes = [1, 16, 16], strides = [1, 1, 1]} : vector<4x16x16xf32> to vector<1x16x16xf32>
    %593 = vector.shape_cast %592 : vector<1x16x16xf32> to vector<16x16xf32>
    %594 = vector.broadcast %591 : f32 to vector<16x16xf32>
    %595 = arith.mulf %594, %593 : vector<16x16xf32>
    %596 = arith.addf %590, %595 : vector<16x16xf32>
    %c70 = arith.constant 70 : index
    %597 = memref.load %arg3[%c70] : memref<144xf32, #tpu.memory_space<smem>>
    %598 = vector.extract_strided_slice %17 {offsets = [1, 0, 0], sizes = [1, 16, 16], strides = [1, 1, 1]} : vector<4x16x16xf32> to vector<1x16x16xf32>
    %599 = vector.shape_cast %598 : vector<1x16x16xf32> to vector<16x16xf32>
    %600 = vector.broadcast %597 : f32 to vector<16x16xf32>
    %601 = arith.mulf %600, %599 : vector<16x16xf32>
    %602 = arith.addf %596, %601 : vector<16x16xf32>
    %c74 = arith.constant 74 : index
    %603 = memref.load %arg3[%c74] : memref<144xf32, #tpu.memory_space<smem>>
    %604 = vector.extract_strided_slice %17 {offsets = [2, 0, 0], sizes = [1, 16, 16], strides = [1, 1, 1]} : vector<4x16x16xf32> to vector<1x16x16xf32>
    %605 = vector.shape_cast %604 : vector<1x16x16xf32> to vector<16x16xf32>
    %606 = vector.broadcast %603 : f32 to vector<16x16xf32>
    %607 = arith.mulf %606, %605 : vector<16x16xf32>
    %608 = arith.addf %602, %607 : vector<16x16xf32>
    %c78 = arith.constant 78 : index
    %609 = memref.load %arg3[%c78] : memref<144xf32, #tpu.memory_space<smem>>
    %610 = vector.extract_strided_slice %17 {offsets = [3, 0, 0], sizes = [1, 16, 16], strides = [1, 1, 1]} : vector<4x16x16xf32> to vector<1x16x16xf32>
    %611 = vector.shape_cast %610 : vector<1x16x16xf32> to vector<16x16xf32>
    %612 = vector.broadcast %609 : f32 to vector<16x16xf32>
    %613 = arith.mulf %612, %611 : vector<16x16xf32>
    %614 = arith.addf %608, %613 : vector<16x16xf32>
    %c82 = arith.constant 82 : index
    %615 = memref.load %arg3[%c82] : memref<144xf32, #tpu.memory_space<smem>>
    %616 = vector.extract_strided_slice %18 {offsets = [0, 0, 0], sizes = [1, 16, 16], strides = [1, 1, 1]} : vector<4x16x16xf32> to vector<1x16x16xf32>
    %617 = vector.shape_cast %616 : vector<1x16x16xf32> to vector<16x16xf32>
    %618 = vector.broadcast %615 : f32 to vector<16x16xf32>
    %619 = arith.mulf %618, %617 : vector<16x16xf32>
    %620 = arith.addf %614, %619 : vector<16x16xf32>
    %c86 = arith.constant 86 : index
    %621 = memref.load %arg3[%c86] : memref<144xf32, #tpu.memory_space<smem>>
    %622 = vector.extract_strided_slice %18 {offsets = [1, 0, 0], sizes = [1, 16, 16], strides = [1, 1, 1]} : vector<4x16x16xf32> to vector<1x16x16xf32>
    %623 = vector.shape_cast %622 : vector<1x16x16xf32> to vector<16x16xf32>
    %624 = vector.broadcast %621 : f32 to vector<16x16xf32>
    %625 = arith.mulf %624, %623 : vector<16x16xf32>
    %626 = arith.addf %620, %625 : vector<16x16xf32>
    %c90 = arith.constant 90 : index
    %627 = memref.load %arg3[%c90] : memref<144xf32, #tpu.memory_space<smem>>
    %628 = vector.extract_strided_slice %18 {offsets = [2, 0, 0], sizes = [1, 16, 16], strides = [1, 1, 1]} : vector<4x16x16xf32> to vector<1x16x16xf32>
    %629 = vector.shape_cast %628 : vector<1x16x16xf32> to vector<16x16xf32>
    %630 = vector.broadcast %627 : f32 to vector<16x16xf32>
    %631 = arith.mulf %630, %629 : vector<16x16xf32>
    %632 = arith.addf %626, %631 : vector<16x16xf32>
    %c94 = arith.constant 94 : index
    %633 = memref.load %arg3[%c94] : memref<144xf32, #tpu.memory_space<smem>>
    %634 = vector.extract_strided_slice %18 {offsets = [3, 0, 0], sizes = [1, 16, 16], strides = [1, 1, 1]} : vector<4x16x16xf32> to vector<1x16x16xf32>
    %635 = vector.shape_cast %634 : vector<1x16x16xf32> to vector<16x16xf32>
    %636 = vector.broadcast %633 : f32 to vector<16x16xf32>
    %637 = arith.mulf %636, %635 : vector<16x16xf32>
    %638 = arith.addf %632, %637 : vector<16x16xf32>
    %c98 = arith.constant 98 : index
    %639 = memref.load %arg3[%c98] : memref<144xf32, #tpu.memory_space<smem>>
    %640 = vector.extract_strided_slice %20 {offsets = [0, 0, 0], sizes = [1, 16, 16], strides = [1, 1, 1]} : vector<4x16x16xf32> to vector<1x16x16xf32>
    %641 = vector.shape_cast %640 : vector<1x16x16xf32> to vector<16x16xf32>
    %642 = vector.broadcast %639 : f32 to vector<16x16xf32>
    %643 = arith.mulf %642, %641 : vector<16x16xf32>
    %644 = arith.addf %638, %643 : vector<16x16xf32>
    %c102 = arith.constant 102 : index
    %645 = memref.load %arg3[%c102] : memref<144xf32, #tpu.memory_space<smem>>
    %646 = vector.extract_strided_slice %20 {offsets = [1, 0, 0], sizes = [1, 16, 16], strides = [1, 1, 1]} : vector<4x16x16xf32> to vector<1x16x16xf32>
    %647 = vector.shape_cast %646 : vector<1x16x16xf32> to vector<16x16xf32>
    %648 = vector.broadcast %645 : f32 to vector<16x16xf32>
    %649 = arith.mulf %648, %647 : vector<16x16xf32>
    %650 = arith.addf %644, %649 : vector<16x16xf32>
    %c106 = arith.constant 106 : index
    %651 = memref.load %arg3[%c106] : memref<144xf32, #tpu.memory_space<smem>>
    %652 = vector.extract_strided_slice %20 {offsets = [2, 0, 0], sizes = [1, 16, 16], strides = [1, 1, 1]} : vector<4x16x16xf32> to vector<1x16x16xf32>
    %653 = vector.shape_cast %652 : vector<1x16x16xf32> to vector<16x16xf32>
    %654 = vector.broadcast %651 : f32 to vector<16x16xf32>
    %655 = arith.mulf %654, %653 : vector<16x16xf32>
    %656 = arith.addf %650, %655 : vector<16x16xf32>
    %c110 = arith.constant 110 : index
    %657 = memref.load %arg3[%c110] : memref<144xf32, #tpu.memory_space<smem>>
    %658 = vector.extract_strided_slice %20 {offsets = [3, 0, 0], sizes = [1, 16, 16], strides = [1, 1, 1]} : vector<4x16x16xf32> to vector<1x16x16xf32>
    %659 = vector.shape_cast %658 : vector<1x16x16xf32> to vector<16x16xf32>
    %660 = vector.broadcast %657 : f32 to vector<16x16xf32>
    %661 = arith.mulf %660, %659 : vector<16x16xf32>
    %662 = arith.addf %656, %661 : vector<16x16xf32>
    %c114 = arith.constant 114 : index
    %663 = memref.load %arg3[%c114] : memref<144xf32, #tpu.memory_space<smem>>
    %664 = vector.extract_strided_slice %21 {offsets = [0, 0, 0], sizes = [1, 16, 16], strides = [1, 1, 1]} : vector<4x16x16xf32> to vector<1x16x16xf32>
    %665 = vector.shape_cast %664 : vector<1x16x16xf32> to vector<16x16xf32>
    %666 = vector.broadcast %663 : f32 to vector<16x16xf32>
    %667 = arith.mulf %666, %665 : vector<16x16xf32>
    %668 = arith.addf %662, %667 : vector<16x16xf32>
    %c118 = arith.constant 118 : index
    %669 = memref.load %arg3[%c118] : memref<144xf32, #tpu.memory_space<smem>>
    %670 = vector.extract_strided_slice %21 {offsets = [1, 0, 0], sizes = [1, 16, 16], strides = [1, 1, 1]} : vector<4x16x16xf32> to vector<1x16x16xf32>
    %671 = vector.shape_cast %670 : vector<1x16x16xf32> to vector<16x16xf32>
    %672 = vector.broadcast %669 : f32 to vector<16x16xf32>
    %673 = arith.mulf %672, %671 : vector<16x16xf32>
    %674 = arith.addf %668, %673 : vector<16x16xf32>
    %c122 = arith.constant 122 : index
    %675 = memref.load %arg3[%c122] : memref<144xf32, #tpu.memory_space<smem>>
    %676 = vector.extract_strided_slice %21 {offsets = [2, 0, 0], sizes = [1, 16, 16], strides = [1, 1, 1]} : vector<4x16x16xf32> to vector<1x16x16xf32>
    %677 = vector.shape_cast %676 : vector<1x16x16xf32> to vector<16x16xf32>
    %678 = vector.broadcast %675 : f32 to vector<16x16xf32>
    %679 = arith.mulf %678, %677 : vector<16x16xf32>
    %680 = arith.addf %674, %679 : vector<16x16xf32>
    %c126 = arith.constant 126 : index
    %681 = memref.load %arg3[%c126] : memref<144xf32, #tpu.memory_space<smem>>
    %682 = vector.extract_strided_slice %21 {offsets = [3, 0, 0], sizes = [1, 16, 16], strides = [1, 1, 1]} : vector<4x16x16xf32> to vector<1x16x16xf32>
    %683 = vector.shape_cast %682 : vector<1x16x16xf32> to vector<16x16xf32>
    %684 = vector.broadcast %681 : f32 to vector<16x16xf32>
    %685 = arith.mulf %684, %683 : vector<16x16xf32>
    %686 = arith.addf %680, %685 : vector<16x16xf32>
    %c130 = arith.constant 130 : index
    %687 = memref.load %arg3[%c130] : memref<144xf32, #tpu.memory_space<smem>>
    %688 = vector.extract_strided_slice %22 {offsets = [0, 0, 0], sizes = [1, 16, 16], strides = [1, 1, 1]} : vector<4x16x16xf32> to vector<1x16x16xf32>
    %689 = vector.shape_cast %688 : vector<1x16x16xf32> to vector<16x16xf32>
    %690 = vector.broadcast %687 : f32 to vector<16x16xf32>
    %691 = arith.mulf %690, %689 : vector<16x16xf32>
    %692 = arith.addf %686, %691 : vector<16x16xf32>
    %c134 = arith.constant 134 : index
    %693 = memref.load %arg3[%c134] : memref<144xf32, #tpu.memory_space<smem>>
    %694 = vector.extract_strided_slice %22 {offsets = [1, 0, 0], sizes = [1, 16, 16], strides = [1, 1, 1]} : vector<4x16x16xf32> to vector<1x16x16xf32>
    %695 = vector.shape_cast %694 : vector<1x16x16xf32> to vector<16x16xf32>
    %696 = vector.broadcast %693 : f32 to vector<16x16xf32>
    %697 = arith.mulf %696, %695 : vector<16x16xf32>
    %698 = arith.addf %692, %697 : vector<16x16xf32>
    %c138 = arith.constant 138 : index
    %699 = memref.load %arg3[%c138] : memref<144xf32, #tpu.memory_space<smem>>
    %700 = vector.extract_strided_slice %22 {offsets = [2, 0, 0], sizes = [1, 16, 16], strides = [1, 1, 1]} : vector<4x16x16xf32> to vector<1x16x16xf32>
    %701 = vector.shape_cast %700 : vector<1x16x16xf32> to vector<16x16xf32>
    %702 = vector.broadcast %699 : f32 to vector<16x16xf32>
    %703 = arith.mulf %702, %701 : vector<16x16xf32>
    %704 = arith.addf %698, %703 : vector<16x16xf32>
    %c142 = arith.constant 142 : index
    %705 = memref.load %arg3[%c142] : memref<144xf32, #tpu.memory_space<smem>>
    %706 = vector.extract_strided_slice %22 {offsets = [3, 0, 0], sizes = [1, 16, 16], strides = [1, 1, 1]} : vector<4x16x16xf32> to vector<1x16x16xf32>
    %707 = vector.shape_cast %706 : vector<1x16x16xf32> to vector<16x16xf32>
    %708 = vector.broadcast %705 : f32 to vector<16x16xf32>
    %709 = arith.mulf %708, %707 : vector<16x16xf32>
    %710 = arith.addf %704, %709 : vector<16x16xf32>
    %711 = math.tanh %710 : vector<16x16xf32>
    %c0_32 = arith.constant 0 : index
    %c0_33 = arith.constant 0 : index
    %c2_34 = arith.constant 2 : index
    %c0_35 = arith.constant 0 : index
    %c0_36 = arith.constant 0 : index
    %712 = vector.load %arg9[%c0_32, %c0_33, %c2_34, %c0_35, %c0_36] : memref<1x1x4x16x16xf32, #tpu.memory_space<vmem>>, vector<1x1x1x16x16xf32>
    %713 = vector.shape_cast %712 : vector<1x1x1x16x16xf32> to vector<16x16xf32>
    %714 = vector.shape_cast %711 : vector<16x16xf32> to vector<1x1x1x16x16xf32>
    tpu.vector_store %arg9[%c0_32, %c0_33, %c2_34, %c0_35, %c0_36], %714 {strides = array<i32>} : memref<1x1x4x16x16xf32, #tpu.memory_space<vmem>>, vector<1x1x1x16x16xf32>,
    %715 = vector.extract_strided_slice %10 {offsets = [2, 0, 0], sizes = [1, 16, 16], strides = [1, 1, 1]} : vector<4x16x16xf32> to vector<1x16x16xf32>
    %716 = vector.shape_cast %715 : vector<1x16x16xf32> to vector<16x16xf32>
    %717 = arith.subf %711, %716 : vector<16x16xf32>
    %718 = arith.mulf %717, %717 : vector<16x16xf32>
    %719 = arith.addf %487, %718 : vector<16x16xf32>
    %c3 = arith.constant 3 : index
    %720 = memref.load %arg4[%c3] : memref<4xf32, #tpu.memory_space<smem>>
    %c3_37 = arith.constant 3 : index
    %721 = memref.load %arg5[%c3_37] : memref<4xf32, #tpu.memory_space<smem>>
    %722 = arith.mulf %721, %4 : f32
    %723 = arith.addf %720, %722 : f32
    %c3_38 = arith.constant 3 : index
    %724 = memref.load %arg6[%c3_38] : memref<4xf32, #tpu.memory_space<smem>>
    %725 = arith.addf %723, %724 : f32
    %726 = vector.broadcast %725 : f32 to vector<16x16xf32>
    %c3_39 = arith.constant 3 : index
    %727 = memref.load %arg3[%c3_39] : memref<144xf32, #tpu.memory_space<smem>>
    %728 = vector.extract_strided_slice %12 {offsets = [0, 0, 0], sizes = [1, 16, 16], strides = [1, 1, 1]} : vector<4x16x16xf32> to vector<1x16x16xf32>
    %729 = vector.shape_cast %728 : vector<1x16x16xf32> to vector<16x16xf32>
    %730 = vector.broadcast %727 : f32 to vector<16x16xf32>
    %731 = arith.mulf %730, %729 : vector<16x16xf32>
    %732 = arith.addf %726, %731 : vector<16x16xf32>
    %c7 = arith.constant 7 : index
    %733 = memref.load %arg3[%c7] : memref<144xf32, #tpu.memory_space<smem>>
    %734 = vector.extract_strided_slice %12 {offsets = [1, 0, 0], sizes = [1, 16, 16], strides = [1, 1, 1]} : vector<4x16x16xf32> to vector<1x16x16xf32>
    %735 = vector.shape_cast %734 : vector<1x16x16xf32> to vector<16x16xf32>
    %736 = vector.broadcast %733 : f32 to vector<16x16xf32>
    %737 = arith.mulf %736, %735 : vector<16x16xf32>
    %738 = arith.addf %732, %737 : vector<16x16xf32>
    %c11 = arith.constant 11 : index
    %739 = memref.load %arg3[%c11] : memref<144xf32, #tpu.memory_space<smem>>
    %740 = vector.extract_strided_slice %12 {offsets = [2, 0, 0], sizes = [1, 16, 16], strides = [1, 1, 1]} : vector<4x16x16xf32> to vector<1x16x16xf32>
    %741 = vector.shape_cast %740 : vector<1x16x16xf32> to vector<16x16xf32>
    %742 = vector.broadcast %739 : f32 to vector<16x16xf32>
    %743 = arith.mulf %742, %741 : vector<16x16xf32>
    %744 = arith.addf %738, %743 : vector<16x16xf32>
    %c15 = arith.constant 15 : index
    %745 = memref.load %arg3[%c15] : memref<144xf32, #tpu.memory_space<smem>>
    %746 = vector.extract_strided_slice %12 {offsets = [3, 0, 0], sizes = [1, 16, 16], strides = [1, 1, 1]} : vector<4x16x16xf32> to vector<1x16x16xf32>
    %747 = vector.shape_cast %746 : vector<1x16x16xf32> to vector<16x16xf32>
    %748 = vector.broadcast %745 : f32 to vector<16x16xf32>
    %749 = arith.mulf %748, %747 : vector<16x16xf32>
    %750 = arith.addf %744, %749 : vector<16x16xf32>
    %c19 = arith.constant 19 : index
    %751 = memref.load %arg3[%c19] : memref<144xf32, #tpu.memory_space<smem>>
    %752 = vector.extract_strided_slice %13 {offsets = [0, 0, 0], sizes = [1, 16, 16], strides = [1, 1, 1]} : vector<4x16x16xf32> to vector<1x16x16xf32>
    %753 = vector.shape_cast %752 : vector<1x16x16xf32> to vector<16x16xf32>
    %754 = vector.broadcast %751 : f32 to vector<16x16xf32>
    %755 = arith.mulf %754, %753 : vector<16x16xf32>
    %756 = arith.addf %750, %755 : vector<16x16xf32>
    %c23 = arith.constant 23 : index
    %757 = memref.load %arg3[%c23] : memref<144xf32, #tpu.memory_space<smem>>
    %758 = vector.extract_strided_slice %13 {offsets = [1, 0, 0], sizes = [1, 16, 16], strides = [1, 1, 1]} : vector<4x16x16xf32> to vector<1x16x16xf32>
    %759 = vector.shape_cast %758 : vector<1x16x16xf32> to vector<16x16xf32>
    %760 = vector.broadcast %757 : f32 to vector<16x16xf32>
    %761 = arith.mulf %760, %759 : vector<16x16xf32>
    %762 = arith.addf %756, %761 : vector<16x16xf32>
    %c27 = arith.constant 27 : index
    %763 = memref.load %arg3[%c27] : memref<144xf32, #tpu.memory_space<smem>>
    %764 = vector.extract_strided_slice %13 {offsets = [2, 0, 0], sizes = [1, 16, 16], strides = [1, 1, 1]} : vector<4x16x16xf32> to vector<1x16x16xf32>
    %765 = vector.shape_cast %764 : vector<1x16x16xf32> to vector<16x16xf32>
    %766 = vector.broadcast %763 : f32 to vector<16x16xf32>
    %767 = arith.mulf %766, %765 : vector<16x16xf32>
    %768 = arith.addf %762, %767 : vector<16x16xf32>
    %c31 = arith.constant 31 : index
    %769 = memref.load %arg3[%c31] : memref<144xf32, #tpu.memory_space<smem>>
    %770 = vector.extract_strided_slice %13 {offsets = [3, 0, 0], sizes = [1, 16, 16], strides = [1, 1, 1]} : vector<4x16x16xf32> to vector<1x16x16xf32>
    %771 = vector.shape_cast %770 : vector<1x16x16xf32> to vector<16x16xf32>
    %772 = vector.broadcast %769 : f32 to vector<16x16xf32>
    %773 = arith.mulf %772, %771 : vector<16x16xf32>
    %774 = arith.addf %768, %773 : vector<16x16xf32>
    %c35 = arith.constant 35 : index
    %775 = memref.load %arg3[%c35] : memref<144xf32, #tpu.memory_space<smem>>
    %776 = vector.extract_strided_slice %14 {offsets = [0, 0, 0], sizes = [1, 16, 16], strides = [1, 1, 1]} : vector<4x16x16xf32> to vector<1x16x16xf32>
    %777 = vector.shape_cast %776 : vector<1x16x16xf32> to vector<16x16xf32>
    %778 = vector.broadcast %775 : f32 to vector<16x16xf32>
    %779 = arith.mulf %778, %777 : vector<16x16xf32>
    %780 = arith.addf %774, %779 : vector<16x16xf32>
    %c39 = arith.constant 39 : index
    %781 = memref.load %arg3[%c39] : memref<144xf32, #tpu.memory_space<smem>>
    %782 = vector.extract_strided_slice %14 {offsets = [1, 0, 0], sizes = [1, 16, 16], strides = [1, 1, 1]} : vector<4x16x16xf32> to vector<1x16x16xf32>
    %783 = vector.shape_cast %782 : vector<1x16x16xf32> to vector<16x16xf32>
    %784 = vector.broadcast %781 : f32 to vector<16x16xf32>
    %785 = arith.mulf %784, %783 : vector<16x16xf32>
    %786 = arith.addf %780, %785 : vector<16x16xf32>
    %c43 = arith.constant 43 : index
    %787 = memref.load %arg3[%c43] : memref<144xf32, #tpu.memory_space<smem>>
    %788 = vector.extract_strided_slice %14 {offsets = [2, 0, 0], sizes = [1, 16, 16], strides = [1, 1, 1]} : vector<4x16x16xf32> to vector<1x16x16xf32>
    %789 = vector.shape_cast %788 : vector<1x16x16xf32> to vector<16x16xf32>
    %790 = vector.broadcast %787 : f32 to vector<16x16xf32>
    %791 = arith.mulf %790, %789 : vector<16x16xf32>
    %792 = arith.addf %786, %791 : vector<16x16xf32>
    %c47 = arith.constant 47 : index
    %793 = memref.load %arg3[%c47] : memref<144xf32, #tpu.memory_space<smem>>
    %794 = vector.extract_strided_slice %14 {offsets = [3, 0, 0], sizes = [1, 16, 16], strides = [1, 1, 1]} : vector<4x16x16xf32> to vector<1x16x16xf32>
    %795 = vector.shape_cast %794 : vector<1x16x16xf32> to vector<16x16xf32>
    %796 = vector.broadcast %793 : f32 to vector<16x16xf32>
    %797 = arith.mulf %796, %795 : vector<16x16xf32>
    %798 = arith.addf %792, %797 : vector<16x16xf32>
    %c51 = arith.constant 51 : index
    %799 = memref.load %arg3[%c51] : memref<144xf32, #tpu.memory_space<smem>>
    %800 = vector.extract_strided_slice %16 {offsets = [0, 0, 0], sizes = [1, 16, 16], strides = [1, 1, 1]} : vector<4x16x16xf32> to vector<1x16x16xf32>
    %801 = vector.shape_cast %800 : vector<1x16x16xf32> to vector<16x16xf32>
    %802 = vector.broadcast %799 : f32 to vector<16x16xf32>
    %803 = arith.mulf %802, %801 : vector<16x16xf32>
    %804 = arith.addf %798, %803 : vector<16x16xf32>
    %c55 = arith.constant 55 : index
    %805 = memref.load %arg3[%c55] : memref<144xf32, #tpu.memory_space<smem>>
    %806 = vector.extract_strided_slice %16 {offsets = [1, 0, 0], sizes = [1, 16, 16], strides = [1, 1, 1]} : vector<4x16x16xf32> to vector<1x16x16xf32>
    %807 = vector.shape_cast %806 : vector<1x16x16xf32> to vector<16x16xf32>
    %808 = vector.broadcast %805 : f32 to vector<16x16xf32>
    %809 = arith.mulf %808, %807 : vector<16x16xf32>
    %810 = arith.addf %804, %809 : vector<16x16xf32>
    %c59 = arith.constant 59 : index
    %811 = memref.load %arg3[%c59] : memref<144xf32, #tpu.memory_space<smem>>
    %812 = vector.extract_strided_slice %16 {offsets = [2, 0, 0], sizes = [1, 16, 16], strides = [1, 1, 1]} : vector<4x16x16xf32> to vector<1x16x16xf32>
    %813 = vector.shape_cast %812 : vector<1x16x16xf32> to vector<16x16xf32>
    %814 = vector.broadcast %811 : f32 to vector<16x16xf32>
    %815 = arith.mulf %814, %813 : vector<16x16xf32>
    %816 = arith.addf %810, %815 : vector<16x16xf32>
    %c63 = arith.constant 63 : index
    %817 = memref.load %arg3[%c63] : memref<144xf32, #tpu.memory_space<smem>>
    %818 = vector.extract_strided_slice %16 {offsets = [3, 0, 0], sizes = [1, 16, 16], strides = [1, 1, 1]} : vector<4x16x16xf32> to vector<1x16x16xf32>
    %819 = vector.shape_cast %818 : vector<1x16x16xf32> to vector<16x16xf32>
    %820 = vector.broadcast %817 : f32 to vector<16x16xf32>
    %821 = arith.mulf %820, %819 : vector<16x16xf32>
    %822 = arith.addf %816, %821 : vector<16x16xf32>
    %c67 = arith.constant 67 : index
    %823 = memref.load %arg3[%c67] : memref<144xf32, #tpu.memory_space<smem>>
    %824 = vector.extract_strided_slice %17 {offsets = [0, 0, 0], sizes = [1, 16, 16], strides = [1, 1, 1]} : vector<4x16x16xf32> to vector<1x16x16xf32>
    %825 = vector.shape_cast %824 : vector<1x16x16xf32> to vector<16x16xf32>
    %826 = vector.broadcast %823 : f32 to vector<16x16xf32>
    %827 = arith.mulf %826, %825 : vector<16x16xf32>
    %828 = arith.addf %822, %827 : vector<16x16xf32>
    %c71 = arith.constant 71 : index
    %829 = memref.load %arg3[%c71] : memref<144xf32, #tpu.memory_space<smem>>
    %830 = vector.extract_strided_slice %17 {offsets = [1, 0, 0], sizes = [1, 16, 16], strides = [1, 1, 1]} : vector<4x16x16xf32> to vector<1x16x16xf32>
    %831 = vector.shape_cast %830 : vector<1x16x16xf32> to vector<16x16xf32>
    %832 = vector.broadcast %829 : f32 to vector<16x16xf32>
    %833 = arith.mulf %832, %831 : vector<16x16xf32>
    %834 = arith.addf %828, %833 : vector<16x16xf32>
    %c75 = arith.constant 75 : index
    %835 = memref.load %arg3[%c75] : memref<144xf32, #tpu.memory_space<smem>>
    %836 = vector.extract_strided_slice %17 {offsets = [2, 0, 0], sizes = [1, 16, 16], strides = [1, 1, 1]} : vector<4x16x16xf32> to vector<1x16x16xf32>
    %837 = vector.shape_cast %836 : vector<1x16x16xf32> to vector<16x16xf32>
    %838 = vector.broadcast %835 : f32 to vector<16x16xf32>
    %839 = arith.mulf %838, %837 : vector<16x16xf32>
    %840 = arith.addf %834, %839 : vector<16x16xf32>
    %c79 = arith.constant 79 : index
    %841 = memref.load %arg3[%c79] : memref<144xf32, #tpu.memory_space<smem>>
    %842 = vector.extract_strided_slice %17 {offsets = [3, 0, 0], sizes = [1, 16, 16], strides = [1, 1, 1]} : vector<4x16x16xf32> to vector<1x16x16xf32>
    %843 = vector.shape_cast %842 : vector<1x16x16xf32> to vector<16x16xf32>
    %844 = vector.broadcast %841 : f32 to vector<16x16xf32>
    %845 = arith.mulf %844, %843 : vector<16x16xf32>
    %846 = arith.addf %840, %845 : vector<16x16xf32>
    %c83 = arith.constant 83 : index
    %847 = memref.load %arg3[%c83] : memref<144xf32, #tpu.memory_space<smem>>
    %848 = vector.extract_strided_slice %18 {offsets = [0, 0, 0], sizes = [1, 16, 16], strides = [1, 1, 1]} : vector<4x16x16xf32> to vector<1x16x16xf32>
    %849 = vector.shape_cast %848 : vector<1x16x16xf32> to vector<16x16xf32>
    %850 = vector.broadcast %847 : f32 to vector<16x16xf32>
    %851 = arith.mulf %850, %849 : vector<16x16xf32>
    %852 = arith.addf %846, %851 : vector<16x16xf32>
    %c87 = arith.constant 87 : index
    %853 = memref.load %arg3[%c87] : memref<144xf32, #tpu.memory_space<smem>>
    %854 = vector.extract_strided_slice %18 {offsets = [1, 0, 0], sizes = [1, 16, 16], strides = [1, 1, 1]} : vector<4x16x16xf32> to vector<1x16x16xf32>
    %855 = vector.shape_cast %854 : vector<1x16x16xf32> to vector<16x16xf32>
    %856 = vector.broadcast %853 : f32 to vector<16x16xf32>
    %857 = arith.mulf %856, %855 : vector<16x16xf32>
    %858 = arith.addf %852, %857 : vector<16x16xf32>
    %c91 = arith.constant 91 : index
    %859 = memref.load %arg3[%c91] : memref<144xf32, #tpu.memory_space<smem>>
    %860 = vector.extract_strided_slice %18 {offsets = [2, 0, 0], sizes = [1, 16, 16], strides = [1, 1, 1]} : vector<4x16x16xf32> to vector<1x16x16xf32>
    %861 = vector.shape_cast %860 : vector<1x16x16xf32> to vector<16x16xf32>
    %862 = vector.broadcast %859 : f32 to vector<16x16xf32>
    %863 = arith.mulf %862, %861 : vector<16x16xf32>
    %864 = arith.addf %858, %863 : vector<16x16xf32>
    %c95 = arith.constant 95 : index
    %865 = memref.load %arg3[%c95] : memref<144xf32, #tpu.memory_space<smem>>
    %866 = vector.extract_strided_slice %18 {offsets = [3, 0, 0], sizes = [1, 16, 16], strides = [1, 1, 1]} : vector<4x16x16xf32> to vector<1x16x16xf32>
    %867 = vector.shape_cast %866 : vector<1x16x16xf32> to vector<16x16xf32>
    %868 = vector.broadcast %865 : f32 to vector<16x16xf32>
    %869 = arith.mulf %868, %867 : vector<16x16xf32>
    %870 = arith.addf %864, %869 : vector<16x16xf32>
    %c99 = arith.constant 99 : index
    %871 = memref.load %arg3[%c99] : memref<144xf32, #tpu.memory_space<smem>>
    %872 = vector.extract_strided_slice %20 {offsets = [0, 0, 0], sizes = [1, 16, 16], strides = [1, 1, 1]} : vector<4x16x16xf32> to vector<1x16x16xf32>
    %873 = vector.shape_cast %872 : vector<1x16x16xf32> to vector<16x16xf32>
    %874 = vector.broadcast %871 : f32 to vector<16x16xf32>
    %875 = arith.mulf %874, %873 : vector<16x16xf32>
    %876 = arith.addf %870, %875 : vector<16x16xf32>
    %c103 = arith.constant 103 : index
    %877 = memref.load %arg3[%c103] : memref<144xf32, #tpu.memory_space<smem>>
    %878 = vector.extract_strided_slice %20 {offsets = [1, 0, 0], sizes = [1, 16, 16], strides = [1, 1, 1]} : vector<4x16x16xf32> to vector<1x16x16xf32>
    %879 = vector.shape_cast %878 : vector<1x16x16xf32> to vector<16x16xf32>
    %880 = vector.broadcast %877 : f32 to vector<16x16xf32>
    %881 = arith.mulf %880, %879 : vector<16x16xf32>
    %882 = arith.addf %876, %881 : vector<16x16xf32>
    %c107 = arith.constant 107 : index
    %883 = memref.load %arg3[%c107] : memref<144xf32, #tpu.memory_space<smem>>
    %884 = vector.extract_strided_slice %20 {offsets = [2, 0, 0], sizes = [1, 16, 16], strides = [1, 1, 1]} : vector<4x16x16xf32> to vector<1x16x16xf32>
    %885 = vector.shape_cast %884 : vector<1x16x16xf32> to vector<16x16xf32>
    %886 = vector.broadcast %883 : f32 to vector<16x16xf32>
    %887 = arith.mulf %886, %885 : vector<16x16xf32>
    %888 = arith.addf %882, %887 : vector<16x16xf32>
    %c111 = arith.constant 111 : index
    %889 = memref.load %arg3[%c111] : memref<144xf32, #tpu.memory_space<smem>>
    %890 = vector.extract_strided_slice %20 {offsets = [3, 0, 0], sizes = [1, 16, 16], strides = [1, 1, 1]} : vector<4x16x16xf32> to vector<1x16x16xf32>
    %891 = vector.shape_cast %890 : vector<1x16x16xf32> to vector<16x16xf32>
    %892 = vector.broadcast %889 : f32 to vector<16x16xf32>
    %893 = arith.mulf %892, %891 : vector<16x16xf32>
    %894 = arith.addf %888, %893 : vector<16x16xf32>
    %c115 = arith.constant 115 : index
    %895 = memref.load %arg3[%c115] : memref<144xf32, #tpu.memory_space<smem>>
    %896 = vector.extract_strided_slice %21 {offsets = [0, 0, 0], sizes = [1, 16, 16], strides = [1, 1, 1]} : vector<4x16x16xf32> to vector<1x16x16xf32>
    %897 = vector.shape_cast %896 : vector<1x16x16xf32> to vector<16x16xf32>
    %898 = vector.broadcast %895 : f32 to vector<16x16xf32>
    %899 = arith.mulf %898, %897 : vector<16x16xf32>
    %900 = arith.addf %894, %899 : vector<16x16xf32>
    %c119 = arith.constant 119 : index
    %901 = memref.load %arg3[%c119] : memref<144xf32, #tpu.memory_space<smem>>
    %902 = vector.extract_strided_slice %21 {offsets = [1, 0, 0], sizes = [1, 16, 16], strides = [1, 1, 1]} : vector<4x16x16xf32> to vector<1x16x16xf32>
    %903 = vector.shape_cast %902 : vector<1x16x16xf32> to vector<16x16xf32>
    %904 = vector.broadcast %901 : f32 to vector<16x16xf32>
    %905 = arith.mulf %904, %903 : vector<16x16xf32>
    %906 = arith.addf %900, %905 : vector<16x16xf32>
    %c123 = arith.constant 123 : index
    %907 = memref.load %arg3[%c123] : memref<144xf32, #tpu.memory_space<smem>>
    %908 = vector.extract_strided_slice %21 {offsets = [2, 0, 0], sizes = [1, 16, 16], strides = [1, 1, 1]} : vector<4x16x16xf32> to vector<1x16x16xf32>
    %909 = vector.shape_cast %908 : vector<1x16x16xf32> to vector<16x16xf32>
    %910 = vector.broadcast %907 : f32 to vector<16x16xf32>
    %911 = arith.mulf %910, %909 : vector<16x16xf32>
    %912 = arith.addf %906, %911 : vector<16x16xf32>
    %c127 = arith.constant 127 : index
    %913 = memref.load %arg3[%c127] : memref<144xf32, #tpu.memory_space<smem>>
    %914 = vector.extract_strided_slice %21 {offsets = [3, 0, 0], sizes = [1, 16, 16], strides = [1, 1, 1]} : vector<4x16x16xf32> to vector<1x16x16xf32>
    %915 = vector.shape_cast %914 : vector<1x16x16xf32> to vector<16x16xf32>
    %916 = vector.broadcast %913 : f32 to vector<16x16xf32>
    %917 = arith.mulf %916, %915 : vector<16x16xf32>
    %918 = arith.addf %912, %917 : vector<16x16xf32>
    %c131 = arith.constant 131 : index
    %919 = memref.load %arg3[%c131] : memref<144xf32, #tpu.memory_space<smem>>
    %920 = vector.extract_strided_slice %22 {offsets = [0, 0, 0], sizes = [1, 16, 16], strides = [1, 1, 1]} : vector<4x16x16xf32> to vector<1x16x16xf32>
    %921 = vector.shape_cast %920 : vector<1x16x16xf32> to vector<16x16xf32>
    %922 = vector.broadcast %919 : f32 to vector<16x16xf32>
    %923 = arith.mulf %922, %921 : vector<16x16xf32>
    %924 = arith.addf %918, %923 : vector<16x16xf32>
    %c135 = arith.constant 135 : index
    %925 = memref.load %arg3[%c135] : memref<144xf32, #tpu.memory_space<smem>>
    %926 = vector.extract_strided_slice %22 {offsets = [1, 0, 0], sizes = [1, 16, 16], strides = [1, 1, 1]} : vector<4x16x16xf32> to vector<1x16x16xf32>
    %927 = vector.shape_cast %926 : vector<1x16x16xf32> to vector<16x16xf32>
    %928 = vector.broadcast %925 : f32 to vector<16x16xf32>
    %929 = arith.mulf %928, %927 : vector<16x16xf32>
    %930 = arith.addf %924, %929 : vector<16x16xf32>
    %c139 = arith.constant 139 : index
    %931 = memref.load %arg3[%c139] : memref<144xf32, #tpu.memory_space<smem>>
    %932 = vector.extract_strided_slice %22 {offsets = [2, 0, 0], sizes = [1, 16, 16], strides = [1, 1, 1]} : vector<4x16x16xf32> to vector<1x16x16xf32>
    %933 = vector.shape_cast %932 : vector<1x16x16xf32> to vector<16x16xf32>
    %934 = vector.broadcast %931 : f32 to vector<16x16xf32>
    %935 = arith.mulf %934, %933 : vector<16x16xf32>
    %936 = arith.addf %930, %935 : vector<16x16xf32>
    %c143 = arith.constant 143 : index
    %937 = memref.load %arg3[%c143] : memref<144xf32, #tpu.memory_space<smem>>
    %938 = vector.extract_strided_slice %22 {offsets = [3, 0, 0], sizes = [1, 16, 16], strides = [1, 1, 1]} : vector<4x16x16xf32> to vector<1x16x16xf32>
    %939 = vector.shape_cast %938 : vector<1x16x16xf32> to vector<16x16xf32>
    %940 = vector.broadcast %937 : f32 to vector<16x16xf32>
    %941 = arith.mulf %940, %939 : vector<16x16xf32>
    %942 = arith.addf %936, %941 : vector<16x16xf32>
    %943 = math.tanh %942 : vector<16x16xf32>
    %c0_40 = arith.constant 0 : index
    %c0_41 = arith.constant 0 : index
    %c3_42 = arith.constant 3 : index
    %c0_43 = arith.constant 0 : index
    %c0_44 = arith.constant 0 : index
    %944 = vector.load %arg9[%c0_40, %c0_41, %c3_42, %c0_43, %c0_44] : memref<1x1x4x16x16xf32, #tpu.memory_space<vmem>>, vector<1x1x1x16x16xf32>
    %945 = vector.shape_cast %944 : vector<1x1x1x16x16xf32> to vector<16x16xf32>
    %946 = vector.shape_cast %943 : vector<16x16xf32> to vector<1x1x1x16x16xf32>
    tpu.vector_store %arg9[%c0_40, %c0_41, %c3_42, %c0_43, %c0_44], %946 {strides = array<i32>} : memref<1x1x4x16x16xf32, #tpu.memory_space<vmem>>, vector<1x1x1x16x16xf32>,
    %947 = vector.extract_strided_slice %10 {offsets = [3, 0, 0], sizes = [1, 16, 16], strides = [1, 1, 1]} : vector<4x16x16xf32> to vector<1x16x16xf32>
    %948 = vector.shape_cast %947 : vector<1x16x16xf32> to vector<16x16xf32>
    %949 = arith.subf %943, %948 : vector<16x16xf32>
    %950 = arith.mulf %949, %949 : vector<16x16xf32>
    %951 = arith.addf %719, %950 : vector<16x16xf32>
    %c0_45 = arith.constant 0 : index
    %c0_46 = arith.constant 0 : index
    %952 = vector.load %arg11[%c0_45, %c0_46] : memref<16x16xf32, #tpu.memory_space<vmem>>, vector<16x16xf32>
    tpu.vector_store %arg11[%c0_45, %c0_46], %951 {strides = array<i32>} : memref<16x16xf32, #tpu.memory_space<vmem>>, vector<16x16xf32>,
    %c2_i32 = arith.constant 2 : i32
    %953 = arith.cmpi eq, %arg1, %c2_i32 : i32
    %954 = arith.extui %953 : i1 to i32
    %c0_i32_47 = arith.constant 0 : i32
    %955 = arith.cmpi ne, %954, %c0_i32_47 : i32
    scf.if %955 {
      %c0_48 = arith.constant 0 : index
      %c0_49 = arith.constant 0 : index
      %956 = vector.load %arg11[%c0_48, %c0_49] : memref<16x16xf32, #tpu.memory_space<vmem>>, vector<16x16xf32>
      %957 = vector.shape_cast %956 : vector<16x16xf32> to vector<1x16x16xf32>
      %cst = arith.constant dense<0.000000e+00> : vector<1xf32>
      %958 = vector.multi_reduction <add>, %957, %cst [1, 2] : vector<1x16x16xf32> to vector<1xf32>
      %959 = vector.shape_cast %958 : vector<1xf32> to vector<1x1x1xf32>
      %960 = vector.extract %959[0, 0, 0] : f32 from vector<1x1x1xf32>
      %961 = vector.broadcast %960 : f32 to vector<1x1xf32>
      %c0_50 = arith.constant 0 : index
      %c0_51 = arith.constant 0 : index
      %c0_52 = arith.constant 0 : index
      %962 = vector.load %arg10[%c0_50, %c0_51, %c0_52] : memref<1x1x1xf32, #tpu.memory_space<vmem>>, vector<1x1x1xf32>
      %963 = vector.shape_cast %962 : vector<1x1x1xf32> to vector<1x1xf32>
      %964 = vector.shape_cast %961 : vector<1x1xf32> to vector<1x1x1xf32>
      tpu.vector_store %arg10[%c0_50, %c0_51, %c0_52], %964 {strides = array<i32>} : memref<1x1x1xf32, #tpu.memory_space<vmem>>, vector<1x1x1xf32>,
    } else {
    }
    return
  }
  func.func @transform_0(%arg0: i32, %arg1: i32) -> i32 {
    %c0_i32 = arith.constant 0 : i32
    %c0_i32_0 = arith.constant 0 : i32
    return %c0_i32 : i32
  }
  func.func @transform_1(%arg0: i32, %arg1: i32) -> i32 {
    %c0_i32 = arith.constant 0 : i32
    %c0_i32_0 = arith.constant 0 : i32
    return %c0_i32 : i32
  }
  func.func @transform_2(%arg0: i32, %arg1: i32) -> i32 {
    %c0_i32 = arith.constant 0 : i32
    %c0_i32_0 = arith.constant 0 : i32
    return %c0_i32 : i32
  }
  func.func @transform_3(%arg0: i32, %arg1: i32) -> i32 {
    %c0_i32 = arith.constant 0 : i32
    %c0_i32_0 = arith.constant 0 : i32
    return %c0_i32 : i32
  }
  func.func @transform_4(%arg0: i32, %arg1: i32) -> i32 {
    %c0_i32 = arith.constant 0 : i32
    %c0_i32_0 = arith.constant 0 : i32
    return %c0_i32 : i32
  }
  func.func @transform_5(%arg0: i32, %arg1: i32) -> (i32, i32, i32, i32, i32) {
    %c0_i32 = arith.constant 0 : i32
    %c0_i32_0 = arith.constant 0 : i32
    %c0_i32_1 = arith.constant 0 : i32
    %c0_i32_2 = arith.constant 0 : i32
    return %arg1, %arg0, %c0_i32, %c0_i32_0, %c0_i32_1 : i32, i32, i32, i32, i32
  }
  func.func @transform_6(%arg0: i32, %arg1: i32) -> (i32, i32, i32, i32, i32) {
    %c1_i32 = arith.constant 1 : i32
    %0 = arith.addi %arg1, %c1_i32 : i32
    %c0_i32 = arith.constant 0 : i32
    %c0_i32_0 = arith.constant 0 : i32
    %c0_i32_1 = arith.constant 0 : i32
    %c0_i32_2 = arith.constant 0 : i32
    return %0, %arg0, %c0_i32, %c0_i32_0, %c0_i32_1 : i32, i32, i32, i32, i32
  }
  func.func @transform_7(%arg0: i32, %arg1: i32) -> (i32, i32, i32, i32, i32) {
    %c0_i32 = arith.constant 0 : i32
    %c0_i32_0 = arith.constant 0 : i32
    %c0_i32_1 = arith.constant 0 : i32
    %c0_i32_2 = arith.constant 0 : i32
    return %arg1, %arg0, %c0_i32, %c0_i32_0, %c0_i32_1 : i32, i32, i32, i32, i32
  }
  func.func @transform_8(%arg0: i32, %arg1: i32) -> (i32, i32, i32) {
    %c0_i32 = arith.constant 0 : i32
    %c0_i32_0 = arith.constant 0 : i32
    %c0_i32_1 = arith.constant 0 : i32
    return %arg0, %c0_i32, %c0_i32_0 : i32, i32, i32
  }
}

</mosaic_0001>

<llo_original>
// kernel: tpu_custom_call.1
$region0: #{tpu_custom_call.1}
  #allocation0 [shape = 'u32[]', space=smem, size = 0x4, offset = 0x4, fixed_abs, tag = 'smem constant byte address 0x4 - core index']
  #allocation1 [shape = 'u32[144,128]{1,0:T(1,128)}', space=vmem, size = 0x12000, scoped, tag = 'internal scratch']
  #allocation2 [shape = 'f32[16,16]{1,0:T(8,128)}', space=vmem, size = 0x2000, scoped, tag = 'scratch operand']
  %s0 = inlined_call_operand.vmem [shape: f32[4], index: 0, kind: input, shape index: {}]
  %s1 = inlined_call_operand.vmem [shape: f32[144], index: 1, kind: input, shape index: {}]
  %s2 = inlined_call_operand.vmem [shape: f32[4], index: 2, kind: input, shape index: {}]
  %s3 = inlined_call_operand.vmem [shape: f32[4], index: 3, kind: input, shape index: {}]
  %s4 = inlined_call_operand.vmem [shape: f32[4], index: 4, kind: input, shape index: {}]
  %s5 = inlined_call_operand.vmem [shape: bf16[4,2,4,18,18], index: 5, kind: input, shape index: {}]
  %s6 = inlined_call_operand.vmem [shape: bf16[4,2,4,16,16], index: 6, kind: input, shape index: {}]
  %s7 = inlined_call_operand.hbm [shape: f32[3,2,4,16,16], index: 7, kind: output, shape index: {0}]
  %s8 = inlined_call_operand.vmem [shape: f32[2,1,1], index: 8, kind: output, shape index: {1}]
  %9 = xla_tuple %s7, %s8
  %s10 = sld [smem:[#allocation0]]
  $region97: #{tpu_custom_call.1} parent=0
    _
  %s12 = ssub.s32 1, %s10
  %s13 = scalar_select 0, %s12, %s10
  $region1: #{tpu_custom_call.1} parent=0
    #allocation3 [shape = 'u8[512]{0}', space=smem, size = 0x200, scoped, tag = 'input window, operand 0, single buffered']
    #allocation4 [shape = 's32[2]{0}', space=sflag, size = 0x8, scoped, tag = 'scoped memory for tpu_custom_call.1']
    #allocation5 [shape = 's32[2]{0}', space=sflag, size = 0x8, scoped, tag = 'scoped memory for tpu_custom_call.1']
    #allocation6 [shape = 'u8[1024]{0}', space=smem, size = 0x400, scoped, tag = 'input window, operand 1, single buffered']
    #allocation7 [shape = 's32[1]{0}', space=sflag, size = 0x4, scoped, tag = 'scoped memory for tpu_custom_call.1']
    #allocation8 [shape = 'u8[512]{0}', space=smem, size = 0x200, scoped, tag = 'input window, operand 2, single buffered']
    #allocation9 [shape = 'u8[512]{0}', space=smem, size = 0x200, scoped, tag = 'input window, operand 3, single buffered']
    #allocation10 [shape = 's32[1]{0}', space=sflag, size = 0x4, scoped, tag = 'scoped memory for tpu_custom_call.1']
    #allocation11 [shape = 'u8[512]{0}', space=smem, size = 0x200, scoped, tag = 'input window, operand 4, single buffered']
    #allocation12 [shape = 'u8[65536]{0}', space=vmem, size = 0x10000, scoped, tag = 'output window, operand 0']
    %14 = vsyncpa [#allocation5], 0
    %15 = vsyncpa [#allocation7], 0
    %16 = vsyncpa [#allocation10], 0
    %17 = vsyncpa [#allocation4], 0
    %s18 = scalar_lea.sflag [#allocation4], 1
    %19 = vsyncpa %s18, 0
    loop: start=0, step=1, limit=8
    $region2: #{tpu_custom_call.1} parent=1 // loop_pre_header
      _
    $region3: #{tpu_custom_call.1} parent=1 // loop_header
      %s21 = sphi 0, %s25
      %p22 = scmp.ge.s32.totalorder %s21, 8
      %s28 = sphi 0, %s40
      %s29 = sphi 0, %s36
      %s30 = sphi 0, %s28
      %s31 = sphi 0, %s29
      %s32 = sphi 0, %s30
      %s33 = sphi 0, %s31
      %s41 = sphi 0, %s41
      %s43 = sphi 0, %s41
      %s44 = sphi 0, %s43
      %s58 = sphi 0, %s44
      %s62 = sphi 0, %s62
      %s64 = sphi 0, %s62
      %s65 = sphi 0, %s64
      %s79 = sphi 0, %s65
      %s83 = sphi 0, %s83
      %s85 = sphi 0, %s83
      %s86 = sphi 0, %s85
      %s100 = sphi 0, %s86
      %s104 = sphi 0, %s104
      %s106 = sphi 0, %s104
      %s107 = sphi 0, %s106
      %s121 = sphi 0, %s107
      %s125 = sphi 0, %s125
      %s127 = sphi 0, %s125
      %s128 = sphi 0, %s127
      %s142 = sphi 0, %s128
      %s150 = sphi 0, %s152
      %s153 = sphi 0, %s150
      %s154 = sphi 0, %s153
      %s170 = sphi 0, %s154
      %s180 = sphi 0, %s182
      %s183 = sphi 0, %s180
      %s184 = sphi 0, %s183
      %s200 = sphi 0, %s184
      %s208 = sphi 0, %s210
      %s211 = sphi 0, %s208
      %s212 = sphi 0, %s211
      %s228 = sphi 0, %s212
      %s234 = sphi 0, %s236
      %s237 = sphi 0, %s234
      %s238 = sphi 0, %s237
      %s254 = sphi 0, %s238
    $region4: #{tpu_custom_call.1} parent=1 // loop_header_branch
      %24 = sbr.rel (%p22) target = $region8
    $region5: #{tpu_custom_call.1} parent=1 // loop_body
      %s26 = ssub.s32 %s21, 1
      %s27 = ssub.s32 %s21, 2
      %s34 = sadd.s32 1, %s29
      %p35 = scmp.ge.s32.totalorder %s34, 3
      %s36 = scalar_select %p35, 0, %s34
      %s37 = sadd.s32 1, %s28
      %s38 = scalar_select %p35, %s37, %s28
      %p39 = scmp.ge.s32.totalorder %s38, 2
      %s40 = scalar_select %p39, 0, %s38
      %s42 = sadd.s32 %s41, 1
      %p45 = scmp.eq.s32.totalorder %s21, 5
      %p46 = scmp.ne.s32.totalorder %s41, %s43
      %p47 = scmp.eq.s32.totalorder %s21, 0
      %p48 = por %p46, %p47
      %p49 = scmp.ne.s32.totalorder %s41, %s43
      %p50 = scmp.eq.s32.totalorder %s26, 5
      %p51 = por %p49, %p50
      %p52 = scmp.ne.s32.totalorder %s43, %s44
      %p53 = scmp.eq.s32.totalorder %s26, 0
      %p54 = por %p52, %p53
      %p55 = scmp.ne.s32.totalorder %s43, %s44
      %p56 = scmp.eq.s32.totalorder %s27, 5
      %p57 = por %p55, %p56
      %p59 = scmp.ne.s32.totalorder %s44, %s58
      %p60 = scmp.eq.s32.totalorder %s27, 0
      %p61 = por %p59, %p60
      %s63 = sadd.s32 %s62, 1
      %p66 = scmp.eq.s32.totalorder %s21, 5
      %p67 = scmp.ne.s32.totalorder %s62, %s64
      %p68 = scmp.eq.s32.totalorder %s21, 0
      %p69 = por %p67, %p68
      %p70 = scmp.ne.s32.totalorder %s62, %s64
      %p71 = scmp.eq.s32.totalorder %s26, 5
      %p72 = por %p70, %p71
      %p73 = scmp.ne.s32.totalorder %s64, %s65
      %p74 = scmp.eq.s32.totalorder %s26, 0
      %p75 = por %p73, %p74
      %p76 = scmp.ne.s32.totalorder %s64, %s65
      %p77 = scmp.eq.s32.totalorder %s27, 5
      %p78 = por %p76, %p77
      %p80 = scmp.ne.s32.totalorder %s65, %s79
      %p81 = scmp.eq.s32.totalorder %s27, 0
      %p82 = por %p80, %p81
      %s84 = sadd.s32 %s83, 1
      %p87 = scmp.eq.s32.totalorder %s21, 5
      %p88 = scmp.ne.s32.totalorder %s83, %s85
      %p89 = scmp.eq.s32.totalorder %s21, 0
      %p90 = por %p88, %p89
      %p91 = scmp.ne.s32.totalorder %s83, %s85
      %p92 = scmp.eq.s32.totalorder %s26, 5
      %p93 = por %p91, %p92
      %p94 = scmp.ne.s32.totalorder %s85, %s86
      %p95 = scmp.eq.s32.totalorder %s26, 0
      %p96 = por %p94, %p95
      %p97 = scmp.ne.s32.totalorder %s85, %s86
      %p98 = scmp.eq.s32.totalorder %s27, 5
      %p99 = por %p97, %p98
      %p101 = scmp.ne.s32.totalorder %s86, %s100
      %p102 = scmp.eq.s32.totalorder %s27, 0
      %p103 = por %p101, %p102
      %s105 = sadd.s32 %s104, 1
      %p108 = scmp.eq.s32.totalorder %s21, 5
      %p109 = scmp.ne.s32.totalorder %s104, %s106
      %p110 = scmp.eq.s32.totalorder %s21, 0
      %p111 = por %p109, %p110
      %p112 = scmp.ne.s32.totalorder %s104, %s106
      %p113 = scmp.eq.s32.totalorder %s26, 5
      %p114 = por %p112, %p113
      %p115 = scmp.ne.s32.totalorder %s106, %s107
      %p116 = scmp.eq.s32.totalorder %s26, 0
      %p117 = por %p115, %p116
      %p118 = scmp.ne.s32.totalorder %s106, %s107
      %p119 = scmp.eq.s32.totalorder %s27, 5
      %p120 = por %p118, %p119
      %p122 = scmp.ne.s32.totalorder %s107, %s121
      %p123 = scmp.eq.s32.totalorder %s27, 0
      %p124 = por %p122, %p123
      %s126 = sadd.s32 %s125, 1
      %p129 = scmp.eq.s32.totalorder %s21, 5
      %p130 = scmp.ne.s32.totalorder %s125, %s127
      %p131 = scmp.eq.s32.totalorder %s21, 0
      %p132 = por %p130, %p131
      %p133 = scmp.ne.s32.totalorder %s125, %s127
      %p134 = scmp.eq.s32.totalorder %s26, 5
      %p135 = por %p133, %p134
      %p136 = scmp.ne.s32.totalorder %s127, %s128
      %p137 = scmp.eq.s32.totalorder %s26, 0
      %p138 = por %p136, %p137
      %p139 = scmp.ne.s32.totalorder %s127, %s128
      %p140 = scmp.eq.s32.totalorder %s27, 5
      %p141 = por %p139, %p140
      %p143 = scmp.ne.s32.totalorder %s128, %s142
      %p144 = scmp.eq.s32.totalorder %s27, 0
      %p145 = por %p143, %p144
      %s146 = ssub.s32 %s29, %s36
      %s147 = ssub.s32 %s28, %s40
      %s148 = sor.u32 %s146, %s147
      %p149 = scmp.eq.s32.totalorder %s148, 0
      %s151 = sadd.s32 %s150, 1
      %s152 = scalar_select %p149, %s150, %s151
      %p155 = pneg %p149
      %p156 = scmp.eq.s32.totalorder %s21, 5
      %p157 = por %p155, %p156
      %p158 = scmp.ne.s32.totalorder %s150, %s153
      %p159 = scmp.eq.s32.totalorder %s21, 0
      %p160 = por %p158, %p159
      %p161 = scmp.ne.s32.totalorder %s150, %s153
      %p162 = scmp.eq.s32.totalorder %s26, 5
      %p163 = por %p161, %p162
      %p164 = scmp.ne.s32.totalorder %s153, %s154
      %p165 = scmp.eq.s32.totalorder %s26, 0
      %p166 = por %p164, %p165
      %p167 = scmp.ne.s32.totalorder %s153, %s154
      %p168 = scmp.eq.s32.totalorder %s27, 5
      %p169 = por %p167, %p168
      %p171 = scmp.ne.s32.totalorder %s154, %s170
      %p172 = scmp.eq.s32.totalorder %s27, 0
      %p173 = por %p171, %p172
      %s174 = sadd.s32 %s29, 1
      %s175 = sadd.s32 %s36, 1
      %s176 = ssub.s32 %s174, %s175
      %s177 = ssub.s32 %s28, %s40
      %s178 = sor.u32 %s176, %s177
      %p179 = scmp.eq.s32.totalorder %s178, 0
      %s181 = sadd.s32 %s180, 1
      %s182 = scalar_select %p179, %s180, %s181
      %p185 = pneg %p179
      %p186 = scmp.eq.s32.totalorder %s21, 5
      %p187 = por %p185, %p186
      %p188 = scmp.ne.s32.totalorder %s180, %s183
      %p189 = scmp.eq.s32.totalorder %s21, 0
      %p190 = por %p188, %p189
      %p191 = scmp.ne.s32.totalorder %s180, %s183
      %p192 = scmp.eq.s32.totalorder %s26, 5
      %p193 = por %p191, %p192
      %p194 = scmp.ne.s32.totalorder %s183, %s184
      %p195 = scmp.eq.s32.totalorder %s26, 0
      %p196 = por %p194, %p195
      %p197 = scmp.ne.s32.totalorder %s183, %s184
      %p198 = scmp.eq.s32.totalorder %s27, 5
      %p199 = por %p197, %p198
      %p201 = scmp.ne.s32.totalorder %s184, %s200
      %p202 = scmp.eq.s32.totalorder %s27, 0
      %p203 = por %p201, %p202
      %s204 = ssub.s32 %s29, %s36
      %s205 = ssub.s32 %s28, %s40
      %s206 = sor.u32 %s204, %s205
      %p207 = scmp.eq.s32.totalorder %s206, 0
      %s209 = sadd.s32 %s208, 1
      %s210 = scalar_select %p207, %s208, %s209
      %p213 = pneg %p207
      %p214 = scmp.eq.s32.totalorder %s21, 5
      %p215 = por %p213, %p214
      %p216 = scmp.ne.s32.totalorder %s208, %s211
      %p217 = scmp.eq.s32.totalorder %s21, 0
      %p218 = por %p216, %p217
      %p219 = scmp.ne.s32.totalorder %s208, %s211
      %p220 = scmp.eq.s32.totalorder %s26, 5
      %p221 = por %p219, %p220
      %p222 = scmp.ne.s32.totalorder %s211, %s212
      %p223 = scmp.eq.s32.totalorder %s26, 0
      %p224 = por %p222, %p223
      %p225 = scmp.ne.s32.totalorder %s211, %s212
      %p226 = scmp.eq.s32.totalorder %s27, 5
      %p227 = por %p225, %p226
      %p229 = scmp.ne.s32.totalorder %s212, %s228
      %p230 = scmp.eq.s32.totalorder %s27, 0
      %p231 = por %p229, %p230
      %s232 = ssub.s32 %s28, %s40
      %p233 = scmp.eq.s32.totalorder %s232, 0
      %s235 = sadd.s32 %s234, 1
      %s236 = scalar_select %p233, %s234, %s235
      %p239 = pneg %p233
      %p240 = scmp.eq.s32.totalorder %s21, 5
      %p241 = por %p239, %p240
      %p242 = scmp.ne.s32.totalorder %s234, %s237
      %p243 = scmp.eq.s32.totalorder %s21, 0
      %p244 = por %p242, %p243
      %p245 = scmp.ne.s32.totalorder %s234, %s237
      %p246 = scmp.eq.s32.totalorder %s26, 5
      %p247 = por %p245, %p246
      %p248 = scmp.ne.s32.totalorder %s237, %s238
      %p249 = scmp.eq.s32.totalorder %s26, 0
      %p250 = por %p248, %p249
      %p251 = scmp.ne.s32.totalorder %s237, %s238
      %p252 = scmp.eq.s32.totalorder %s27, 5
      %p253 = por %p251, %p252
      %p255 = scmp.ne.s32.totalorder %s238, %s254
      %p256 = scmp.eq.s32.totalorder %s27, 0
      %p257 = por %p255, %p256
      %p258 = scmp.le.s32.totalorder 1, %s21
      %p259 = scmp.lt.s32.totalorder %s21, 7
      %p260 = pnand %p258, %p259
      %p261 = pneg %p260
      // Predicated region
      $region9: #{tpu_custom_call.1} parent=5 // pred_check
        _
      $region10: #{tpu_custom_call.1} parent=5 // pred_check_branch
        %263 = sbr.rel (%p260) target = $region12
      $region11: #{tpu_custom_call.1} parent=5 // pred_region
        %s264 = ssub.s32 %s21, 1
        // Predicated region
        $region13: #{tpu_custom_call.1} parent=11 // pred_check
          %p265 = pneg %p54
        $region14: #{tpu_custom_call.1} parent=11 // pred_check_branch
          %267 = sbr.rel (%p265) target = $region16
        $region15: #{tpu_custom_call.1} parent=11 // pred_region
          %s269 = ssub.s32 16, 16
          %270 = vsyncadd [#allocation5], %s269
          %s272 = sshll.u32 %s0, 4
          %s273 = int_to_ptr.vmem [resolvable:$true] %s272
          %275 = dma.vmem_to_smem %s273, 16, [#allocation3], [#allocation5]
        $region16: #{tpu_custom_call.1} parent=11 // pred_fallthru
          _
        // Predicated region
        $region17: #{tpu_custom_call.1} parent=11 // pred_check
          %p276 = pneg %p75
        $region18: #{tpu_custom_call.1} parent=11 // pred_check_branch
          %278 = sbr.rel (%p276) target = $region20
        $region19: #{tpu_custom_call.1} parent=11 // pred_region
          %s280 = ssub.s32 32, 32
          %281 = vsyncadd [#allocation7], %s280
          %s283 = sshll.u32 %s1, 4
          %s284 = int_to_ptr.vmem [resolvable:$true] %s283
          %286 = dma.vmem_to_smem %s284, 32, [#allocation6], [#allocation7]
        $region20: #{tpu_custom_call.1} parent=11 // pred_fallthru
          _
        // Predicated region
        $region21: #{tpu_custom_call.1} parent=11 // pred_check
          %p287 = pneg %p96
        $region22: #{tpu_custom_call.1} parent=11 // pred_check_branch
          %289 = sbr.rel (%p287) target = $region24
        $region23: #{tpu_custom_call.1} parent=11 // pred_region
          %s291 = ssub.s32 16, 16
          %292 = vsyncadd [#allocation7], %s291
          %s294 = sshll.u32 %s2, 4
          %s295 = int_to_ptr.vmem [resolvable:$true] %s294
          %297 = dma.vmem_to_smem %s295, 16, [#allocation8], [#allocation7]
        $region24: #{tpu_custom_call.1} parent=11 // pred_fallthru
          _
        // Predicated region
        $region25: #{tpu_custom_call.1} parent=11 // pred_check
          %p298 = pneg %p117
        $region26: #{tpu_custom_call.1} parent=11 // pred_check_branch
          %300 = sbr.rel (%p298) target = $region28
        $region27: #{tpu_custom_call.1} parent=11 // pred_region
          %s302 = ssub.s32 16, 16
          %303 = vsyncadd [#allocation10], %s302
          %s305 = sshll.u32 %s3, 4
          %s306 = int_to_ptr.vmem [resolvable:$true] %s305
          %308 = dma.vmem_to_smem %s306, 16, [#allocation9], [#allocation10]
        $region28: #{tpu_custom_call.1} parent=11 // pred_fallthru
          _
        // Predicated region
        $region29: #{tpu_custom_call.1} parent=11 // pred_check
          %p309 = pneg %p138
        $region30: #{tpu_custom_call.1} parent=11 // pred_check_branch
          %311 = sbr.rel (%p309) target = $region32
        $region31: #{tpu_custom_call.1} parent=11 // pred_region
          %s313 = ssub.s32 16, 16
          %314 = vsyncadd [#allocation10], %s313
          %s316 = sshll.u32 %s4, 4
          %s317 = int_to_ptr.vmem [resolvable:$true] %s316
          %319 = dma.vmem_to_smem %s317, 16, [#allocation11], [#allocation10]
        $region32: #{tpu_custom_call.1} parent=11 // pred_fallthru
          _
      $region12: #{tpu_custom_call.1} parent=5 // pred_fallthru
        _
      %p320 = scmp.lt.s32.totalorder %s21, 6
      // Predicated region
      $region33: #{tpu_custom_call.1} parent=5 // pred_check
        %p321 = pneg %p320
      $region34: #{tpu_custom_call.1} parent=5 // pred_check_branch
        %323 = sbr.rel (%p321) target = $region36
      $region35: #{tpu_custom_call.1} parent=5 // pred_region
        // Predicated region
        $region37: #{tpu_custom_call.1} parent=35 // pred_check
          %p324 = pneg %p160
        $region38: #{tpu_custom_call.1} parent=35 // pred_check_branch
          %326 = sbr.rel (%p324) target = $region40
        $region39: #{tpu_custom_call.1} parent=35 // pred_region
          %p327 = scmp.lt.s32.totalorder %s29, 3
          %s328 = scalar_select %p327, %s29, 3
          %p329 = scmp.lt.s32.totalorder %s28, 1
          %s330 = scalar_select %p329, %s28, 1
          %s331 = smul.addr %s330, 12
          %s332 = smul.addr %s328, 24
          %s333 = sadd.s32 %s331, %s332
          %s334 = smul.addr %s333, 4
          %s335 = scalar_lea.vmem %s5, %s334
        $region40: #{tpu_custom_call.1} parent=35 // pred_fallthru
          _
        // Predicated region
        $region41: #{tpu_custom_call.1} parent=35 // pred_check
          %p336 = pneg %p190
        $region42: #{tpu_custom_call.1} parent=35 // pred_check_branch
          %338 = sbr.rel (%p336) target = $region44
        $region43: #{tpu_custom_call.1} parent=35 // pred_region
          %s339 = sadd.s32 %s29, 1
          %p340 = scmp.lt.s32.totalorder %s339, 3
          %s341 = scalar_select %p340, %s339, 3
          %p342 = scmp.lt.s32.totalorder %s28, 1
          %s343 = scalar_select %p342, %s28, 1
          %s344 = smul.addr %s343, 8
          %s345 = smul.addr %s341, 16
          %s346 = sadd.s32 %s344, %s345
          %s347 = smul.addr %s346, 4
          %s348 = scalar_lea.vmem %s6, %s347
          %s349 = sadd.s32 %s29, 1
        $region44: #{tpu_custom_call.1} parent=35 // pred_fallthru
          _
      $region36: #{tpu_custom_call.1} parent=5 // pred_fallthru
        _
      %p350 = scmp.le.s32.totalorder 1, %s21
      %p351 = scmp.lt.s32.totalorder %s21, 7
      %p352 = pnand %p350, %p351
      %p353 = pneg %p352
      // Predicated region
      $region45: #{tpu_custom_call.1} parent=5 // pred_check
        _
      $region46: #{tpu_custom_call.1} parent=5 // pred_check_branch
        %355 = sbr.rel (%p352) target = $region48
      $region47: #{tpu_custom_call.1} parent=5 // pred_region
        %s356 = ssub.s32 %s21, 1
        // Predicated region
        $region49: #{tpu_custom_call.1} parent=47 // pred_check
          %p357 = pneg %p54
        $region50: #{tpu_custom_call.1} parent=47 // pred_check_branch
          %359 = sbr.rel (%p357) target = $region52
        $region51: #{tpu_custom_call.1} parent=47 // pred_region
          %360 = dma.done [#allocation5], 16
        $region52: #{tpu_custom_call.1} parent=47 // pred_fallthru
          _
        // Predicated region
        $region53: #{tpu_custom_call.1} parent=47 // pred_check
          %p361 = pneg %p75
        $region54: #{tpu_custom_call.1} parent=47 // pred_check_branch
          %363 = sbr.rel (%p361) target = $region56
        $region55: #{tpu_custom_call.1} parent=47 // pred_region
          %364 = dma.done [#allocation7], 32
        $region56: #{tpu_custom_call.1} parent=47 // pred_fallthru
          _
        // Predicated region
        $region57: #{tpu_custom_call.1} parent=47 // pred_check
          %p365 = pneg %p96
        $region58: #{tpu_custom_call.1} parent=47 // pred_check_branch
          %367 = sbr.rel (%p365) target = $region60
        $region59: #{tpu_custom_call.1} parent=47 // pred_region
          %368 = dma.done [#allocation7], 16
        $region60: #{tpu_custom_call.1} parent=47 // pred_fallthru
          _
        // Predicated region
        $region61: #{tpu_custom_call.1} parent=47 // pred_check
          %p369 = pneg %p117
        $region62: #{tpu_custom_call.1} parent=47 // pred_check_branch
          %371 = sbr.rel (%p369) target = $region64
        $region63: #{tpu_custom_call.1} parent=47 // pred_region
          %372 = dma.done [#allocation10], 16
        $region64: #{tpu_custom_call.1} parent=47 // pred_fallthru
          _
        // Predicated region
        $region65: #{tpu_custom_call.1} parent=47 // pred_check
          %p373 = pneg %p138
        $region66: #{tpu_custom_call.1} parent=47 // pred_check_branch
          %375 = sbr.rel (%p373) target = $region68
        $region67: #{tpu_custom_call.1} parent=47 // pred_region
          %376 = dma.done [#allocation10], 16
        $region68: #{tpu_custom_call.1} parent=47 // pred_fallthru
          _
        %377 = sfence
        %p378 = pneg %p54
        %p379 = pneg %p51
        %p380 = pneg %p75
        %p381 = pneg %p72
        %p382 = pneg %p96
        %p383 = pneg %p93
        %p384 = pneg %p117
        %p385 = pneg %p114
        %p386 = pneg %p138
        %p387 = pneg %p135
        %p388 = scmp.lt.s32.totalorder %s31, 3
        %s389 = scalar_select %p388, %s31, 3
        %p390 = scmp.lt.s32.totalorder %s30, 1
        %s391 = scalar_select %p390, %s30, 1
        %s392 = smul.addr %s391, 12
        %s393 = smul.addr %s389, 24
        %s394 = sadd.s32 %s392, %s393
        %s395 = smul.addr %s394, 4
        %s396 = scalar_lea.vmem %s5, %s395
        %p397 = pneg %p166
        %p398 = pneg %p163
        %s399 = sadd.s32 %s31, 1
        %p400 = scmp.lt.s32.totalorder %s399, 3
        %s401 = scalar_select %p400, %s399, 3
        %p402 = scmp.lt.s32.totalorder %s30, 1
        %s403 = scalar_select %p402, %s30, 1
        %s404 = smul.addr %s403, 8
        %s405 = smul.addr %s401, 16
        %s406 = sadd.s32 %s404, %s405
        %s407 = smul.addr %s406, 4
        %s408 = scalar_lea.vmem %s6, %s407
        %p409 = pneg %p196
        %p410 = pneg %p193
        %p411 = pneg %p224
        %p412 = pneg %p221
        %s413 = sand.u32 %s211, 1
        %s414 = scalar_lea.sflag [#allocation4], %s413
        %s415 = sand.u32 %s211, 1
        %s416 = smul.addr %s415, 64
        %s417 = scalar_lea.vmem [#allocation12], %s416
        %p418 = pneg %p250
        %p419 = pneg %p247
        %p420 = scmp.lt.s32.totalorder %s30, 1
        %s421 = scalar_select %p420, %s30, 1
        %s422 = scalar_lea.vmem %s8, %s421
        %p423 = scmp.lt.s32.totalorder %s31, 3
        %s424 = scalar_select %p423, %s31, 3
        %p425 = scmp.lt.s32.totalorder %s30, 1
        %s426 = scalar_select %p425, %s30, 1
        %s427 = smul.addr %s426, 12
        %s428 = smul.addr %s424, 24
        %s429 = sadd.s32 %s427, %s428
        %s430 = smul.addr %s429, 4
        %s431 = scalar_lea.vmem %s5, %s430
        %s432 = sadd.s32 %s31, 1
        %p433 = scmp.lt.s32.totalorder %s432, 3
        %s434 = scalar_select %p433, %s432, 3
        %p435 = scmp.lt.s32.totalorder %s30, 1
        %s436 = scalar_select %p435, %s30, 1
        %s437 = smul.addr %s436, 8
        %s438 = smul.addr %s434, 16
        %s439 = sadd.s32 %s437, %s438
        %s440 = smul.addr %s439, 4
        %s441 = scalar_lea.vmem %s6, %s440
        %s442 = sadd.s32 %s31, 1
        %p443 = scmp.lt.s32.totalorder %s30, 1
        %s444 = scalar_select %p443, %s30, 1
        %s445 = scalar_lea.vmem %s8, %s444
        %p446 = scmp.eq.s32.totalorder %s31, 0
        // Predicated region
        $region69: #{tpu_custom_call.1} parent=47 // pred_check
          %p447 = pneg %p446
        $region70: #{tpu_custom_call.1} parent=47 // pred_check_branch
          %449 = sbr.rel (%p447) target = $region72
        $region71: #{tpu_custom_call.1} parent=47 // pred_region
          %vm450 = vcmask 130048
          %451 = vst.msk [vmem:[#allocation2] sm:$0xff] %vm450, 0.0
          %452 = vst.msk [vmem:[#allocation2 + $0x8] sm:$0xff] %vm450, 0.0
          %vm453 = vcmask 0
          %454 = vst.msk [vmem:[%s445] sm:$0x1] %vm453, 0.0
        $region72: #{tpu_custom_call.1} parent=47 // pred_fallthru
          _
        %s455 = sld [smem:[#allocation3 + %s31]]
        %v456 = vld [vmem:[%s431] sm:$0xf]
        %v457 = vld [vmem:[%s431 + $0x4] sm:$0xf]
        %v458 = vld [vmem:[%s431 + $0x8] sm:$0x1]
        %v459 = vld [vmem:[%s431 + $0xc] sm:$0xf]
        %v460 = vld [vmem:[%s431 + $0x10] sm:$0xf]
        %v461 = vld [vmem:[%s431 + $0x14] sm:$0x1]
        %v462 = vld [vmem:[%s431 + $0x18] sm:$0xf]
        %v463 = vld [vmem:[%s431 + $0x1c] sm:$0xf]
        %v464 = vld [vmem:[%s431 + $0x20] sm:$0x1]
        %v465 = vld [vmem:[%s431 + $0x24] sm:$0xf]
        %v466 = vld [vmem:[%s431 + $0x28] sm:$0xf]
        %v467 = vld [vmem:[%s431 + $0x2c] sm:$0x1]
        %v468 = vunpack.c.l.bf16 %v456
        %v469 = vunpack.c.l.bf16 %v457
        %v470 = vunpack.c.l.bf16 %v458
        %v471 = vunpack.c.l.bf16 %v459
        %v472 = vunpack.c.l.bf16 %v460
        %v473 = vunpack.c.l.bf16 %v461
        %v474 = vunpack.c.l.bf16 %v462
        %v475 = vunpack.c.l.bf16 %v463
        %v476 = vunpack.c.l.bf16 %v464
        %v477 = vunpack.c.l.bf16 %v465
        %v478 = vunpack.c.l.bf16 %v466
        %v479 = vunpack.c.l.bf16 %v467
        %v480 = vld [vmem:[%s441] sm:$0xf]
        %v481 = vld [vmem:[%s441 + $0x4] sm:$0xf]
        %v482 = vld [vmem:[%s441 + $0x8] sm:$0xf]
        %v483 = vld [vmem:[%s441 + $0xc] sm:$0xf]
        %v484 = vld [vmem:[%s441 + $0x10] sm:$0xf]
        %v485 = vld [vmem:[%s441 + $0x14] sm:$0xf]
        %v486 = vld [vmem:[%s441 + $0x18] sm:$0xf]
        %v487 = vld [vmem:[%s441 + $0x1c] sm:$0xf]
        %v488 = vunpack.c.l.bf16 %v480
        %v489 = vunpack.c.l.bf16 %v481
        %v490 = vunpack.c.l.bf16 %v482
        %v491 = vunpack.c.l.bf16 %v483
        %v492 = vunpack.c.l.bf16 %v484
        %v493 = vunpack.c.l.bf16 %v485
        %v494 = vunpack.c.l.bf16 %v486
        %v495 = vunpack.c.l.bf16 %v487
        %v496 = vld [vmem:[#allocation2] sm:$0xff]
        %v497 = vld [vmem:[#allocation2 + $0x8] sm:$0xff]
        %s498 = sld [smem:[#allocation8]]
        %s499 = sld [smem:[#allocation9]]
        %s500 = smul.f32 %s499, %s455
        %s501 = sadd.f32 %s498, %s500
        %s502 = sld [smem:[#allocation11]]
        %s503 = sadd.f32 %s501, %s502
        %v504 = vstv %s503
        %s505 = sld [smem:[#allocation6]]
        %v506 = vstv %s505
        %v507 = vmul.f32 %v506, %v468
        %v508 = vmul.f32 %v506, %v469
        %v509 = vadd.f32 %v504, %v507
        %v510 = vadd.f32 %v504, %v508
        %s511 = sld [smem:[#allocation6 + $0x4]]
        %v512 = vstv %s511
        %v513 = vmul.f32 %v512, %v471
        %v514 = vmul.f32 %v512, %v472
        %v515 = vadd.f32 %v509, %v513
        %v516 = vadd.f32 %v510, %v514
        %s517 = sld [smem:[#allocation6 + $0x8]]
        %v518 = vstv %s517
        %v519 = vmul.f32 %v518, %v474
        %v520 = vmul.f32 %v518, %v475
        %v521 = vadd.f32 %v515, %v519
        %v522 = vadd.f32 %v516, %v520
        %s523 = sld [smem:[#allocation6 + $0xc]]
        %v524 = vstv %s523
        %v525 = vmul.f32 %v524, %v477
        %v526 = vmul.f32 %v524, %v478
        %v527 = vadd.f32 %v521, %v525
        %v528 = vadd.f32 %v522, %v526
        %s529 = sld [smem:[#allocation6 + $0x10]]
        %v530 = vstv %s529
        %v531 = vmul.f32 %v530, %v468
        %v532 = vmul.f32 %v530, %v469
        %535 = vrot.lane.b32.xlu0 %v531, 127
        %v536 = vpop.permute.xlu0 %535
        %537 = vrot.lane.b32.xlu0 %v532, 127
        %v538 = vpop.permute.xlu0 %537
        %v541 = vadd.f32 %v527, %v536
        %v542 = vadd.f32 %v528, %v538
        %s543 = sld [smem:[#allocation6 + $0x14]]
        %v544 = vstv %s543
        %v545 = vmul.f32 %v544, %v471
        %v546 = vmul.f32 %v544, %v472
        %549 = vrot.lane.b32.xlu0 %v545, 127
        %v550 = vpop.permute.xlu0 %549
        %551 = vrot.lane.b32.xlu0 %v546, 127
        %v552 = vpop.permute.xlu0 %551
        %v555 = vadd.f32 %v541, %v550
        %v556 = vadd.f32 %v542, %v552
        %s557 = sld [smem:[#allocation6 + $0x18]]
        %v558 = vstv %s557
        %v559 = vmul.f32 %v558, %v474
        %v560 = vmul.f32 %v558, %v475
        %563 = vrot.lane.b32.xlu0 %v559, 127
        %v564 = vpop.permute.xlu0 %563
        %565 = vrot.lane.b32.xlu0 %v560, 127
        %v566 = vpop.permute.xlu0 %565
        %v569 = vadd.f32 %v555, %v564
        %v570 = vadd.f32 %v556, %v566
        %s571 = sld [smem:[#allocation6 + $0x1c]]
        %v572 = vstv %s571
        %v573 = vmul.f32 %v572, %v477
        %v574 = vmul.f32 %v572, %v478
        %577 = vrot.lane.b32.xlu0 %v573, 127
        %v578 = vpop.permute.xlu0 %577
        %579 = vrot.lane.b32.xlu0 %v574, 127
        %v580 = vpop.permute.xlu0 %579
        %v583 = vadd.f32 %v569, %v578
        %v584 = vadd.f32 %v570, %v580
        %s585 = sld [smem:[#allocation6 + $0x20]]
        %v586 = vstv %s585
        %v587 = vmul.f32 %v586, %v468
        %v588 = vmul.f32 %v586, %v469
        %591 = vrot.lane.b32.xlu0 %v587, 126
        %v592 = vpop.permute.xlu0 %591
        %593 = vrot.lane.b32.xlu0 %v588, 126
        %v594 = vpop.permute.xlu0 %593
        %v597 = vadd.f32 %v583, %v592
        %v598 = vadd.f32 %v584, %v594
        %s599 = sld [smem:[#allocation6 + $0x24]]
        %v600 = vstv %s599
        %v601 = vmul.f32 %v600, %v471
        %v602 = vmul.f32 %v600, %v472
        %605 = vrot.lane.b32.xlu0 %v601, 126
        %v606 = vpop.permute.xlu0 %605
        %607 = vrot.lane.b32.xlu0 %v602, 126
        %v608 = vpop.permute.xlu0 %607
        %v611 = vadd.f32 %v597, %v606
        %v612 = vadd.f32 %v598, %v608
        %s613 = sld [smem:[#allocation6 + $0x28]]
        %v614 = vstv %s613
        %v615 = vmul.f32 %v614, %v474
        %v616 = vmul.f32 %v614, %v475
        %619 = vrot.lane.b32.xlu0 %v615, 126
        %v620 = vpop.permute.xlu0 %619
        %621 = vrot.lane.b32.xlu0 %v616, 126
        %v622 = vpop.permute.xlu0 %621
        %v625 = vadd.f32 %v611, %v620
        %v626 = vadd.f32 %v612, %v622
        %s627 = sld [smem:[#allocation6 + $0x2c]]
        %v628 = vstv %s627
        %v629 = vmul.f32 %v628, %v477
        %v630 = vmul.f32 %v628, %v478
        %633 = vrot.lane.b32.xlu0 %v629, 126
        %v634 = vpop.permute.xlu0 %633
        %635 = vrot.lane.b32.xlu0 %v630, 126
        %v636 = vpop.permute.xlu0 %635
        %v639 = vadd.f32 %v625, %v634
        %v640 = vadd.f32 %v626, %v636
        %s641 = sld [smem:[#allocation6 + $0x30]]
        %v642 = vstv %s641
        %v643 = vmul.f32 %v642, %v468
        %v644 = vmul.f32 %v642, %v469
        %v645 = vmul.f32 %v642, %v470
        %vm649 = vcmask 1046528
        %v650 = vrot.slane %v643, 1
        %v651 = vrot.slane %v644, 1
        %v652 = vsel %vm649, %v650, %v651
        %v653 = vrot.slane %v645, 1
        %v654 = vsel %vm649, %v651, %v653
        %v657 = vadd.f32 %v639, %v652
        %v658 = vadd.f32 %v640, %v654
        %s659 = sld [smem:[#allocation6 + $0x34]]
        %v660 = vstv %s659
        %v661 = vmul.f32 %v660, %v471
        %v662 = vmul.f32 %v660, %v472
        %v663 = vmul.f32 %v660, %v473
        %v667 = vrot.slane %v661, 1
        %v668 = vrot.slane %v662, 1
        %v669 = vsel %vm649, %v667, %v668
        %v670 = vrot.slane %v663, 1
        %v671 = vsel %vm649, %v668, %v670
        %v674 = vadd.f32 %v657, %v669
        %v675 = vadd.f32 %v658, %v671
        %s676 = sld [smem:[#allocation6 + $0x38]]
        %v677 = vstv %s676
        %v678 = vmul.f32 %v677, %v474
        %v679 = vmul.f32 %v677, %v475
        %v680 = vmul.f32 %v677, %v476
        %v684 = vrot.slane %v678, 1
        %v685 = vrot.slane %v679, 1
        %v686 = vsel %vm649, %v684, %v685
        %v687 = vrot.slane %v680, 1
        %v688 = vsel %vm649, %v685, %v687
        %v691 = vadd.f32 %v674, %v686
        %v692 = vadd.f32 %v675, %v688
        %s693 = sld [smem:[#allocation6 + $0x3c]]
        %v694 = vstv %s693
        %v695 = vmul.f32 %v694, %v477
        %v696 = vmul.f32 %v694, %v478
        %v697 = vmul.f32 %v694, %v479
        %v701 = vrot.slane %v695, 1
        %v702 = vrot.slane %v696, 1
        %v703 = vsel %vm649, %v701, %v702
        %v704 = vrot.slane %v697, 1
        %v705 = vsel %vm649, %v702, %v704
        %v708 = vadd.f32 %v691, %v703
        %v709 = vadd.f32 %v692, %v705
        %s710 = sld [smem:[#allocation6 + $0x40]]
        %v711 = vstv %s710
        %v712 = vmul.f32 %v711, %v468
        %v713 = vmul.f32 %v711, %v469
        %v714 = vmul.f32 %v711, %v470
        %v718 = vrot.slane %v712, 1
        %v719 = vrot.slane %v713, 1
        %v720 = vsel %vm649, %v718, %v719
        %v721 = vrot.slane %v714, 1
        %v722 = vsel %vm649, %v719, %v721
        %723 = vrot.lane.b32.xlu0 %v720, 127
        %v724 = vpop.permute.xlu0 %723
        %725 = vrot.lane.b32.xlu0 %v722, 127
        %v726 = vpop.permute.xlu0 %725
        %v729 = vadd.f32 %v708, %v724
        %v730 = vadd.f32 %v709, %v726
        %s731 = sld [smem:[#allocation6 + $0x44]]
        %v732 = vstv %s731
        %v733 = vmul.f32 %v732, %v471
        %v734 = vmul.f32 %v732, %v472
        %v735 = vmul.f32 %v732, %v473
        %v739 = vrot.slane %v733, 1
        %v740 = vrot.slane %v734, 1
        %v741 = vsel %vm649, %v739, %v740
        %v742 = vrot.slane %v735, 1
        %v743 = vsel %vm649, %v740, %v742
        %744 = vrot.lane.b32.xlu0 %v741, 127
        %v745 = vpop.permute.xlu0 %744
        %746 = vrot.lane.b32.xlu0 %v743, 127
        %v747 = vpop.permute.xlu0 %746
        %v750 = vadd.f32 %v729, %v745
        %v751 = vadd.f32 %v730, %v747
        %s752 = sld [smem:[#allocation6 + $0x48]]
        %v753 = vstv %s752
        %v754 = vmul.f32 %v753, %v474
        %v755 = vmul.f32 %v753, %v475
        %v756 = vmul.f32 %v753, %v476
        %v760 = vrot.slane %v754, 1
        %v761 = vrot.slane %v755, 1
        %v762 = vsel %vm649, %v760, %v761
        %v763 = vrot.slane %v756, 1
        %v764 = vsel %vm649, %v761, %v763
        %765 = vrot.lane.b32.xlu0 %v762, 127
        %v766 = vpop.permute.xlu0 %765
        %767 = vrot.lane.b32.xlu0 %v764, 127
        %v768 = vpop.permute.xlu0 %767
        %v771 = vadd.f32 %v750, %v766
        %v772 = vadd.f32 %v751, %v768
        %s773 = sld [smem:[#allocation6 + $0x4c]]
        %v774 = vstv %s773
        %v775 = vmul.f32 %v774, %v477
        %v776 = vmul.f32 %v774, %v478
        %v777 = vmul.f32 %v774, %v479
        %v781 = vrot.slane %v775, 1
        %v782 = vrot.slane %v776, 1
        %v783 = vsel %vm649, %v781, %v782
        %v784 = vrot.slane %v777, 1
        %v785 = vsel %vm649, %v782, %v784
        %786 = vrot.lane.b32.xlu0 %v783, 127
        %v787 = vpop.permute.xlu0 %786
        %788 = vrot.lane.b32.xlu0 %v785, 127
        %v789 = vpop.permute.xlu0 %788
        %v792 = vadd.f32 %v771, %v787
        %v793 = vadd.f32 %v772, %v789
        %s794 = sld [smem:[#allocation6 + $0x50]]
        %v795 = vstv %s794
        %v796 = vmul.f32 %v795, %v468
        %v797 = vmul.f32 %v795, %v469
        %v798 = vmul.f32 %v795, %v470
        %v802 = vrot.slane %v796, 1
        %v803 = vrot.slane %v797, 1
        %v804 = vsel %vm649, %v802, %v803
        %v805 = vrot.slane %v798, 1
        %v806 = vsel %vm649, %v803, %v805
        %807 = vrot.lane.b32.xlu0 %v804, 126
        %v808 = vpop.permute.xlu0 %807
        %809 = vrot.lane.b32.xlu0 %v806, 126
        %v810 = vpop.permute.xlu0 %809
        %v813 = vadd.f32 %v792, %v808
        %v814 = vadd.f32 %v793, %v810
        %s815 = sld [smem:[#allocation6 + $0x54]]
        %v816 = vstv %s815
        %v817 = vmul.f32 %v816, %v471
        %v818 = vmul.f32 %v816, %v472
        %v819 = vmul.f32 %v816, %v473
        %v823 = vrot.slane %v817, 1
        %v824 = vrot.slane %v818, 1
        %v825 = vsel %vm649, %v823, %v824
        %v826 = vrot.slane %v819, 1
        %v827 = vsel %vm649, %v824, %v826
        %828 = vrot.lane.b32.xlu0 %v825, 126
        %v829 = vpop.permute.xlu0 %828
        %830 = vrot.lane.b32.xlu0 %v827, 126
        %v831 = vpop.permute.xlu0 %830
        %v834 = vadd.f32 %v813, %v829
        %v835 = vadd.f32 %v814, %v831
        %s836 = sld [smem:[#allocation6 + $0x58]]
        %v837 = vstv %s836
        %v838 = vmul.f32 %v837, %v474
        %v839 = vmul.f32 %v837, %v475
        %v840 = vmul.f32 %v837, %v476
        %v844 = vrot.slane %v838, 1
        %v845 = vrot.slane %v839, 1
        %v846 = vsel %vm649, %v844, %v845
        %v847 = vrot.slane %v840, 1
        %v848 = vsel %vm649, %v845, %v847
        %849 = vrot.lane.b32.xlu0 %v846, 126
        %v850 = vpop.permute.xlu0 %849
        %851 = vrot.lane.b32.xlu0 %v848, 126
        %v852 = vpop.permute.xlu0 %851
        %v855 = vadd.f32 %v834, %v850
        %v856 = vadd.f32 %v835, %v852
        %s857 = sld [smem:[#allocation6 + $0x5c]]
        %v858 = vstv %s857
        %v859 = vmul.f32 %v858, %v477
        %v860 = vmul.f32 %v858, %v478
        %v861 = vmul.f32 %v858, %v479
        %v865 = vrot.slane %v859, 1
        %v866 = vrot.slane %v860, 1
        %v867 = vsel %vm649, %v865, %v866
        %v868 = vrot.slane %v861, 1
        %v869 = vsel %vm649, %v866, %v868
        %870 = vrot.lane.b32.xlu0 %v867, 126
        %v871 = vpop.permute.xlu0 %870
        %872 = vrot.lane.b32.xlu0 %v869, 126
        %v873 = vpop.permute.xlu0 %872
        %v876 = vadd.f32 %v855, %v871
        %v877 = vadd.f32 %v856, %v873
        %s878 = sld [smem:[#allocation6 + $0x60]]
        %v879 = vstv %s878
        %v880 = vmul.f32 %v879, %v468
        %v881 = vmul.f32 %v879, %v469
        %v882 = vmul.f32 %v879, %v470
        %vm886 = vcmask 1045504
        %v887 = vrot.slane %v880, 2
        %v888 = vrot.slane %v881, 2
        %v889 = vsel %vm886, %v887, %v888
        %v890 = vrot.slane %v882, 2
        %v891 = vsel %vm886, %v888, %v890
        %v894 = vadd.f32 %v876, %v889
        %v895 = vadd.f32 %v877, %v891
        %s896 = sld [smem:[#allocation6 + $0x64]]
        %v897 = vstv %s896
        %v898 = vmul.f32 %v897, %v471
        %v899 = vmul.f32 %v897, %v472
        %v900 = vmul.f32 %v897, %v473
        %v904 = vrot.slane %v898, 2
        %v905 = vrot.slane %v899, 2
        %v906 = vsel %vm886, %v904, %v905
        %v907 = vrot.slane %v900, 2
        %v908 = vsel %vm886, %v905, %v907
        %v911 = vadd.f32 %v894, %v906
        %v912 = vadd.f32 %v895, %v908
        %s913 = sld [smem:[#allocation6 + $0x68]]
        %v914 = vstv %s913
        %v915 = vmul.f32 %v914, %v474
        %v916 = vmul.f32 %v914, %v475
        %v917 = vmul.f32 %v914, %v476
        %v921 = vrot.slane %v915, 2
        %v922 = vrot.slane %v916, 2
        %v923 = vsel %vm886, %v921, %v922
        %v924 = vrot.slane %v917, 2
        %v925 = vsel %vm886, %v922, %v924
        %v928 = vadd.f32 %v911, %v923
        %v929 = vadd.f32 %v912, %v925
        %s930 = sld [smem:[#allocation6 + $0x6c]]
        %v931 = vstv %s930
        %v932 = vmul.f32 %v931, %v477
        %v933 = vmul.f32 %v931, %v478
        %v934 = vmul.f32 %v931, %v479
        %v938 = vrot.slane %v932, 2
        %v939 = vrot.slane %v933, 2
        %v940 = vsel %vm886, %v938, %v939
        %v941 = vrot.slane %v934, 2
        %v942 = vsel %vm886, %v939, %v941
        %v945 = vadd.f32 %v928, %v940
        %v946 = vadd.f32 %v929, %v942
        %s947 = sld [smem:[#allocation6 + $0x70]]
        %v948 = vstv %s947
        %v949 = vmul.f32 %v948, %v468
        %v950 = vmul.f32 %v948, %v469
        %v951 = vmul.f32 %v948, %v470
        %v955 = vrot.slane %v949, 2
        %v956 = vrot.slane %v950, 2
        %v957 = vsel %vm886, %v955, %v956
        %v958 = vrot.slane %v951, 2
        %v959 = vsel %vm886, %v956, %v958
        %960 = vrot.lane.b32.xlu0 %v957, 127
        %v961 = vpop.permute.xlu0 %960
        %962 = vrot.lane.b32.xlu0 %v959, 127
        %v963 = vpop.permute.xlu0 %962
        %v966 = vadd.f32 %v945, %v961
        %v967 = vadd.f32 %v946, %v963
        %s968 = sld [smem:[#allocation6 + $0x74]]
        %v969 = vstv %s968
        %v970 = vmul.f32 %v969, %v471
        %v971 = vmul.f32 %v969, %v472
        %v972 = vmul.f32 %v969, %v473
        %v976 = vrot.slane %v970, 2
        %v977 = vrot.slane %v971, 2
        %v978 = vsel %vm886, %v976, %v977
        %v979 = vrot.slane %v972, 2
        %v980 = vsel %vm886, %v977, %v979
        %981 = vrot.lane.b32.xlu0 %v978, 127
        %v982 = vpop.permute.xlu0 %981
        %983 = vrot.lane.b32.xlu0 %v980, 127
        %v984 = vpop.permute.xlu0 %983
        %v987 = vadd.f32 %v966, %v982
        %v988 = vadd.f32 %v967, %v984
        %s989 = sld [smem:[#allocation6 + $0x78]]
        %v990 = vstv %s989
        %v991 = vmul.f32 %v990, %v474
        %v992 = vmul.f32 %v990, %v475
        %v993 = vmul.f32 %v990, %v476
        %v997 = vrot.slane %v991, 2
        %v998 = vrot.slane %v992, 2
        %v999 = vsel %vm886, %v997, %v998
        %v1000 = vrot.slane %v993, 2
        %v1001 = vsel %vm886, %v998, %v1000
        %1002 = vrot.lane.b32.xlu0 %v999, 127
        %v1003 = vpop.permute.xlu0 %1002
        %1004 = vrot.lane.b32.xlu0 %v1001, 127
        %v1005 = vpop.permute.xlu0 %1004
        %v1008 = vadd.f32 %v987, %v1003
        %v1009 = vadd.f32 %v988, %v1005
        %s1010 = sld [smem:[#allocation6 + $0x7c]]
        %v1011 = vstv %s1010
        %v1012 = vmul.f32 %v1011, %v477
        %v1013 = vmul.f32 %v1011, %v478
        %v1014 = vmul.f32 %v1011, %v479
        %v1018 = vrot.slane %v1012, 2
        %v1019 = vrot.slane %v1013, 2
        %v1020 = vsel %vm886, %v1018, %v1019
        %v1021 = vrot.slane %v1014, 2
        %v1022 = vsel %vm886, %v1019, %v1021
        %1023 = vrot.lane.b32.xlu0 %v1020, 127
        %v1024 = vpop.permute.xlu0 %1023
        %1025 = vrot.lane.b32.xlu0 %v1022, 127
        %v1026 = vpop.permute.xlu0 %1025
        %v1029 = vadd.f32 %v1008, %v1024
        %v1030 = vadd.f32 %v1009, %v1026
        %s1031 = sld [smem:[#allocation6 + $0x80]]
        %v1032 = vstv %s1031
        %v1033 = vmul.f32 %v1032, %v468
        %v1034 = vmul.f32 %v1032, %v469
        %v1035 = vmul.f32 %v1032, %v470
        %v1039 = vrot.slane %v1033, 2
        %v1040 = vrot.slane %v1034, 2
        %v1041 = vsel %vm886, %v1039, %v1040
        %v1042 = vrot.slane %v1035, 2
        %v1043 = vsel %vm886, %v1040, %v1042
        %1044 = vrot.lane.b32.xlu0 %v1041, 126
        %v1045 = vpop.permute.xlu0 %1044
        %1046 = vrot.lane.b32.xlu0 %v1043, 126
        %v1047 = vpop.permute.xlu0 %1046
        %v1050 = vadd.f32 %v1029, %v1045
        %v1051 = vadd.f32 %v1030, %v1047
        %s1052 = sld [smem:[#allocation6 + $0x84]]
        %v1053 = vstv %s1052
        %v1054 = vmul.f32 %v1053, %v471
        %v1055 = vmul.f32 %v1053, %v472
        %v1056 = vmul.f32 %v1053, %v473
        %v1060 = vrot.slane %v1054, 2
        %v1061 = vrot.slane %v1055, 2
        %v1062 = vsel %vm886, %v1060, %v1061
        %v1063 = vrot.slane %v1056, 2
        %v1064 = vsel %vm886, %v1061, %v1063
        %1065 = vrot.lane.b32.xlu0 %v1062, 126
        %v1066 = vpop.permute.xlu0 %1065
        %1067 = vrot.lane.b32.xlu0 %v1064, 126
        %v1068 = vpop.permute.xlu0 %1067
        %v1071 = vadd.f32 %v1050, %v1066
        %v1072 = vadd.f32 %v1051, %v1068
        %s1073 = sld [smem:[#allocation6 + $0x88]]
        %v1074 = vstv %s1073
        %v1075 = vmul.f32 %v1074, %v474
        %v1076 = vmul.f32 %v1074, %v475
        %v1077 = vmul.f32 %v1074, %v476
        %v1081 = vrot.slane %v1075, 2
        %v1082 = vrot.slane %v1076, 2
        %v1083 = vsel %vm886, %v1081, %v1082
        %v1084 = vrot.slane %v1077, 2
        %v1085 = vsel %vm886, %v1082, %v1084
        %1086 = vrot.lane.b32.xlu0 %v1083, 126
        %v1087 = vpop.permute.xlu0 %1086
        %1088 = vrot.lane.b32.xlu0 %v1085, 126
        %v1089 = vpop.permute.xlu0 %1088
        %v1092 = vadd.f32 %v1071, %v1087
        %v1093 = vadd.f32 %v1072, %v1089
        %s1094 = sld [smem:[#allocation6 + $0x8c]]
        %v1095 = vstv %s1094
        %v1096 = vmul.f32 %v1095, %v477
        %v1097 = vmul.f32 %v1095, %v478
        %v1098 = vmul.f32 %v1095, %v479
        %v1102 = vrot.slane %v1096, 2
        %v1103 = vrot.slane %v1097, 2
        %v1104 = vsel %vm886, %v1102, %v1103
        %v1105 = vrot.slane %v1098, 2
        %v1106 = vsel %vm886, %v1103, %v1105
        %1107 = vrot.lane.b32.xlu0 %v1104, 126
        %v1108 = vpop.permute.xlu0 %1107
        %1109 = vrot.lane.b32.xlu0 %v1106, 126
        %v1110 = vpop.permute.xlu0 %1109
        %v1113 = vadd.f32 %v1092, %v1108
        %v1114 = vadd.f32 %v1093, %v1110
        %v1115 = vtanh.pop %v1113
        %v1116 = vtanh.pop %v1114
        %vm1117 = vcmask 130048
        %1118 = vst.msk [vmem:[%s417] sm:$0xff] %vm1117, %v1115
        %1119 = vst.msk [vmem:[%s417 + $0x8] sm:$0xff] %vm1117, %v1116
        %v1120 = vsub.f32 %v1115, %v488
        %v1121 = vsub.f32 %v1116, %v489
        %v1122 = vmul.f32 %v1120, %v1120
        %v1123 = vmul.f32 %v1121, %v1121
        %v1124 = vadd.f32 %v496, %v1122
        %v1125 = vadd.f32 %v497, %v1123
        %s1126 = sld [smem:[#allocation8 + $0x1]]
        %s1127 = sld [smem:[#allocation9 + $0x1]]
        %s1128 = smul.f32 %s1127, %s455
        %s1129 = sadd.f32 %s1126, %s1128
        %s1130 = sld [smem:[#allocation11 + $0x1]]
        %s1131 = sadd.f32 %s1129, %s1130
        %v1132 = vstv %s1131
        %s1133 = sld [smem:[#allocation6 + $0x1]]
        %v1134 = vstv %s1133
        %v1135 = vmul.f32 %v1134, %v468
        %v1136 = vmul.f32 %v1134, %v469
        %v1137 = vadd.f32 %v1132, %v1135
        %v1138 = vadd.f32 %v1132, %v1136
        %s1139 = sld [smem:[#allocation6 + $0x5]]
        %v1140 = vstv %s1139
        %v1141 = vmul.f32 %v1140, %v471
        %v1142 = vmul.f32 %v1140, %v472
        %v1143 = vadd.f32 %v1137, %v1141
        %v1144 = vadd.f32 %v1138, %v1142
        %s1145 = sld [smem:[#allocation6 + $0x9]]
        %v1146 = vstv %s1145
        %v1147 = vmul.f32 %v1146, %v474
        %v1148 = vmul.f32 %v1146, %v475
        %v1149 = vadd.f32 %v1143, %v1147
        %v1150 = vadd.f32 %v1144, %v1148
        %s1151 = sld [smem:[#allocation6 + $0xd]]
        %v1152 = vstv %s1151
        %v1153 = vmul.f32 %v1152, %v477
        %v1154 = vmul.f32 %v1152, %v478
        %v1155 = vadd.f32 %v1149, %v1153
        %v1156 = vadd.f32 %v1150, %v1154
        %s1157 = sld [smem:[#allocation6 + $0x11]]
        %v1158 = vstv %s1157
        %v1159 = vmul.f32 %v1158, %v468
        %v1160 = vmul.f32 %v1158, %v469
        %1163 = vrot.lane.b32.xlu0 %v1159, 127
        %v1164 = vpop.permute.xlu0 %1163
        %1165 = vrot.lane.b32.xlu0 %v1160, 127
        %v1166 = vpop.permute.xlu0 %1165
        %v1169 = vadd.f32 %v1155, %v1164
        %v1170 = vadd.f32 %v1156, %v1166
        %s1171 = sld [smem:[#allocation6 + $0x15]]
        %v1172 = vstv %s1171
        %v1173 = vmul.f32 %v1172, %v471
        %v1174 = vmul.f32 %v1172, %v472
        %1177 = vrot.lane.b32.xlu0 %v1173, 127
        %v1178 = vpop.permute.xlu0 %1177
        %1179 = vrot.lane.b32.xlu0 %v1174, 127
        %v1180 = vpop.permute.xlu0 %1179
        %v1183 = vadd.f32 %v1169, %v1178
        %v1184 = vadd.f32 %v1170, %v1180
        %s1185 = sld [smem:[#allocation6 + $0x19]]
        %v1186 = vstv %s1185
        %v1187 = vmul.f32 %v1186, %v474
        %v1188 = vmul.f32 %v1186, %v475
        %1191 = vrot.lane.b32.xlu0 %v1187, 127
        %v1192 = vpop.permute.xlu0 %1191
        %1193 = vrot.lane.b32.xlu0 %v1188, 127
        %v1194 = vpop.permute.xlu0 %1193
        %v1197 = vadd.f32 %v1183, %v1192
        %v1198 = vadd.f32 %v1184, %v1194
        %s1199 = sld [smem:[#allocation6 + $0x1d]]
        %v1200 = vstv %s1199
        %v1201 = vmul.f32 %v1200, %v477
        %v1202 = vmul.f32 %v1200, %v478
        %1205 = vrot.lane.b32.xlu0 %v1201, 127
        %v1206 = vpop.permute.xlu0 %1205
        %1207 = vrot.lane.b32.xlu0 %v1202, 127
        %v1208 = vpop.permute.xlu0 %1207
        %v1211 = vadd.f32 %v1197, %v1206
        %v1212 = vadd.f32 %v1198, %v1208
        %s1213 = sld [smem:[#allocation6 + $0x21]]
        %v1214 = vstv %s1213
        %v1215 = vmul.f32 %v1214, %v468
        %v1216 = vmul.f32 %v1214, %v469
        %1219 = vrot.lane.b32.xlu0 %v1215, 126
        %v1220 = vpop.permute.xlu0 %1219
        %1221 = vrot.lane.b32.xlu0 %v1216, 126
        %v1222 = vpop.permute.xlu0 %1221
        %v1225 = vadd.f32 %v1211, %v1220
        %v1226 = vadd.f32 %v1212, %v1222
        %s1227 = sld [smem:[#allocation6 + $0x25]]
        %v1228 = vstv %s1227
        %v1229 = vmul.f32 %v1228, %v471
        %v1230 = vmul.f32 %v1228, %v472
        %1233 = vrot.lane.b32.xlu0 %v1229, 126
        %v1234 = vpop.permute.xlu0 %1233
        %1235 = vrot.lane.b32.xlu0 %v1230, 126
        %v1236 = vpop.permute.xlu0 %1235
        %v1239 = vadd.f32 %v1225, %v1234
        %v1240 = vadd.f32 %v1226, %v1236
        %s1241 = sld [smem:[#allocation6 + $0x29]]
        %v1242 = vstv %s1241
        %v1243 = vmul.f32 %v1242, %v474
        %v1244 = vmul.f32 %v1242, %v475
        %1247 = vrot.lane.b32.xlu0 %v1243, 126
        %v1248 = vpop.permute.xlu0 %1247
        %1249 = vrot.lane.b32.xlu0 %v1244, 126
        %v1250 = vpop.permute.xlu0 %1249
        %v1253 = vadd.f32 %v1239, %v1248
        %v1254 = vadd.f32 %v1240, %v1250
        %s1255 = sld [smem:[#allocation6 + $0x2d]]
        %v1256 = vstv %s1255
        %v1257 = vmul.f32 %v1256, %v477
        %v1258 = vmul.f32 %v1256, %v478
        %1261 = vrot.lane.b32.xlu0 %v1257, 126
        %v1262 = vpop.permute.xlu0 %1261
        %1263 = vrot.lane.b32.xlu0 %v1258, 126
        %v1264 = vpop.permute.xlu0 %1263
        %v1267 = vadd.f32 %v1253, %v1262
        %v1268 = vadd.f32 %v1254, %v1264
        %s1269 = sld [smem:[#allocation6 + $0x31]]
        %v1270 = vstv %s1269
        %v1271 = vmul.f32 %v1270, %v468
        %v1272 = vmul.f32 %v1270, %v469
        %v1273 = vmul.f32 %v1270, %v470
        %v1277 = vrot.slane %v1271, 1
        %v1278 = vrot.slane %v1272, 1
        %v1279 = vsel %vm649, %v1277, %v1278
        %v1280 = vrot.slane %v1273, 1
        %v1281 = vsel %vm649, %v1278, %v1280
        %v1284 = vadd.f32 %v1267, %v1279
        %v1285 = vadd.f32 %v1268, %v1281
        %s1286 = sld [smem:[#allocation6 + $0x35]]
        %v1287 = vstv %s1286
        %v1288 = vmul.f32 %v1287, %v471
        %v1289 = vmul.f32 %v1287, %v472
        %v1290 = vmul.f32 %v1287, %v473
        %v1294 = vrot.slane %v1288, 1
        %v1295 = vrot.slane %v1289, 1
        %v1296 = vsel %vm649, %v1294, %v1295
        %v1297 = vrot.slane %v1290, 1
        %v1298 = vsel %vm649, %v1295, %v1297
        %v1301 = vadd.f32 %v1284, %v1296
        %v1302 = vadd.f32 %v1285, %v1298
        %s1303 = sld [smem:[#allocation6 + $0x39]]
        %v1304 = vstv %s1303
        %v1305 = vmul.f32 %v1304, %v474
        %v1306 = vmul.f32 %v1304, %v475
        %v1307 = vmul.f32 %v1304, %v476
        %v1311 = vrot.slane %v1305, 1
        %v1312 = vrot.slane %v1306, 1
        %v1313 = vsel %vm649, %v1311, %v1312
        %v1314 = vrot.slane %v1307, 1
        %v1315 = vsel %vm649, %v1312, %v1314
        %v1318 = vadd.f32 %v1301, %v1313
        %v1319 = vadd.f32 %v1302, %v1315
        %s1320 = sld [smem:[#allocation6 + $0x3d]]
        %v1321 = vstv %s1320
        %v1322 = vmul.f32 %v1321, %v477
        %v1323 = vmul.f32 %v1321, %v478
        %v1324 = vmul.f32 %v1321, %v479
        %v1328 = vrot.slane %v1322, 1
        %v1329 = vrot.slane %v1323, 1
        %v1330 = vsel %vm649, %v1328, %v1329
        %v1331 = vrot.slane %v1324, 1
        %v1332 = vsel %vm649, %v1329, %v1331
        %v1335 = vadd.f32 %v1318, %v1330
        %v1336 = vadd.f32 %v1319, %v1332
        %s1337 = sld [smem:[#allocation6 + $0x41]]
        %v1338 = vstv %s1337
        %v1339 = vmul.f32 %v1338, %v468
        %v1340 = vmul.f32 %v1338, %v469
        %v1341 = vmul.f32 %v1338, %v470
        %v1345 = vrot.slane %v1339, 1
        %v1346 = vrot.slane %v1340, 1
        %v1347 = vsel %vm649, %v1345, %v1346
        %v1348 = vrot.slane %v1341, 1
        %v1349 = vsel %vm649, %v1346, %v1348
        %1350 = vrot.lane.b32.xlu0 %v1347, 127
        %v1351 = vpop.permute.xlu0 %1350
        %1352 = vrot.lane.b32.xlu0 %v1349, 127
        %v1353 = vpop.permute.xlu0 %1352
        %v1356 = vadd.f32 %v1335, %v1351
        %v1357 = vadd.f32 %v1336, %v1353
        %s1358 = sld [smem:[#allocation6 + $0x45]]
        %v1359 = vstv %s1358
        %v1360 = vmul.f32 %v1359, %v471
        %v1361 = vmul.f32 %v1359, %v472
        %v1362 = vmul.f32 %v1359, %v473
        %v1366 = vrot.slane %v1360, 1
        %v1367 = vrot.slane %v1361, 1
        %v1368 = vsel %vm649, %v1366, %v1367
        %v1369 = vrot.slane %v1362, 1
        %v1370 = vsel %vm649, %v1367, %v1369
        %1371 = vrot.lane.b32.xlu0 %v1368, 127
        %v1372 = vpop.permute.xlu0 %1371
        %1373 = vrot.lane.b32.xlu0 %v1370, 127
        %v1374 = vpop.permute.xlu0 %1373
        %v1377 = vadd.f32 %v1356, %v1372
        %v1378 = vadd.f32 %v1357, %v1374
        %s1379 = sld [smem:[#allocation6 + $0x49]]
        %v1380 = vstv %s1379
        %v1381 = vmul.f32 %v1380, %v474
        %v1382 = vmul.f32 %v1380, %v475
        %v1383 = vmul.f32 %v1380, %v476
        %v1387 = vrot.slane %v1381, 1
        %v1388 = vrot.slane %v1382, 1
        %v1389 = vsel %vm649, %v1387, %v1388
        %v1390 = vrot.slane %v1383, 1
        %v1391 = vsel %vm649, %v1388, %v1390
        %1392 = vrot.lane.b32.xlu0 %v1389, 127
        %v1393 = vpop.permute.xlu0 %1392
        %1394 = vrot.lane.b32.xlu0 %v1391, 127
        %v1395 = vpop.permute.xlu0 %1394
        %v1398 = vadd.f32 %v1377, %v1393
        %v1399 = vadd.f32 %v1378, %v1395
        %s1400 = sld [smem:[#allocation6 + $0x4d]]
        %v1401 = vstv %s1400
        %v1402 = vmul.f32 %v1401, %v477
        %v1403 = vmul.f32 %v1401, %v478
        %v1404 = vmul.f32 %v1401, %v479
        %v1408 = vrot.slane %v1402, 1
        %v1409 = vrot.slane %v1403, 1
        %v1410 = vsel %vm649, %v1408, %v1409
        %v1411 = vrot.slane %v1404, 1
        %v1412 = vsel %vm649, %v1409, %v1411
        %1413 = vrot.lane.b32.xlu0 %v1410, 127
        %v1414 = vpop.permute.xlu0 %1413
        %1415 = vrot.lane.b32.xlu0 %v1412, 127
        %v1416 = vpop.permute.xlu0 %1415
        %v1419 = vadd.f32 %v1398, %v1414
        %v1420 = vadd.f32 %v1399, %v1416
        %s1421 = sld [smem:[#allocation6 + $0x51]]
        %v1422 = vstv %s1421
        %v1423 = vmul.f32 %v1422, %v468
        %v1424 = vmul.f32 %v1422, %v469
        %v1425 = vmul.f32 %v1422, %v470
        %v1429 = vrot.slane %v1423, 1
        %v1430 = vrot.slane %v1424, 1
        %v1431 = vsel %vm649, %v1429, %v1430
        %v1432 = vrot.slane %v1425, 1
        %v1433 = vsel %vm649, %v1430, %v1432
        %1434 = vrot.lane.b32.xlu0 %v1431, 126
        %v1435 = vpop.permute.xlu0 %1434
        %1436 = vrot.lane.b32.xlu0 %v1433, 126
        %v1437 = vpop.permute.xlu0 %1436
        %v1440 = vadd.f32 %v1419, %v1435
        %v1441 = vadd.f32 %v1420, %v1437
        %s1442 = sld [smem:[#allocation6 + $0x55]]
        %v1443 = vstv %s1442
        %v1444 = vmul.f32 %v1443, %v471
        %v1445 = vmul.f32 %v1443, %v472
        %v1446 = vmul.f32 %v1443, %v473
        %v1450 = vrot.slane %v1444, 1
        %v1451 = vrot.slane %v1445, 1
        %v1452 = vsel %vm649, %v1450, %v1451
        %v1453 = vrot.slane %v1446, 1
        %v1454 = vsel %vm649, %v1451, %v1453
        %1455 = vrot.lane.b32.xlu0 %v1452, 126
        %v1456 = vpop.permute.xlu0 %1455
        %1457 = vrot.lane.b32.xlu0 %v1454, 126
        %v1458 = vpop.permute.xlu0 %1457
        %v1461 = vadd.f32 %v1440, %v1456
        %v1462 = vadd.f32 %v1441, %v1458
        %s1463 = sld [smem:[#allocation6 + $0x59]]
        %v1464 = vstv %s1463
        %v1465 = vmul.f32 %v1464, %v474
        %v1466 = vmul.f32 %v1464, %v475
        %v1467 = vmul.f32 %v1464, %v476
        %v1471 = vrot.slane %v1465, 1
        %v1472 = vrot.slane %v1466, 1
        %v1473 = vsel %vm649, %v1471, %v1472
        %v1474 = vrot.slane %v1467, 1
        %v1475 = vsel %vm649, %v1472, %v1474
        %1476 = vrot.lane.b32.xlu0 %v1473, 126
        %v1477 = vpop.permute.xlu0 %1476
        %1478 = vrot.lane.b32.xlu0 %v1475, 126
        %v1479 = vpop.permute.xlu0 %1478
        %v1482 = vadd.f32 %v1461, %v1477
        %v1483 = vadd.f32 %v1462, %v1479
        %s1484 = sld [smem:[#allocation6 + $0x5d]]
        %v1485 = vstv %s1484
        %v1486 = vmul.f32 %v1485, %v477
        %v1487 = vmul.f32 %v1485, %v478
        %v1488 = vmul.f32 %v1485, %v479
        %v1492 = vrot.slane %v1486, 1
        %v1493 = vrot.slane %v1487, 1
        %v1494 = vsel %vm649, %v1492, %v1493
        %v1495 = vrot.slane %v1488, 1
        %v1496 = vsel %vm649, %v1493, %v1495
        %1497 = vrot.lane.b32.xlu0 %v1494, 126
        %v1498 = vpop.permute.xlu0 %1497
        %1499 = vrot.lane.b32.xlu0 %v1496, 126
        %v1500 = vpop.permute.xlu0 %1499
        %v1503 = vadd.f32 %v1482, %v1498
        %v1504 = vadd.f32 %v1483, %v1500
        %s1505 = sld [smem:[#allocation6 + $0x61]]
        %v1506 = vstv %s1505
        %v1507 = vmul.f32 %v1506, %v468
        %v1508 = vmul.f32 %v1506, %v469
        %v1509 = vmul.f32 %v1506, %v470
        %v1513 = vrot.slane %v1507, 2
        %v1514 = vrot.slane %v1508, 2
        %v1515 = vsel %vm886, %v1513, %v1514
        %v1516 = vrot.slane %v1509, 2
        %v1517 = vsel %vm886, %v1514, %v1516
        %v1520 = vadd.f32 %v1503, %v1515
        %v1521 = vadd.f32 %v1504, %v1517
        %s1522 = sld [smem:[#allocation6 + $0x65]]
        %v1523 = vstv %s1522
        %v1524 = vmul.f32 %v1523, %v471
        %v1525 = vmul.f32 %v1523, %v472
        %v1526 = vmul.f32 %v1523, %v473
        %v1530 = vrot.slane %v1524, 2
        %v1531 = vrot.slane %v1525, 2
        %v1532 = vsel %vm886, %v1530, %v1531
        %v1533 = vrot.slane %v1526, 2
        %v1534 = vsel %vm886, %v1531, %v1533
        %v1537 = vadd.f32 %v1520, %v1532
        %v1538 = vadd.f32 %v1521, %v1534
        %s1539 = sld [smem:[#allocation6 + $0x69]]
        %v1540 = vstv %s1539
        %v1541 = vmul.f32 %v1540, %v474
        %v1542 = vmul.f32 %v1540, %v475
        %v1543 = vmul.f32 %v1540, %v476
        %v1547 = vrot.slane %v1541, 2
        %v1548 = vrot.slane %v1542, 2
        %v1549 = vsel %vm886, %v1547, %v1548
        %v1550 = vrot.slane %v1543, 2
        %v1551 = vsel %vm886, %v1548, %v1550
        %v1554 = vadd.f32 %v1537, %v1549
        %v1555 = vadd.f32 %v1538, %v1551
        %s1556 = sld [smem:[#allocation6 + $0x6d]]
        %v1557 = vstv %s1556
        %v1558 = vmul.f32 %v1557, %v477
        %v1559 = vmul.f32 %v1557, %v478
        %v1560 = vmul.f32 %v1557, %v479
        %v1564 = vrot.slane %v1558, 2
        %v1565 = vrot.slane %v1559, 2
        %v1566 = vsel %vm886, %v1564, %v1565
        %v1567 = vrot.slane %v1560, 2
        %v1568 = vsel %vm886, %v1565, %v1567
        %v1571 = vadd.f32 %v1554, %v1566
        %v1572 = vadd.f32 %v1555, %v1568
        %s1573 = sld [smem:[#allocation6 + $0x71]]
        %v1574 = vstv %s1573
        %v1575 = vmul.f32 %v1574, %v468
        %v1576 = vmul.f32 %v1574, %v469
        %v1577 = vmul.f32 %v1574, %v470
        %v1581 = vrot.slane %v1575, 2
        %v1582 = vrot.slane %v1576, 2
        %v1583 = vsel %vm886, %v1581, %v1582
        %v1584 = vrot.slane %v1577, 2
        %v1585 = vsel %vm886, %v1582, %v1584
        %1586 = vrot.lane.b32.xlu0 %v1583, 127
        %v1587 = vpop.permute.xlu0 %1586
        %1588 = vrot.lane.b32.xlu0 %v1585, 127
        %v1589 = vpop.permute.xlu0 %1588
        %v1592 = vadd.f32 %v1571, %v1587
        %v1593 = vadd.f32 %v1572, %v1589
        %s1594 = sld [smem:[#allocation6 + $0x75]]
        %v1595 = vstv %s1594
        %v1596 = vmul.f32 %v1595, %v471
        %v1597 = vmul.f32 %v1595, %v472
        %v1598 = vmul.f32 %v1595, %v473
        %v1602 = vrot.slane %v1596, 2
        %v1603 = vrot.slane %v1597, 2
        %v1604 = vsel %vm886, %v1602, %v1603
        %v1605 = vrot.slane %v1598, 2
        %v1606 = vsel %vm886, %v1603, %v1605
        %1607 = vrot.lane.b32.xlu0 %v1604, 127
        %v1608 = vpop.permute.xlu0 %1607
        %1609 = vrot.lane.b32.xlu0 %v1606, 127
        %v1610 = vpop.permute.xlu0 %1609
        %v1613 = vadd.f32 %v1592, %v1608
        %v1614 = vadd.f32 %v1593, %v1610
        %s1615 = sld [smem:[#allocation6 + $0x79]]
        %v1616 = vstv %s1615
        %v1617 = vmul.f32 %v1616, %v474
        %v1618 = vmul.f32 %v1616, %v475
        %v1619 = vmul.f32 %v1616, %v476
        %v1623 = vrot.slane %v1617, 2
        %v1624 = vrot.slane %v1618, 2
        %v1625 = vsel %vm886, %v1623, %v1624
        %v1626 = vrot.slane %v1619, 2
        %v1627 = vsel %vm886, %v1624, %v1626
        %1628 = vrot.lane.b32.xlu0 %v1625, 127
        %v1629 = vpop.permute.xlu0 %1628
        %1630 = vrot.lane.b32.xlu0 %v1627, 127
        %v1631 = vpop.permute.xlu0 %1630
        %v1634 = vadd.f32 %v1613, %v1629
        %v1635 = vadd.f32 %v1614, %v1631
        %s1636 = sld [smem:[#allocation6 + $0x7d]]
        %v1637 = vstv %s1636
        %v1638 = vmul.f32 %v1637, %v477
        %v1639 = vmul.f32 %v1637, %v478
        %v1640 = vmul.f32 %v1637, %v479
        %v1644 = vrot.slane %v1638, 2
        %v1645 = vrot.slane %v1639, 2
        %v1646 = vsel %vm886, %v1644, %v1645
        %v1647 = vrot.slane %v1640, 2
        %v1648 = vsel %vm886, %v1645, %v1647
        %1649 = vrot.lane.b32.xlu0 %v1646, 127
        %v1650 = vpop.permute.xlu0 %1649
        %1651 = vrot.lane.b32.xlu0 %v1648, 127
        %v1652 = vpop.permute.xlu0 %1651
        %v1655 = vadd.f32 %v1634, %v1650
        %v1656 = vadd.f32 %v1635, %v1652
        %s1657 = sld [smem:[#allocation6 + $0x81]]
        %v1658 = vstv %s1657
        %v1659 = vmul.f32 %v1658, %v468
        %v1660 = vmul.f32 %v1658, %v469
        %v1661 = vmul.f32 %v1658, %v470
        %v1665 = vrot.slane %v1659, 2
        %v1666 = vrot.slane %v1660, 2
        %v1667 = vsel %vm886, %v1665, %v1666
        %v1668 = vrot.slane %v1661, 2
        %v1669 = vsel %vm886, %v1666, %v1668
        %1670 = vrot.lane.b32.xlu0 %v1667, 126
        %v1671 = vpop.permute.xlu0 %1670
        %1672 = vrot.lane.b32.xlu0 %v1669, 126
        %v1673 = vpop.permute.xlu0 %1672
        %v1676 = vadd.f32 %v1655, %v1671
        %v1677 = vadd.f32 %v1656, %v1673
        %s1678 = sld [smem:[#allocation6 + $0x85]]
        %v1679 = vstv %s1678
        %v1680 = vmul.f32 %v1679, %v471
        %v1681 = vmul.f32 %v1679, %v472
        %v1682 = vmul.f32 %v1679, %v473
        %v1686 = vrot.slane %v1680, 2
        %v1687 = vrot.slane %v1681, 2
        %v1688 = vsel %vm886, %v1686, %v1687
        %v1689 = vrot.slane %v1682, 2
        %v1690 = vsel %vm886, %v1687, %v1689
        %1691 = vrot.lane.b32.xlu0 %v1688, 126
        %v1692 = vpop.permute.xlu0 %1691
        %1693 = vrot.lane.b32.xlu0 %v1690, 126
        %v1694 = vpop.permute.xlu0 %1693
        %v1697 = vadd.f32 %v1676, %v1692
        %v1698 = vadd.f32 %v1677, %v1694
        %s1699 = sld [smem:[#allocation6 + $0x89]]
        %v1700 = vstv %s1699
        %v1701 = vmul.f32 %v1700, %v474
        %v1702 = vmul.f32 %v1700, %v475
        %v1703 = vmul.f32 %v1700, %v476
        %v1707 = vrot.slane %v1701, 2
        %v1708 = vrot.slane %v1702, 2
        %v1709 = vsel %vm886, %v1707, %v1708
        %v1710 = vrot.slane %v1703, 2
        %v1711 = vsel %vm886, %v1708, %v1710
        %1712 = vrot.lane.b32.xlu0 %v1709, 126
        %v1713 = vpop.permute.xlu0 %1712
        %1714 = vrot.lane.b32.xlu0 %v1711, 126
        %v1715 = vpop.permute.xlu0 %1714
        %v1718 = vadd.f32 %v1697, %v1713
        %v1719 = vadd.f32 %v1698, %v1715
        %s1720 = sld [smem:[#allocation6 + $0x8d]]
        %v1721 = vstv %s1720
        %v1722 = vmul.f32 %v1721, %v477
        %v1723 = vmul.f32 %v1721, %v478
        %v1724 = vmul.f32 %v1721, %v479
        %v1728 = vrot.slane %v1722, 2
        %v1729 = vrot.slane %v1723, 2
        %v1730 = vsel %vm886, %v1728, %v1729
        %v1731 = vrot.slane %v1724, 2
        %v1732 = vsel %vm886, %v1729, %v1731
        %1733 = vrot.lane.b32.xlu0 %v1730, 126
        %v1734 = vpop.permute.xlu0 %1733
        %1735 = vrot.lane.b32.xlu0 %v1732, 126
        %v1736 = vpop.permute.xlu0 %1735
        %v1739 = vadd.f32 %v1718, %v1734
        %v1740 = vadd.f32 %v1719, %v1736
        %v1741 = vtanh.pop %v1739
        %v1742 = vtanh.pop %v1740
        %s1743 = scalar_lea.vmem %s417, 16 [#allocation12]
        %1744 = vst.msk [vmem:[%s1743] sm:$0xff] %vm1117, %v1741
        %1745 = vst.msk [vmem:[%s1743 + $0x8] sm:$0xff] %vm1117, %v1742
        %v1746 = vsub.f32 %v1741, %v490
        %v1747 = vsub.f32 %v1742, %v491
        %v1748 = vmul.f32 %v1746, %v1746
        %v1749 = vmul.f32 %v1747, %v1747
        %v1750 = vadd.f32 %v1124, %v1748
        %v1751 = vadd.f32 %v1125, %v1749
        %s1752 = sld [smem:[#allocation8 + $0x2]]
        %s1753 = sld [smem:[#allocation9 + $0x2]]
        %s1754 = smul.f32 %s1753, %s455
        %s1755 = sadd.f32 %s1752, %s1754
        %s1756 = sld [smem:[#allocation11 + $0x2]]
        %s1757 = sadd.f32 %s1755, %s1756
        %v1758 = vstv %s1757
        %s1759 = sld [smem:[#allocation6 + $0x2]]
        %v1760 = vstv %s1759
        %v1761 = vmul.f32 %v1760, %v468
        %v1762 = vmul.f32 %v1760, %v469
        %v1763 = vadd.f32 %v1758, %v1761
        %v1764 = vadd.f32 %v1758, %v1762
        %s1765 = sld [smem:[#allocation6 + $0x6]]
        %v1766 = vstv %s1765
        %v1767 = vmul.f32 %v1766, %v471
        %v1768 = vmul.f32 %v1766, %v472
        %v1769 = vadd.f32 %v1763, %v1767
        %v1770 = vadd.f32 %v1764, %v1768
        %s1771 = sld [smem:[#allocation6 + $0xa]]
        %v1772 = vstv %s1771
        %v1773 = vmul.f32 %v1772, %v474
        %v1774 = vmul.f32 %v1772, %v475
        %v1775 = vadd.f32 %v1769, %v1773
        %v1776 = vadd.f32 %v1770, %v1774
        %s1777 = sld [smem:[#allocation6 + $0xe]]
        %v1778 = vstv %s1777
        %v1779 = vmul.f32 %v1778, %v477
        %v1780 = vmul.f32 %v1778, %v478
        %v1781 = vadd.f32 %v1775, %v1779
        %v1782 = vadd.f32 %v1776, %v1780
        %s1783 = sld [smem:[#allocation6 + $0x12]]
        %v1784 = vstv %s1783
        %v1785 = vmul.f32 %v1784, %v468
        %v1786 = vmul.f32 %v1784, %v469
        %1789 = vrot.lane.b32.xlu0 %v1785, 127
        %v1790 = vpop.permute.xlu0 %1789
        %1791 = vrot.lane.b32.xlu0 %v1786, 127
        %v1792 = vpop.permute.xlu0 %1791
        %v1795 = vadd.f32 %v1781, %v1790
        %v1796 = vadd.f32 %v1782, %v1792
        %s1797 = sld [smem:[#allocation6 + $0x16]]
        %v1798 = vstv %s1797
        %v1799 = vmul.f32 %v1798, %v471
        %v1800 = vmul.f32 %v1798, %v472
        %1803 = vrot.lane.b32.xlu0 %v1799, 127
        %v1804 = vpop.permute.xlu0 %1803
        %1805 = vrot.lane.b32.xlu0 %v1800, 127
        %v1806 = vpop.permute.xlu0 %1805
        %v1809 = vadd.f32 %v1795, %v1804
        %v1810 = vadd.f32 %v1796, %v1806
        %s1811 = sld [smem:[#allocation6 + $0x1a]]
        %v1812 = vstv %s1811
        %v1813 = vmul.f32 %v1812, %v474
        %v1814 = vmul.f32 %v1812, %v475
        %1817 = vrot.lane.b32.xlu0 %v1813, 127
        %v1818 = vpop.permute.xlu0 %1817
        %1819 = vrot.lane.b32.xlu0 %v1814, 127
        %v1820 = vpop.permute.xlu0 %1819
        %v1823 = vadd.f32 %v1809, %v1818
        %v1824 = vadd.f32 %v1810, %v1820
        %s1825 = sld [smem:[#allocation6 + $0x1e]]
        %v1826 = vstv %s1825
        %v1827 = vmul.f32 %v1826, %v477
        %v1828 = vmul.f32 %v1826, %v478
        %1831 = vrot.lane.b32.xlu0 %v1827, 127
        %v1832 = vpop.permute.xlu0 %1831
        %1833 = vrot.lane.b32.xlu0 %v1828, 127
        %v1834 = vpop.permute.xlu0 %1833
        %v1837 = vadd.f32 %v1823, %v1832
        %v1838 = vadd.f32 %v1824, %v1834
        %s1839 = sld [smem:[#allocation6 + $0x22]]
        %v1840 = vstv %s1839
        %v1841 = vmul.f32 %v1840, %v468
        %v1842 = vmul.f32 %v1840, %v469
        %1845 = vrot.lane.b32.xlu0 %v1841, 126
        %v1846 = vpop.permute.xlu0 %1845
        %1847 = vrot.lane.b32.xlu0 %v1842, 126
        %v1848 = vpop.permute.xlu0 %1847
        %v1851 = vadd.f32 %v1837, %v1846
        %v1852 = vadd.f32 %v1838, %v1848
        %s1853 = sld [smem:[#allocation6 + $0x26]]
        %v1854 = vstv %s1853
        %v1855 = vmul.f32 %v1854, %v471
        %v1856 = vmul.f32 %v1854, %v472
        %1859 = vrot.lane.b32.xlu0 %v1855, 126
        %v1860 = vpop.permute.xlu0 %1859
        %1861 = vrot.lane.b32.xlu0 %v1856, 126
        %v1862 = vpop.permute.xlu0 %1861
        %v1865 = vadd.f32 %v1851, %v1860
        %v1866 = vadd.f32 %v1852, %v1862
        %s1867 = sld [smem:[#allocation6 + $0x2a]]
        %v1868 = vstv %s1867
        %v1869 = vmul.f32 %v1868, %v474
        %v1870 = vmul.f32 %v1868, %v475
        %1873 = vrot.lane.b32.xlu0 %v1869, 126
        %v1874 = vpop.permute.xlu0 %1873
        %1875 = vrot.lane.b32.xlu0 %v1870, 126
        %v1876 = vpop.permute.xlu0 %1875
        %v1879 = vadd.f32 %v1865, %v1874
        %v1880 = vadd.f32 %v1866, %v1876
        %s1881 = sld [smem:[#allocation6 + $0x2e]]
        %v1882 = vstv %s1881
        %v1883 = vmul.f32 %v1882, %v477
        %v1884 = vmul.f32 %v1882, %v478
        %1887 = vrot.lane.b32.xlu0 %v1883, 126
        %v1888 = vpop.permute.xlu0 %1887
        %1889 = vrot.lane.b32.xlu0 %v1884, 126
        %v1890 = vpop.permute.xlu0 %1889
        %v1893 = vadd.f32 %v1879, %v1888
        %v1894 = vadd.f32 %v1880, %v1890
        %s1895 = sld [smem:[#allocation6 + $0x32]]
        %v1896 = vstv %s1895
        %v1897 = vmul.f32 %v1896, %v468
        %v1898 = vmul.f32 %v1896, %v469
        %v1899 = vmul.f32 %v1896, %v470
        %v1903 = vrot.slane %v1897, 1
        %v1904 = vrot.slane %v1898, 1
        %v1905 = vsel %vm649, %v1903, %v1904
        %v1906 = vrot.slane %v1899, 1
        %v1907 = vsel %vm649, %v1904, %v1906
        %v1910 = vadd.f32 %v1893, %v1905
        %v1911 = vadd.f32 %v1894, %v1907
        %s1912 = sld [smem:[#allocation6 + $0x36]]
        %v1913 = vstv %s1912
        %v1914 = vmul.f32 %v1913, %v471
        %v1915 = vmul.f32 %v1913, %v472
        %v1916 = vmul.f32 %v1913, %v473
        %v1920 = vrot.slane %v1914, 1
        %v1921 = vrot.slane %v1915, 1
        %v1922 = vsel %vm649, %v1920, %v1921
        %v1923 = vrot.slane %v1916, 1
        %v1924 = vsel %vm649, %v1921, %v1923
        %v1927 = vadd.f32 %v1910, %v1922
        %v1928 = vadd.f32 %v1911, %v1924
        %s1929 = sld [smem:[#allocation6 + $0x3a]]
        %v1930 = vstv %s1929
        %v1931 = vmul.f32 %v1930, %v474
        %v1932 = vmul.f32 %v1930, %v475
        %v1933 = vmul.f32 %v1930, %v476
        %v1937 = vrot.slane %v1931, 1
        %v1938 = vrot.slane %v1932, 1
        %v1939 = vsel %vm649, %v1937, %v1938
        %v1940 = vrot.slane %v1933, 1
        %v1941 = vsel %vm649, %v1938, %v1940
        %v1944 = vadd.f32 %v1927, %v1939
        %v1945 = vadd.f32 %v1928, %v1941
        %s1946 = sld [smem:[#allocation6 + $0x3e]]
        %v1947 = vstv %s1946
        %v1948 = vmul.f32 %v1947, %v477
        %v1949 = vmul.f32 %v1947, %v478
        %v1950 = vmul.f32 %v1947, %v479
        %v1954 = vrot.slane %v1948, 1
        %v1955 = vrot.slane %v1949, 1
        %v1956 = vsel %vm649, %v1954, %v1955
        %v1957 = vrot.slane %v1950, 1
        %v1958 = vsel %vm649, %v1955, %v1957
        %v1961 = vadd.f32 %v1944, %v1956
        %v1962 = vadd.f32 %v1945, %v1958
        %s1963 = sld [smem:[#allocation6 + $0x42]]
        %v1964 = vstv %s1963
        %v1965 = vmul.f32 %v1964, %v468
        %v1966 = vmul.f32 %v1964, %v469
        %v1967 = vmul.f32 %v1964, %v470
        %v1971 = vrot.slane %v1965, 1
        %v1972 = vrot.slane %v1966, 1
        %v1973 = vsel %vm649, %v1971, %v1972
        %v1974 = vrot.slane %v1967, 1
        %v1975 = vsel %vm649, %v1972, %v1974
        %1976 = vrot.lane.b32.xlu0 %v1973, 127
        %v1977 = vpop.permute.xlu0 %1976
        %1978 = vrot.lane.b32.xlu0 %v1975, 127
        %v1979 = vpop.permute.xlu0 %1978
        %v1982 = vadd.f32 %v1961, %v1977
        %v1983 = vadd.f32 %v1962, %v1979
        %s1984 = sld [smem:[#allocation6 + $0x46]]
        %v1985 = vstv %s1984
        %v1986 = vmul.f32 %v1985, %v471
        %v1987 = vmul.f32 %v1985, %v472
        %v1988 = vmul.f32 %v1985, %v473
        %v1992 = vrot.slane %v1986, 1
        %v1993 = vrot.slane %v1987, 1
        %v1994 = vsel %vm649, %v1992, %v1993
        %v1995 = vrot.slane %v1988, 1
        %v1996 = vsel %vm649, %v1993, %v1995
        %1997 = vrot.lane.b32.xlu0 %v1994, 127
        %v1998 = vpop.permute.xlu0 %1997
        %1999 = vrot.lane.b32.xlu0 %v1996, 127
        %v2000 = vpop.permute.xlu0 %1999
        %v2003 = vadd.f32 %v1982, %v1998
        %v2004 = vadd.f32 %v1983, %v2000
        %s2005 = sld [smem:[#allocation6 + $0x4a]]
        %v2006 = vstv %s2005
        %v2007 = vmul.f32 %v2006, %v474
        %v2008 = vmul.f32 %v2006, %v475
        %v2009 = vmul.f32 %v2006, %v476
        %v2013 = vrot.slane %v2007, 1
        %v2014 = vrot.slane %v2008, 1
        %v2015 = vsel %vm649, %v2013, %v2014
        %v2016 = vrot.slane %v2009, 1
        %v2017 = vsel %vm649, %v2014, %v2016
        %2018 = vrot.lane.b32.xlu0 %v2015, 127
        %v2019 = vpop.permute.xlu0 %2018
        %2020 = vrot.lane.b32.xlu0 %v2017, 127
        %v2021 = vpop.permute.xlu0 %2020
        %v2024 = vadd.f32 %v2003, %v2019
        %v2025 = vadd.f32 %v2004, %v2021
        %s2026 = sld [smem:[#allocation6 + $0x4e]]
        %v2027 = vstv %s2026
        %v2028 = vmul.f32 %v2027, %v477
        %v2029 = vmul.f32 %v2027, %v478
        %v2030 = vmul.f32 %v2027, %v479
        %v2034 = vrot.slane %v2028, 1
        %v2035 = vrot.slane %v2029, 1
        %v2036 = vsel %vm649, %v2034, %v2035
        %v2037 = vrot.slane %v2030, 1
        %v2038 = vsel %vm649, %v2035, %v2037
        %2039 = vrot.lane.b32.xlu0 %v2036, 127
        %v2040 = vpop.permute.xlu0 %2039
        %2041 = vrot.lane.b32.xlu0 %v2038, 127
        %v2042 = vpop.permute.xlu0 %2041
        %v2045 = vadd.f32 %v2024, %v2040
        %v2046 = vadd.f32 %v2025, %v2042
        %s2047 = sld [smem:[#allocation6 + $0x52]]
        %v2048 = vstv %s2047
        %v2049 = vmul.f32 %v2048, %v468
        %v2050 = vmul.f32 %v2048, %v469
        %v2051 = vmul.f32 %v2048, %v470
        %v2055 = vrot.slane %v2049, 1
        %v2056 = vrot.slane %v2050, 1
        %v2057 = vsel %vm649, %v2055, %v2056
        %v2058 = vrot.slane %v2051, 1
        %v2059 = vsel %vm649, %v2056, %v2058
        %2060 = vrot.lane.b32.xlu0 %v2057, 126
        %v2061 = vpop.permute.xlu0 %2060
        %2062 = vrot.lane.b32.xlu0 %v2059, 126
        %v2063 = vpop.permute.xlu0 %2062
        %v2066 = vadd.f32 %v2045, %v2061
        %v2067 = vadd.f32 %v2046, %v2063
        %s2068 = sld [smem:[#allocation6 + $0x56]]
        %v2069 = vstv %s2068
        %v2070 = vmul.f32 %v2069, %v471
        %v2071 = vmul.f32 %v2069, %v472
        %v2072 = vmul.f32 %v2069, %v473
        %v2076 = vrot.slane %v2070, 1
        %v2077 = vrot.slane %v2071, 1
        %v2078 = vsel %vm649, %v2076, %v2077
        %v2079 = vrot.slane %v2072, 1
        %v2080 = vsel %vm649, %v2077, %v2079
        %2081 = vrot.lane.b32.xlu0 %v2078, 126
        %v2082 = vpop.permute.xlu0 %2081
        %2083 = vrot.lane.b32.xlu0 %v2080, 126
        %v2084 = vpop.permute.xlu0 %2083
        %v2087 = vadd.f32 %v2066, %v2082
        %v2088 = vadd.f32 %v2067, %v2084
        %s2089 = sld [smem:[#allocation6 + $0x5a]]
        %v2090 = vstv %s2089
        %v2091 = vmul.f32 %v2090, %v474
        %v2092 = vmul.f32 %v2090, %v475
        %v2093 = vmul.f32 %v2090, %v476
        %v2097 = vrot.slane %v2091, 1
        %v2098 = vrot.slane %v2092, 1
        %v2099 = vsel %vm649, %v2097, %v2098
        %v2100 = vrot.slane %v2093, 1
        %v2101 = vsel %vm649, %v2098, %v2100
        %2102 = vrot.lane.b32.xlu0 %v2099, 126
        %v2103 = vpop.permute.xlu0 %2102
        %2104 = vrot.lane.b32.xlu0 %v2101, 126
        %v2105 = vpop.permute.xlu0 %2104
        %v2108 = vadd.f32 %v2087, %v2103
        %v2109 = vadd.f32 %v2088, %v2105
        %s2110 = sld [smem:[#allocation6 + $0x5e]]
        %v2111 = vstv %s2110
        %v2112 = vmul.f32 %v2111, %v477
        %v2113 = vmul.f32 %v2111, %v478
        %v2114 = vmul.f32 %v2111, %v479
        %v2118 = vrot.slane %v2112, 1
        %v2119 = vrot.slane %v2113, 1
        %v2120 = vsel %vm649, %v2118, %v2119
        %v2121 = vrot.slane %v2114, 1
        %v2122 = vsel %vm649, %v2119, %v2121
        %2123 = vrot.lane.b32.xlu0 %v2120, 126
        %v2124 = vpop.permute.xlu0 %2123
        %2125 = vrot.lane.b32.xlu0 %v2122, 126
        %v2126 = vpop.permute.xlu0 %2125
        %v2129 = vadd.f32 %v2108, %v2124
        %v2130 = vadd.f32 %v2109, %v2126
        %s2131 = sld [smem:[#allocation6 + $0x62]]
        %v2132 = vstv %s2131
        %v2133 = vmul.f32 %v2132, %v468
        %v2134 = vmul.f32 %v2132, %v469
        %v2135 = vmul.f32 %v2132, %v470
        %v2139 = vrot.slane %v2133, 2
        %v2140 = vrot.slane %v2134, 2
        %v2141 = vsel %vm886, %v2139, %v2140
        %v2142 = vrot.slane %v2135, 2
        %v2143 = vsel %vm886, %v2140, %v2142
        %v2146 = vadd.f32 %v2129, %v2141
        %v2147 = vadd.f32 %v2130, %v2143
        %s2148 = sld [smem:[#allocation6 + $0x66]]
        %v2149 = vstv %s2148
        %v2150 = vmul.f32 %v2149, %v471
        %v2151 = vmul.f32 %v2149, %v472
        %v2152 = vmul.f32 %v2149, %v473
        %v2156 = vrot.slane %v2150, 2
        %v2157 = vrot.slane %v2151, 2
        %v2158 = vsel %vm886, %v2156, %v2157
        %v2159 = vrot.slane %v2152, 2
        %v2160 = vsel %vm886, %v2157, %v2159
        %v2163 = vadd.f32 %v2146, %v2158
        %v2164 = vadd.f32 %v2147, %v2160
        %s2165 = sld [smem:[#allocation6 + $0x6a]]
        %v2166 = vstv %s2165
        %v2167 = vmul.f32 %v2166, %v474
        %v2168 = vmul.f32 %v2166, %v475
        %v2169 = vmul.f32 %v2166, %v476
        %v2173 = vrot.slane %v2167, 2
        %v2174 = vrot.slane %v2168, 2
        %v2175 = vsel %vm886, %v2173, %v2174
        %v2176 = vrot.slane %v2169, 2
        %v2177 = vsel %vm886, %v2174, %v2176
        %v2180 = vadd.f32 %v2163, %v2175
        %v2181 = vadd.f32 %v2164, %v2177
        %s2182 = sld [smem:[#allocation6 + $0x6e]]
        %v2183 = vstv %s2182
        %v2184 = vmul.f32 %v2183, %v477
        %v2185 = vmul.f32 %v2183, %v478
        %v2186 = vmul.f32 %v2183, %v479
        %v2190 = vrot.slane %v2184, 2
        %v2191 = vrot.slane %v2185, 2
        %v2192 = vsel %vm886, %v2190, %v2191
        %v2193 = vrot.slane %v2186, 2
        %v2194 = vsel %vm886, %v2191, %v2193
        %v2197 = vadd.f32 %v2180, %v2192
        %v2198 = vadd.f32 %v2181, %v2194
        %s2199 = sld [smem:[#allocation6 + $0x72]]
        %v2200 = vstv %s2199
        %v2201 = vmul.f32 %v2200, %v468
        %v2202 = vmul.f32 %v2200, %v469
        %v2203 = vmul.f32 %v2200, %v470
        %v2207 = vrot.slane %v2201, 2
        %v2208 = vrot.slane %v2202, 2
        %v2209 = vsel %vm886, %v2207, %v2208
        %v2210 = vrot.slane %v2203, 2
        %v2211 = vsel %vm886, %v2208, %v2210
        %2212 = vrot.lane.b32.xlu0 %v2209, 127
        %v2213 = vpop.permute.xlu0 %2212
        %2214 = vrot.lane.b32.xlu0 %v2211, 127
        %v2215 = vpop.permute.xlu0 %2214
        %v2218 = vadd.f32 %v2197, %v2213
        %v2219 = vadd.f32 %v2198, %v2215
        %s2220 = sld [smem:[#allocation6 + $0x76]]
        %v2221 = vstv %s2220
        %v2222 = vmul.f32 %v2221, %v471
        %v2223 = vmul.f32 %v2221, %v472
        %v2224 = vmul.f32 %v2221, %v473
        %v2228 = vrot.slane %v2222, 2
        %v2229 = vrot.slane %v2223, 2
        %v2230 = vsel %vm886, %v2228, %v2229
        %v2231 = vrot.slane %v2224, 2
        %v2232 = vsel %vm886, %v2229, %v2231
        %2233 = vrot.lane.b32.xlu0 %v2230, 127
        %v2234 = vpop.permute.xlu0 %2233
        %2235 = vrot.lane.b32.xlu0 %v2232, 127
        %v2236 = vpop.permute.xlu0 %2235
        %v2239 = vadd.f32 %v2218, %v2234
        %v2240 = vadd.f32 %v2219, %v2236
        %s2241 = sld [smem:[#allocation6 + $0x7a]]
        %v2242 = vstv %s2241
        %v2243 = vmul.f32 %v2242, %v474
        %v2244 = vmul.f32 %v2242, %v475
        %v2245 = vmul.f32 %v2242, %v476
        %v2249 = vrot.slane %v2243, 2
        %v2250 = vrot.slane %v2244, 2
        %v2251 = vsel %vm886, %v2249, %v2250
        %v2252 = vrot.slane %v2245, 2
        %v2253 = vsel %vm886, %v2250, %v2252
        %2254 = vrot.lane.b32.xlu0 %v2251, 127
        %v2255 = vpop.permute.xlu0 %2254
        %2256 = vrot.lane.b32.xlu0 %v2253, 127
        %v2257 = vpop.permute.xlu0 %2256
        %v2260 = vadd.f32 %v2239, %v2255
        %v2261 = vadd.f32 %v2240, %v2257
        %s2262 = sld [smem:[#allocation6 + $0x7e]]
        %v2263 = vstv %s2262
        %v2264 = vmul.f32 %v2263, %v477
        %v2265 = vmul.f32 %v2263, %v478
        %v2266 = vmul.f32 %v2263, %v479
        %v2270 = vrot.slane %v2264, 2
        %v2271 = vrot.slane %v2265, 2
        %v2272 = vsel %vm886, %v2270, %v2271
        %v2273 = vrot.slane %v2266, 2
        %v2274 = vsel %vm886, %v2271, %v2273
        %2275 = vrot.lane.b32.xlu0 %v2272, 127
        %v2276 = vpop.permute.xlu0 %2275
        %2277 = vrot.lane.b32.xlu0 %v2274, 127
        %v2278 = vpop.permute.xlu0 %2277
        %v2281 = vadd.f32 %v2260, %v2276
        %v2282 = vadd.f32 %v2261, %v2278
        %s2283 = sld [smem:[#allocation6 + $0x82]]
        %v2284 = vstv %s2283
        %v2285 = vmul.f32 %v2284, %v468
        %v2286 = vmul.f32 %v2284, %v469
        %v2287 = vmul.f32 %v2284, %v470
        %v2291 = vrot.slane %v2285, 2
        %v2292 = vrot.slane %v2286, 2
        %v2293 = vsel %vm886, %v2291, %v2292
        %v2294 = vrot.slane %v2287, 2
        %v2295 = vsel %vm886, %v2292, %v2294
        %2296 = vrot.lane.b32.xlu0 %v2293, 126
        %v2297 = vpop.permute.xlu0 %2296
        %2298 = vrot.lane.b32.xlu0 %v2295, 126
        %v2299 = vpop.permute.xlu0 %2298
        %v2302 = vadd.f32 %v2281, %v2297
        %v2303 = vadd.f32 %v2282, %v2299
        %s2304 = sld [smem:[#allocation6 + $0x86]]
        %v2305 = vstv %s2304
        %v2306 = vmul.f32 %v2305, %v471
        %v2307 = vmul.f32 %v2305, %v472
        %v2308 = vmul.f32 %v2305, %v473
        %v2312 = vrot.slane %v2306, 2
        %v2313 = vrot.slane %v2307, 2
        %v2314 = vsel %vm886, %v2312, %v2313
        %v2315 = vrot.slane %v2308, 2
        %v2316 = vsel %vm886, %v2313, %v2315
        %2317 = vrot.lane.b32.xlu0 %v2314, 126
        %v2318 = vpop.permute.xlu0 %2317
        %2319 = vrot.lane.b32.xlu0 %v2316, 126
        %v2320 = vpop.permute.xlu0 %2319
        %v2323 = vadd.f32 %v2302, %v2318
        %v2324 = vadd.f32 %v2303, %v2320
        %s2325 = sld [smem:[#allocation6 + $0x8a]]
        %v2326 = vstv %s2325
        %v2327 = vmul.f32 %v2326, %v474
        %v2328 = vmul.f32 %v2326, %v475
        %v2329 = vmul.f32 %v2326, %v476
        %v2333 = vrot.slane %v2327, 2
        %v2334 = vrot.slane %v2328, 2
        %v2335 = vsel %vm886, %v2333, %v2334
        %v2336 = vrot.slane %v2329, 2
        %v2337 = vsel %vm886, %v2334, %v2336
        %2338 = vrot.lane.b32.xlu0 %v2335, 126
        %v2339 = vpop.permute.xlu0 %2338
        %2340 = vrot.lane.b32.xlu0 %v2337, 126
        %v2341 = vpop.permute.xlu0 %2340
        %v2344 = vadd.f32 %v2323, %v2339
        %v2345 = vadd.f32 %v2324, %v2341
        %s2346 = sld [smem:[#allocation6 + $0x8e]]
        %v2347 = vstv %s2346
        %v2348 = vmul.f32 %v2347, %v477
        %v2349 = vmul.f32 %v2347, %v478
        %v2350 = vmul.f32 %v2347, %v479
        %v2354 = vrot.slane %v2348, 2
        %v2355 = vrot.slane %v2349, 2
        %v2356 = vsel %vm886, %v2354, %v2355
        %v2357 = vrot.slane %v2350, 2
        %v2358 = vsel %vm886, %v2355, %v2357
        %2359 = vrot.lane.b32.xlu0 %v2356, 126
        %v2360 = vpop.permute.xlu0 %2359
        %2361 = vrot.lane.b32.xlu0 %v2358, 126
        %v2362 = vpop.permute.xlu0 %2361
        %v2365 = vadd.f32 %v2344, %v2360
        %v2366 = vadd.f32 %v2345, %v2362
        %v2367 = vtanh.pop %v2365
        %v2368 = vtanh.pop %v2366
        %s2369 = scalar_lea.vmem %s417, 32 [#allocation12]
        %2370 = vst.msk [vmem:[%s2369] sm:$0xff] %vm1117, %v2367
        %2371 = vst.msk [vmem:[%s2369 + $0x8] sm:$0xff] %vm1117, %v2368
        %v2372 = vsub.f32 %v2367, %v492
        %v2373 = vsub.f32 %v2368, %v493
        %v2374 = vmul.f32 %v2372, %v2372
        %v2375 = vmul.f32 %v2373, %v2373
        %v2376 = vadd.f32 %v1750, %v2374
        %v2377 = vadd.f32 %v1751, %v2375
        %s2378 = sld [smem:[#allocation8 + $0x3]]
        %s2379 = sld [smem:[#allocation9 + $0x3]]
        %s2380 = smul.f32 %s2379, %s455
        %s2381 = sadd.f32 %s2378, %s2380
        %s2382 = sld [smem:[#allocation11 + $0x3]]
        %s2383 = sadd.f32 %s2381, %s2382
        %v2384 = vstv %s2383
        %s2385 = sld [smem:[#allocation6 + $0x3]]
        %v2386 = vstv %s2385
        %v2387 = vmul.f32 %v2386, %v468
        %v2388 = vmul.f32 %v2386, %v469
        %v2389 = vadd.f32 %v2384, %v2387
        %v2390 = vadd.f32 %v2384, %v2388
        %s2391 = sld [smem:[#allocation6 + $0x7]]
        %v2392 = vstv %s2391
        %v2393 = vmul.f32 %v2392, %v471
        %v2394 = vmul.f32 %v2392, %v472
        %v2395 = vadd.f32 %v2389, %v2393
        %v2396 = vadd.f32 %v2390, %v2394
        %s2397 = sld [smem:[#allocation6 + $0xb]]
        %v2398 = vstv %s2397
        %v2399 = vmul.f32 %v2398, %v474
        %v2400 = vmul.f32 %v2398, %v475
        %v2401 = vadd.f32 %v2395, %v2399
        %v2402 = vadd.f32 %v2396, %v2400
        %s2403 = sld [smem:[#allocation6 + $0xf]]
        %v2404 = vstv %s2403
        %v2405 = vmul.f32 %v2404, %v477
        %v2406 = vmul.f32 %v2404, %v478
        %v2407 = vadd.f32 %v2401, %v2405
        %v2408 = vadd.f32 %v2402, %v2406
        %s2409 = sld [smem:[#allocation6 + $0x13]]
        %v2410 = vstv %s2409
        %v2411 = vmul.f32 %v2410, %v468
        %v2412 = vmul.f32 %v2410, %v469
        %2415 = vrot.lane.b32.xlu0 %v2411, 127
        %v2416 = vpop.permute.xlu0 %2415
        %2417 = vrot.lane.b32.xlu0 %v2412, 127
        %v2418 = vpop.permute.xlu0 %2417
        %v2421 = vadd.f32 %v2407, %v2416
        %v2422 = vadd.f32 %v2408, %v2418
        %s2423 = sld [smem:[#allocation6 + $0x17]]
        %v2424 = vstv %s2423
        %v2425 = vmul.f32 %v2424, %v471
        %v2426 = vmul.f32 %v2424, %v472
        %2429 = vrot.lane.b32.xlu0 %v2425, 127
        %v2430 = vpop.permute.xlu0 %2429
        %2431 = vrot.lane.b32.xlu0 %v2426, 127
        %v2432 = vpop.permute.xlu0 %2431
        %v2435 = vadd.f32 %v2421, %v2430
        %v2436 = vadd.f32 %v2422, %v2432
        %s2437 = sld [smem:[#allocation6 + $0x1b]]
        %v2438 = vstv %s2437
        %v2439 = vmul.f32 %v2438, %v474
        %v2440 = vmul.f32 %v2438, %v475
        %2443 = vrot.lane.b32.xlu0 %v2439, 127
        %v2444 = vpop.permute.xlu0 %2443
        %2445 = vrot.lane.b32.xlu0 %v2440, 127
        %v2446 = vpop.permute.xlu0 %2445
        %v2449 = vadd.f32 %v2435, %v2444
        %v2450 = vadd.f32 %v2436, %v2446
        %s2451 = sld [smem:[#allocation6 + $0x1f]]
        %v2452 = vstv %s2451
        %v2453 = vmul.f32 %v2452, %v477
        %v2454 = vmul.f32 %v2452, %v478
        %2457 = vrot.lane.b32.xlu0 %v2453, 127
        %v2458 = vpop.permute.xlu0 %2457
        %2459 = vrot.lane.b32.xlu0 %v2454, 127
        %v2460 = vpop.permute.xlu0 %2459
        %v2463 = vadd.f32 %v2449, %v2458
        %v2464 = vadd.f32 %v2450, %v2460
        %s2465 = sld [smem:[#allocation6 + $0x23]]
        %v2466 = vstv %s2465
        %v2467 = vmul.f32 %v2466, %v468
        %v2468 = vmul.f32 %v2466, %v469
        %2471 = vrot.lane.b32.xlu0 %v2467, 126
        %v2472 = vpop.permute.xlu0 %2471
        %2473 = vrot.lane.b32.xlu0 %v2468, 126
        %v2474 = vpop.permute.xlu0 %2473
        %v2477 = vadd.f32 %v2463, %v2472
        %v2478 = vadd.f32 %v2464, %v2474
        %s2479 = sld [smem:[#allocation6 + $0x27]]
        %v2480 = vstv %s2479
        %v2481 = vmul.f32 %v2480, %v471
        %v2482 = vmul.f32 %v2480, %v472
        %2485 = vrot.lane.b32.xlu0 %v2481, 126
        %v2486 = vpop.permute.xlu0 %2485
        %2487 = vrot.lane.b32.xlu0 %v2482, 126
        %v2488 = vpop.permute.xlu0 %2487
        %v2491 = vadd.f32 %v2477, %v2486
        %v2492 = vadd.f32 %v2478, %v2488
        %s2493 = sld [smem:[#allocation6 + $0x2b]]
        %v2494 = vstv %s2493
        %v2495 = vmul.f32 %v2494, %v474
        %v2496 = vmul.f32 %v2494, %v475
        %2499 = vrot.lane.b32.xlu0 %v2495, 126
        %v2500 = vpop.permute.xlu0 %2499
        %2501 = vrot.lane.b32.xlu0 %v2496, 126
        %v2502 = vpop.permute.xlu0 %2501
        %v2505 = vadd.f32 %v2491, %v2500
        %v2506 = vadd.f32 %v2492, %v2502
        %s2507 = sld [smem:[#allocation6 + $0x2f]]
        %v2508 = vstv %s2507
        %v2509 = vmul.f32 %v2508, %v477
        %v2510 = vmul.f32 %v2508, %v478
        %2513 = vrot.lane.b32.xlu0 %v2509, 126
        %v2514 = vpop.permute.xlu0 %2513
        %2515 = vrot.lane.b32.xlu0 %v2510, 126
        %v2516 = vpop.permute.xlu0 %2515
        %v2519 = vadd.f32 %v2505, %v2514
        %v2520 = vadd.f32 %v2506, %v2516
        %s2521 = sld [smem:[#allocation6 + $0x33]]
        %v2522 = vstv %s2521
        %v2523 = vmul.f32 %v2522, %v468
        %v2524 = vmul.f32 %v2522, %v469
        %v2525 = vmul.f32 %v2522, %v470
        %v2529 = vrot.slane %v2523, 1
        %v2530 = vrot.slane %v2524, 1
        %v2531 = vsel %vm649, %v2529, %v2530
        %v2532 = vrot.slane %v2525, 1
        %v2533 = vsel %vm649, %v2530, %v2532
        %v2536 = vadd.f32 %v2519, %v2531
        %v2537 = vadd.f32 %v2520, %v2533
        %s2538 = sld [smem:[#allocation6 + $0x37]]
        %v2539 = vstv %s2538
        %v2540 = vmul.f32 %v2539, %v471
        %v2541 = vmul.f32 %v2539, %v472
        %v2542 = vmul.f32 %v2539, %v473
        %v2546 = vrot.slane %v2540, 1
        %v2547 = vrot.slane %v2541, 1
        %v2548 = vsel %vm649, %v2546, %v2547
        %v2549 = vrot.slane %v2542, 1
        %v2550 = vsel %vm649, %v2547, %v2549
        %v2553 = vadd.f32 %v2536, %v2548
        %v2554 = vadd.f32 %v2537, %v2550
        %s2555 = sld [smem:[#allocation6 + $0x3b]]
        %v2556 = vstv %s2555
        %v2557 = vmul.f32 %v2556, %v474
        %v2558 = vmul.f32 %v2556, %v475
        %v2559 = vmul.f32 %v2556, %v476
        %v2563 = vrot.slane %v2557, 1
        %v2564 = vrot.slane %v2558, 1
        %v2565 = vsel %vm649, %v2563, %v2564
        %v2566 = vrot.slane %v2559, 1
        %v2567 = vsel %vm649, %v2564, %v2566
        %v2570 = vadd.f32 %v2553, %v2565
        %v2571 = vadd.f32 %v2554, %v2567
        %s2572 = sld [smem:[#allocation6 + $0x3f]]
        %v2573 = vstv %s2572
        %v2574 = vmul.f32 %v2573, %v477
        %v2575 = vmul.f32 %v2573, %v478
        %v2576 = vmul.f32 %v2573, %v479
        %v2580 = vrot.slane %v2574, 1
        %v2581 = vrot.slane %v2575, 1
        %v2582 = vsel %vm649, %v2580, %v2581
        %v2583 = vrot.slane %v2576, 1
        %v2584 = vsel %vm649, %v2581, %v2583
        %v2587 = vadd.f32 %v2570, %v2582
        %v2588 = vadd.f32 %v2571, %v2584
        %s2589 = sld [smem:[#allocation6 + $0x43]]
        %v2590 = vstv %s2589
        %v2591 = vmul.f32 %v2590, %v468
        %v2592 = vmul.f32 %v2590, %v469
        %v2593 = vmul.f32 %v2590, %v470
        %v2597 = vrot.slane %v2591, 1
        %v2598 = vrot.slane %v2592, 1
        %v2599 = vsel %vm649, %v2597, %v2598
        %v2600 = vrot.slane %v2593, 1
        %v2601 = vsel %vm649, %v2598, %v2600
        %2602 = vrot.lane.b32.xlu0 %v2599, 127
        %v2603 = vpop.permute.xlu0 %2602
        %2604 = vrot.lane.b32.xlu0 %v2601, 127
        %v2605 = vpop.permute.xlu0 %2604
        %v2608 = vadd.f32 %v2587, %v2603
        %v2609 = vadd.f32 %v2588, %v2605
        %s2610 = sld [smem:[#allocation6 + $0x47]]
        %v2611 = vstv %s2610
        %v2612 = vmul.f32 %v2611, %v471
        %v2613 = vmul.f32 %v2611, %v472
        %v2614 = vmul.f32 %v2611, %v473
        %v2618 = vrot.slane %v2612, 1
        %v2619 = vrot.slane %v2613, 1
        %v2620 = vsel %vm649, %v2618, %v2619
        %v2621 = vrot.slane %v2614, 1
        %v2622 = vsel %vm649, %v2619, %v2621
        %2623 = vrot.lane.b32.xlu0 %v2620, 127
        %v2624 = vpop.permute.xlu0 %2623
        %2625 = vrot.lane.b32.xlu0 %v2622, 127
        %v2626 = vpop.permute.xlu0 %2625
        %v2629 = vadd.f32 %v2608, %v2624
        %v2630 = vadd.f32 %v2609, %v2626
        %s2631 = sld [smem:[#allocation6 + $0x4b]]
        %v2632 = vstv %s2631
        %v2633 = vmul.f32 %v2632, %v474
        %v2634 = vmul.f32 %v2632, %v475
        %v2635 = vmul.f32 %v2632, %v476
        %v2639 = vrot.slane %v2633, 1
        %v2640 = vrot.slane %v2634, 1
        %v2641 = vsel %vm649, %v2639, %v2640
        %v2642 = vrot.slane %v2635, 1
        %v2643 = vsel %vm649, %v2640, %v2642
        %2644 = vrot.lane.b32.xlu0 %v2641, 127
        %v2645 = vpop.permute.xlu0 %2644
        %2646 = vrot.lane.b32.xlu0 %v2643, 127
        %v2647 = vpop.permute.xlu0 %2646
        %v2650 = vadd.f32 %v2629, %v2645
        %v2651 = vadd.f32 %v2630, %v2647
        %s2652 = sld [smem:[#allocation6 + $0x4f]]
        %v2653 = vstv %s2652
        %v2654 = vmul.f32 %v2653, %v477
        %v2655 = vmul.f32 %v2653, %v478
        %v2656 = vmul.f32 %v2653, %v479
        %v2660 = vrot.slane %v2654, 1
        %v2661 = vrot.slane %v2655, 1
        %v2662 = vsel %vm649, %v2660, %v2661
        %v2663 = vrot.slane %v2656, 1
        %v2664 = vsel %vm649, %v2661, %v2663
        %2665 = vrot.lane.b32.xlu0 %v2662, 127
        %v2666 = vpop.permute.xlu0 %2665
        %2667 = vrot.lane.b32.xlu0 %v2664, 127
        %v2668 = vpop.permute.xlu0 %2667
        %v2671 = vadd.f32 %v2650, %v2666
        %v2672 = vadd.f32 %v2651, %v2668
        %s2673 = sld [smem:[#allocation6 + $0x53]]
        %v2674 = vstv %s2673
        %v2675 = vmul.f32 %v2674, %v468
        %v2676 = vmul.f32 %v2674, %v469
        %v2677 = vmul.f32 %v2674, %v470
        %v2681 = vrot.slane %v2675, 1
        %v2682 = vrot.slane %v2676, 1
        %v2683 = vsel %vm649, %v2681, %v2682
        %v2684 = vrot.slane %v2677, 1
        %v2685 = vsel %vm649, %v2682, %v2684
        %2686 = vrot.lane.b32.xlu0 %v2683, 126
        %v2687 = vpop.permute.xlu0 %2686
        %2688 = vrot.lane.b32.xlu0 %v2685, 126
        %v2689 = vpop.permute.xlu0 %2688
        %v2692 = vadd.f32 %v2671, %v2687
        %v2693 = vadd.f32 %v2672, %v2689
        %s2694 = sld [smem:[#allocation6 + $0x57]]
        %v2695 = vstv %s2694
        %v2696 = vmul.f32 %v2695, %v471
        %v2697 = vmul.f32 %v2695, %v472
        %v2698 = vmul.f32 %v2695, %v473
        %v2702 = vrot.slane %v2696, 1
        %v2703 = vrot.slane %v2697, 1
        %v2704 = vsel %vm649, %v2702, %v2703
        %v2705 = vrot.slane %v2698, 1
        %v2706 = vsel %vm649, %v2703, %v2705
        %2707 = vrot.lane.b32.xlu0 %v2704, 126
        %v2708 = vpop.permute.xlu0 %2707
        %2709 = vrot.lane.b32.xlu0 %v2706, 126
        %v2710 = vpop.permute.xlu0 %2709
        %v2713 = vadd.f32 %v2692, %v2708
        %v2714 = vadd.f32 %v2693, %v2710
        %s2715 = sld [smem:[#allocation6 + $0x5b]]
        %v2716 = vstv %s2715
        %v2717 = vmul.f32 %v2716, %v474
        %v2718 = vmul.f32 %v2716, %v475
        %v2719 = vmul.f32 %v2716, %v476
        %v2723 = vrot.slane %v2717, 1
        %v2724 = vrot.slane %v2718, 1
        %v2725 = vsel %vm649, %v2723, %v2724
        %v2726 = vrot.slane %v2719, 1
        %v2727 = vsel %vm649, %v2724, %v2726
        %2728 = vrot.lane.b32.xlu0 %v2725, 126
        %v2729 = vpop.permute.xlu0 %2728
        %2730 = vrot.lane.b32.xlu0 %v2727, 126
        %v2731 = vpop.permute.xlu0 %2730
        %v2734 = vadd.f32 %v2713, %v2729
        %v2735 = vadd.f32 %v2714, %v2731
        %s2736 = sld [smem:[#allocation6 + $0x5f]]
        %v2737 = vstv %s2736
        %v2738 = vmul.f32 %v2737, %v477
        %v2739 = vmul.f32 %v2737, %v478
        %v2740 = vmul.f32 %v2737, %v479
        %v2744 = vrot.slane %v2738, 1
        %v2745 = vrot.slane %v2739, 1
        %v2746 = vsel %vm649, %v2744, %v2745
        %v2747 = vrot.slane %v2740, 1
        %v2748 = vsel %vm649, %v2745, %v2747
        %2749 = vrot.lane.b32.xlu0 %v2746, 126
        %v2750 = vpop.permute.xlu0 %2749
        %2751 = vrot.lane.b32.xlu0 %v2748, 126
        %v2752 = vpop.permute.xlu0 %2751
        %v2755 = vadd.f32 %v2734, %v2750
        %v2756 = vadd.f32 %v2735, %v2752
        %s2757 = sld [smem:[#allocation6 + $0x63]]
        %v2758 = vstv %s2757
        %v2759 = vmul.f32 %v2758, %v468
        %v2760 = vmul.f32 %v2758, %v469
        %v2761 = vmul.f32 %v2758, %v470
        %v2765 = vrot.slane %v2759, 2
        %v2766 = vrot.slane %v2760, 2
        %v2767 = vsel %vm886, %v2765, %v2766
        %v2768 = vrot.slane %v2761, 2
        %v2769 = vsel %vm886, %v2766, %v2768
        %v2772 = vadd.f32 %v2755, %v2767
        %v2773 = vadd.f32 %v2756, %v2769
        %s2774 = sld [smem:[#allocation6 + $0x67]]
        %v2775 = vstv %s2774
        %v2776 = vmul.f32 %v2775, %v471
        %v2777 = vmul.f32 %v2775, %v472
        %v2778 = vmul.f32 %v2775, %v473
        %v2782 = vrot.slane %v2776, 2
        %v2783 = vrot.slane %v2777, 2
        %v2784 = vsel %vm886, %v2782, %v2783
        %v2785 = vrot.slane %v2778, 2
        %v2786 = vsel %vm886, %v2783, %v2785
        %v2789 = vadd.f32 %v2772, %v2784
        %v2790 = vadd.f32 %v2773, %v2786
        %s2791 = sld [smem:[#allocation6 + $0x6b]]
        %v2792 = vstv %s2791
        %v2793 = vmul.f32 %v2792, %v474
        %v2794 = vmul.f32 %v2792, %v475
        %v2795 = vmul.f32 %v2792, %v476
        %v2799 = vrot.slane %v2793, 2
        %v2800 = vrot.slane %v2794, 2
        %v2801 = vsel %vm886, %v2799, %v2800
        %v2802 = vrot.slane %v2795, 2
        %v2803 = vsel %vm886, %v2800, %v2802
        %v2806 = vadd.f32 %v2789, %v2801
        %v2807 = vadd.f32 %v2790, %v2803
        %s2808 = sld [smem:[#allocation6 + $0x6f]]
        %v2809 = vstv %s2808
        %v2810 = vmul.f32 %v2809, %v477
        %v2811 = vmul.f32 %v2809, %v478
        %v2812 = vmul.f32 %v2809, %v479
        %v2816 = vrot.slane %v2810, 2
        %v2817 = vrot.slane %v2811, 2
        %v2818 = vsel %vm886, %v2816, %v2817
        %v2819 = vrot.slane %v2812, 2
        %v2820 = vsel %vm886, %v2817, %v2819
        %v2823 = vadd.f32 %v2806, %v2818
        %v2824 = vadd.f32 %v2807, %v2820
        %s2825 = sld [smem:[#allocation6 + $0x73]]
        %v2826 = vstv %s2825
        %v2827 = vmul.f32 %v2826, %v468
        %v2828 = vmul.f32 %v2826, %v469
        %v2829 = vmul.f32 %v2826, %v470
        %v2833 = vrot.slane %v2827, 2
        %v2834 = vrot.slane %v2828, 2
        %v2835 = vsel %vm886, %v2833, %v2834
        %v2836 = vrot.slane %v2829, 2
        %v2837 = vsel %vm886, %v2834, %v2836
        %2838 = vrot.lane.b32.xlu0 %v2835, 127
        %v2839 = vpop.permute.xlu0 %2838
        %2840 = vrot.lane.b32.xlu0 %v2837, 127
        %v2841 = vpop.permute.xlu0 %2840
        %v2844 = vadd.f32 %v2823, %v2839
        %v2845 = vadd.f32 %v2824, %v2841
        %s2846 = sld [smem:[#allocation6 + $0x77]]
        %v2847 = vstv %s2846
        %v2848 = vmul.f32 %v2847, %v471
        %v2849 = vmul.f32 %v2847, %v472
        %v2850 = vmul.f32 %v2847, %v473
        %v2854 = vrot.slane %v2848, 2
        %v2855 = vrot.slane %v2849, 2
        %v2856 = vsel %vm886, %v2854, %v2855
        %v2857 = vrot.slane %v2850, 2
        %v2858 = vsel %vm886, %v2855, %v2857
        %2859 = vrot.lane.b32.xlu0 %v2856, 127
        %v2860 = vpop.permute.xlu0 %2859
        %2861 = vrot.lane.b32.xlu0 %v2858, 127
        %v2862 = vpop.permute.xlu0 %2861
        %v2865 = vadd.f32 %v2844, %v2860
        %v2866 = vadd.f32 %v2845, %v2862
        %s2867 = sld [smem:[#allocation6 + $0x7b]]
        %v2868 = vstv %s2867
        %v2869 = vmul.f32 %v2868, %v474
        %v2870 = vmul.f32 %v2868, %v475
        %v2871 = vmul.f32 %v2868, %v476
        %v2875 = vrot.slane %v2869, 2
        %v2876 = vrot.slane %v2870, 2
        %v2877 = vsel %vm886, %v2875, %v2876
        %v2878 = vrot.slane %v2871, 2
        %v2879 = vsel %vm886, %v2876, %v2878
        %2880 = vrot.lane.b32.xlu0 %v2877, 127
        %v2881 = vpop.permute.xlu0 %2880
        %2882 = vrot.lane.b32.xlu0 %v2879, 127
        %v2883 = vpop.permute.xlu0 %2882
        %v2886 = vadd.f32 %v2865, %v2881
        %v2887 = vadd.f32 %v2866, %v2883
        %s2888 = sld [smem:[#allocation6 + $0x7f]]
        %v2889 = vstv %s2888
        %v2890 = vmul.f32 %v2889, %v477
        %v2891 = vmul.f32 %v2889, %v478
        %v2892 = vmul.f32 %v2889, %v479
        %v2896 = vrot.slane %v2890, 2
        %v2897 = vrot.slane %v2891, 2
        %v2898 = vsel %vm886, %v2896, %v2897
        %v2899 = vrot.slane %v2892, 2
        %v2900 = vsel %vm886, %v2897, %v2899
        %2901 = vrot.lane.b32.xlu0 %v2898, 127
        %v2902 = vpop.permute.xlu0 %2901
        %2903 = vrot.lane.b32.xlu0 %v2900, 127
        %v2904 = vpop.permute.xlu0 %2903
        %v2907 = vadd.f32 %v2886, %v2902
        %v2908 = vadd.f32 %v2887, %v2904
        %s2909 = sld [smem:[#allocation6 + $0x83]]
        %v2910 = vstv %s2909
        %v2911 = vmul.f32 %v2910, %v468
        %v2912 = vmul.f32 %v2910, %v469
        %v2913 = vmul.f32 %v2910, %v470
        %v2917 = vrot.slane %v2911, 2
        %v2918 = vrot.slane %v2912, 2
        %v2919 = vsel %vm886, %v2917, %v2918
        %v2920 = vrot.slane %v2913, 2
        %v2921 = vsel %vm886, %v2918, %v2920
        %2922 = vrot.lane.b32.xlu0 %v2919, 126
        %v2923 = vpop.permute.xlu0 %2922
        %2924 = vrot.lane.b32.xlu0 %v2921, 126
        %v2925 = vpop.permute.xlu0 %2924
        %v2928 = vadd.f32 %v2907, %v2923
        %v2929 = vadd.f32 %v2908, %v2925
        %s2930 = sld [smem:[#allocation6 + $0x87]]
        %v2931 = vstv %s2930
        %v2932 = vmul.f32 %v2931, %v471
        %v2933 = vmul.f32 %v2931, %v472
        %v2934 = vmul.f32 %v2931, %v473
        %v2938 = vrot.slane %v2932, 2
        %v2939 = vrot.slane %v2933, 2
        %v2940 = vsel %vm886, %v2938, %v2939
        %v2941 = vrot.slane %v2934, 2
        %v2942 = vsel %vm886, %v2939, %v2941
        %2943 = vrot.lane.b32.xlu0 %v2940, 126
        %v2944 = vpop.permute.xlu0 %2943
        %2945 = vrot.lane.b32.xlu0 %v2942, 126
        %v2946 = vpop.permute.xlu0 %2945
        %v2949 = vadd.f32 %v2928, %v2944
        %v2950 = vadd.f32 %v2929, %v2946
        %s2951 = sld [smem:[#allocation6 + $0x8b]]
        %v2952 = vstv %s2951
        %v2953 = vmul.f32 %v2952, %v474
        %v2954 = vmul.f32 %v2952, %v475
        %v2955 = vmul.f32 %v2952, %v476
        %v2959 = vrot.slane %v2953, 2
        %v2960 = vrot.slane %v2954, 2
        %v2961 = vsel %vm886, %v2959, %v2960
        %v2962 = vrot.slane %v2955, 2
        %v2963 = vsel %vm886, %v2960, %v2962
        %2964 = vrot.lane.b32.xlu0 %v2961, 126
        %v2965 = vpop.permute.xlu0 %2964
        %2966 = vrot.lane.b32.xlu0 %v2963, 126
        %v2967 = vpop.permute.xlu0 %2966
        %v2970 = vadd.f32 %v2949, %v2965
        %v2971 = vadd.f32 %v2950, %v2967
        %s2972 = sld [smem:[#allocation6 + $0x8f]]
        %v2973 = vstv %s2972
        %v2974 = vmul.f32 %v2973, %v477
        %v2975 = vmul.f32 %v2973, %v478
        %v2976 = vmul.f32 %v2973, %v479
        %v2980 = vrot.slane %v2974, 2
        %v2981 = vrot.slane %v2975, 2
        %v2982 = vsel %vm886, %v2980, %v2981
        %v2983 = vrot.slane %v2976, 2
        %v2984 = vsel %vm886, %v2981, %v2983
        %2985 = vrot.lane.b32.xlu0 %v2982, 126
        %v2986 = vpop.permute.xlu0 %2985
        %2987 = vrot.lane.b32.xlu0 %v2984, 126
        %v2988 = vpop.permute.xlu0 %2987
        %v2991 = vadd.f32 %v2970, %v2986
        %v2992 = vadd.f32 %v2971, %v2988
        %v2993 = vtanh.pop %v2991
        %v2994 = vtanh.pop %v2992
        %s2995 = scalar_lea.vmem %s417, 48 [#allocation12]
        %2996 = vst.msk [vmem:[%s2995] sm:$0xff] %vm1117, %v2993
        %2997 = vst.msk [vmem:[%s2995 + $0x8] sm:$0xff] %vm1117, %v2994
        %v2998 = vsub.f32 %v2993, %v494
        %v2999 = vsub.f32 %v2994, %v495
        %v3000 = vmul.f32 %v2998, %v2998
        %v3001 = vmul.f32 %v2999, %v2999
        %v3002 = vadd.f32 %v2376, %v3000
        %v3003 = vadd.f32 %v2377, %v3001
        %3004 = vst.msk [vmem:[#allocation2] sm:$0xff] %vm1117, %v3002
        %3005 = vst.msk [vmem:[#allocation2 + $0x8] sm:$0xff] %vm1117, %v3003
        %p3006 = scmp.eq.s32.totalorder %s31, 2
        // Predicated region
        $region73: #{tpu_custom_call.1} parent=47 // pred_check
          %p3007 = pneg %p3006
        $region74: #{tpu_custom_call.1} parent=47 // pred_check_branch
          %3009 = sbr.rel (%p3007) target = $region76
        $region75: #{tpu_custom_call.1} parent=47 // pred_region
          %v3010 = vld [vmem:[#allocation2] sm:$0xff]
          %v3011 = vld [vmem:[#allocation2 + $0x8] sm:$0xff]
          %v3012 = vsel %vm1117, %v3010, 0.0
          %v3013 = vsel %vm1117, %v3011, 0.0
          %v3014 = vadd.f32 %v3012, %v3013
          %3015 = vadd.xlane.f32.xlu0 %v3014
          %v3016 = vpop.xlane.xlu0 %3015
          %v3017 = vrot.slane %v3016, 4
          %v3018 = vadd.f32 %v3016, %v3017
          %v3019 = vrot.slane %v3018, 2
          %v3020 = vadd.f32 %v3018, %v3019
          %v3021 = vrot.slane %v3020, 1
          %v3022 = vadd.f32 %v3020, %v3021
          %s3023 = vtos %v3022
          %v3024 = vstv %s3023
          %vm3025 = vcmask 0
          %3026 = vst.msk [vmem:[%s445] sm:$0x1] %vm3025, %v3024
        $region76: #{tpu_custom_call.1} parent=47 // pred_fallthru
          _
        %s3027 = sand.u32 %s211, 1
        %s3028 = scalar_lea.sflag [#allocation4], %s3027
        %s3029 = sand.u32 %s211, 1
        %s3030 = smul.addr %s3029, 64
        %s3031 = scalar_lea.vmem [#allocation12], %s3030
        %p3032 = scmp.lt.s32.totalorder %s30, 1
        %s3033 = scalar_select %p3032, %s30, 1
        %s3034 = scalar_lea.vmem %s8, %s3033
        // Predicated region
        $region77: #{tpu_custom_call.1} parent=47 // pred_check
          %p3035 = pneg %p221
        $region78: #{tpu_custom_call.1} parent=47 // pred_check_branch
          %3037 = sbr.rel (%p3035) target = $region80
        $region79: #{tpu_custom_call.1} parent=47 // pred_region
          %s3039 = ssub.s32 1024, 1024
          %3040 = vsyncadd %s3028, %s3039
          %s3041 = smul.addr %s30, 8
          %s3042 = smul.addr %s31, 16
          %s3043 = sadd.s32 %s3041, %s3042
          %s3044 = smul.addr %s3043, 128
          %s3045 = scalar_lea.hbm %s7, %s3044
          %s3046 = sshll.u32 %s3031, 4
          %s3047 = int_to_ptr.vmem [resolvable:$true] %s3046
          %3052 = dma.vmem_to_hbm [thread:$0]  %s3047, 1024, %s3045, %s3028, 128, 128, 8
        $region80: #{tpu_custom_call.1} parent=47 // pred_fallthru
          _
        // Predicated region
        $region81: #{tpu_custom_call.1} parent=47 // pred_check
          %p3053 = pneg %p247
        $region82: #{tpu_custom_call.1} parent=47 // pred_check_branch
          %3055 = sbr.rel (%p3053) target = $region84
        $region83: #{tpu_custom_call.1} parent=47 // pred_region
          _
        $region84: #{tpu_custom_call.1} parent=47 // pred_fallthru
          _
      $region48: #{tpu_custom_call.1} parent=5 // pred_fallthru
        _
      %p3056 = scmp.le.s32.totalorder 2, %s21
      // Predicated region
      $region85: #{tpu_custom_call.1} parent=5 // pred_check
        %p3057 = pneg %p3056
      $region86: #{tpu_custom_call.1} parent=5 // pred_check_branch
        %3059 = sbr.rel (%p3057) target = $region88
      $region87: #{tpu_custom_call.1} parent=5 // pred_region
        %s3060 = ssub.s32 %s21, 2
        // Predicated region
        $region89: #{tpu_custom_call.1} parent=87 // pred_check
          %p3061 = pneg %p227
        $region90: #{tpu_custom_call.1} parent=87 // pred_check_branch
          %3063 = sbr.rel (%p3061) target = $region92
        $region91: #{tpu_custom_call.1} parent=87 // pred_region
          %s3064 = sand.u32 %s212, 1
          %s3065 = scalar_lea.sflag [#allocation4], %s3064
          %s3066 = sand.u32 %s212, 1
          %s3067 = smul.addr %s3066, 64
          %s3068 = scalar_lea.vmem [#allocation12], %s3067
          %3069 = dma.done %s3065, 1024
        $region92: #{tpu_custom_call.1} parent=87 // pred_fallthru
          _
        // Predicated region
        $region93: #{tpu_custom_call.1} parent=87 // pred_check
          %p3070 = pneg %p253
        $region94: #{tpu_custom_call.1} parent=87 // pred_check_branch
          %3072 = sbr.rel (%p3070) target = $region96
        $region95: #{tpu_custom_call.1} parent=87 // pred_region
          %p3073 = scmp.lt.s32.totalorder %s32, 1
          %s3074 = scalar_select %p3073, %s32, 1
          %s3075 = scalar_lea.vmem %s8, %s3074
        $region96: #{tpu_custom_call.1} parent=87 // pred_fallthru
          _
      $region88: #{tpu_custom_call.1} parent=5 // pred_fallthru
        _
    $region6: #{tpu_custom_call.1} parent=1 // loop_footer
      %s25 = sadd.s32 1, %s21
    $region7: #{tpu_custom_call.1} parent=1 // loop_footer_branch
      %20 = sbr.rel target = $region3
    $region8: #{tpu_custom_call.1} parent=1 // loop_exit
      _
    %3076 = vsyncpa [#allocation4], 1
    %s3077 = scalar_lea.sflag [#allocation4], 1
    %3078 = vsyncpa %s3077, 1
    %3079 = vsyncpa [#allocation5], 1
    %s3080 = scalar_lea.sflag [#allocation5], 1
    %3081 = vsyncpa %s3080, 1
    %3082 = vsyncpa [#allocation7], 1
    %3083 = vsyncpa [#allocation10], 1

</llo_original>
